<compile_context>
chip_gen: v7x
topology: tpu7x:2x2x1
jax: 0.10.0
libtpu: 0.0.40
codegen_flags: <defaults>
</compile_context>

<pallas_src>
import functools

import jax
import jax.numpy as jnp
from jax.experimental import pallas as pl
from jax.experimental.pallas import tpu as pltpu


# ----------------------------- Pallas kernel ---------------------------------

def _tracknet_rnn_kernel(x_ref,       # (TT*Bp, F)   f32   time-major flattened rows
                         valid_ref,   # (TT*Bp, 1)   f32   1.0 where t < length[b]
                         wih0_ref,    # (F, 3H)      f32
                         bih0_ref,    # (1, 3H)      f32
                         whh0_ref,    # (H, 3H)      f32
                         bhh0_ref,    # (1, 3H)      f32
                         w1s_ref,     # (2H, 4H)     f32   fused layer-1 weights
                         b1s_ref,     # (1, 4H)      f32   fused layer-1 bias
                         whead_ref,   # (H, 4)       f32   [xy | r1_r2] columns
                         bhead_ref,   # (1, 4)       f32
                         out_ref,     # (TT*Bp, 4)   f32
                         h0_ref,      # (Bp, H)      f32   scratch: layer-0 hidden carry
                         h1_ref,      # (Bp, H)      f32   scratch: layer-1 hidden carry
                         gx0_ref,     # (TT*Bp, 3H)  f32   scratch: precomputed x-gates
                         hout_ref):   # (TT*Bp, H)   f32   scratch: per-step layer-1 out
    b_pad, H = h0_ref.shape
    rows = x_ref.shape[0]
    tt = rows // b_pad                      # timesteps in this chunk (static)

    c = pl.program_id(0)

    # Reset hidden state at the start of the sequence (first time chunk).
    @pl.when(c == 0)
    def _():
        h0_ref[...] = jnp.zeros_like(h0_ref)
        h1_ref[...] = jnp.zeros_like(h1_ref)

    # ---- Chunk prologue: layer-0 input-to-hidden gates for ALL timesteps at once.
    gx0_ref[...] = (
        jnp.dot(x_ref[...], wih0_ref[...], preferred_element_type=jnp.float32)
        + bih0_ref[...])

    # ---- Hoist loop-invariant weight loads out of the serial recurrence.
    whh0 = whh0_ref[...]
    bhh0 = bhh0_ref[...]
    w1s = w1s_ref[...]
    b1s = b1s_ref[...]

    def step(t, carry):
        h0, h1 = carry
        base = pl.multiple_of(t * b_pad, 8)             # b_pad is a multiple of 8
        gx0_t = gx0_ref[pl.ds(base, b_pad), :]          # (Bp, 3H)

        # ---- layer 0: only the recurrent matmul remains on the serial path.
        gh0 = jnp.dot(h0, whh0, preferred_element_type=jnp.float32) + bhh0
        r0 = jax.nn.sigmoid(gx0_t[:, 0:H] + gh0[:, 0:H])
        z0 = jax.nn.sigmoid(gx0_t[:, H:2 * H] + gh0[:, H:2 * H])
        n0 = jnp.tanh(gx0_t[:, 2 * H:3 * H] + r0 * gh0[:, 2 * H:3 * H])
        h0_new = (1.0 - z0) * n0 + z0 * h0

        # ---- layer 1: single fused matmul for both input & recurrent paths.
        #      columns of g1: [0:2H] = (x+h) r,z gates incl. both biases,
        #                     [2H:3H] = x-part of n gate, [3H:4H] = h-part of n gate.
        cat = jnp.concatenate([h0_new, h1], axis=1)     # (Bp, 2H)
        g1 = jnp.dot(cat, w1s, preferred_element_type=jnp.float32) + b1s
        r1 = jax.nn.sigmoid(g1[:, 0:H])
        z1 = jax.nn.sigmoid(g1[:, H:2 * H])
        n1 = jnp.tanh(g1[:, 2 * H:3 * H] + r1 * g1[:, 3 * H:4 * H])
        h1_new = (1.0 - z1) * n1 + z1 * h1

        hout_ref[pl.ds(base, b_pad), :] = h1_new
        return (h0_new, h1_new)

    # Unroll the recurrence for scheduler visibility (static trip count).
    if tt <= 32:
        unroll = True
    elif tt % 4 == 0:
        unroll = 4
    else:
        unroll = 1
    h0_fin, h1_fin = jax.lax.fori_loop(
        0, tt, step, (h0_ref[...], h1_ref[...]), unroll=unroll)
    h0_ref[...] = h0_fin
    h1_ref[...] = h1_fin

    # ---- Epilogue: mask padded timesteps, one dense head matmul, one store.
    gated = hout_ref[...] * valid_ref[...]                               # (TT*Bp, H)
    pre = (jnp.dot(gated, whead_ref[...], preferred_element_type=jnp.float32)
           + bhead_ref[...])                                             # (TT*Bp, 4)
    # Softplus (PyTorch default beta=1, threshold=20) on the last two columns.
    sp = jnp.where(pre > 20.0, pre, jnp.log1p(jnp.exp(jnp.minimum(pre, 20.0))))
    col = jax.lax.broadcasted_iota(jnp.int32, pre.shape, 1)
    out_ref[...] = jnp.where(col < 2, pre, sp).astype(out_ref.dtype)


# ------------------------------ JAX wrapper -----------------------------------

@jax.jit
def tracknet_v2_rnn_forward(inputs, input_lengths, params):
    """inputs: (B, T, F) float32, input_lengths: (B,) int32 -> (B, T, 4) float32."""
    B, T, F = inputs.shape
    H = params["whh_l0"].shape[1]                      # hidden size

    # Pad batch to a sublane multiple so per-step slices are 8-aligned & lane-full.
    B_pad = ((B + 7) // 8) * 8

    # Pick a time chunk (whole T when small; divisor chunks for long sequences).
    TT = T
    if T > 128:
        for cand in (128, 64, 32, 16, 8):
            if T % cand == 0:
                TT = cand
                break
    n_chunks = T // TT if T % TT == 0 else 1
    if T % TT != 0:
        TT = T                                          # fallback: whole T resident

    # Layout plumbing: time-major, batch-padded, rows flattened as (t * B_pad + b).
    x_tbf = jnp.transpose(inputs.astype(jnp.float32), (1, 0, 2))        # (T, B, F)
    x_pad = jnp.zeros((T, B_pad, F), jnp.float32).at[:, :B, :].set(x_tbf)
    x2d = x_pad.reshape(T * B_pad, F)

    len_pad = jnp.zeros((B_pad,), jnp.int32).at[:B].set(
        input_lengths.astype(jnp.int32))
    valid = (jnp.arange(T, dtype=jnp.int32)[:, None] < len_pad[None, :])
    valid2d = valid.astype(jnp.float32).reshape(T * B_pad, 1)

    # Pre-transpose PyTorch-shaped weights so the kernel does plain row @ W.
    wih0 = params["wih_l0"].T                           # (F, 3H)
    whh0 = params["whh_l0"].T                           # (H, 3H)
    bih0 = params["bih_l0"].reshape(1, 3 * H)
    bhh0 = params["bhh_l0"].reshape(1, 3 * H)

    # Fused layer-1 weights: [h0_new, h1] @ W1s gives
    #   cols [0:2H]  = x- and h-contributions to r,z (summed),
    #   cols [2H:3H] = x-contribution to n, cols [3H:4H] = h-contribution to n.
    wih1 = params["wih_l1"].T                           # (H, 3H)
    whh1 = params["whh_l1"].T                           # (H, 3H)
    zeros_hh = jnp.zeros((H, H), jnp.float32)
    w1_top = jnp.concatenate([wih1[:, :2 * H], wih1[:, 2 * H:], zeros_hh], axis=1)
    w1_bot = jnp.concatenate([whh1[:, :2 * H], zeros_hh, whh1[:, 2 * H:]], axis=1)
    w1s = jnp.concatenate([w1_top, w1_bot], axis=0)     # (2H, 4H)
    bih1 = params["bih_l1"]
    bhh1 = params["bhh_l1"]
    b1s = jnp.concatenate(
        [bih1[:2 * H] + bhh1[:2 * H], bih1[2 * H:], bhh1[2 * H:]]).reshape(1, 4 * H)

    whead = jnp.concatenate([params["w_xy"], params["w_r"]], axis=0).T  # (H, 4)
    bhead = jnp.concatenate([params["b_xy"], params["b_r"]]).reshape(1, 4)

    rows_per_chunk = TT * B_pad
    full = lambda c: (0, 0)
    grid_spec = pltpu.PrefetchScalarGridSpec(
        num_scalar_prefetch=0,
        grid=(n_chunks,),
        in_specs=[
            pl.BlockSpec((rows_per_chunk, F), lambda c: (c, 0)),
            pl.BlockSpec((rows_per_chunk, 1), lambda c: (c, 0)),
            pl.BlockSpec((F, 3 * H), full),
            pl.BlockSpec((1, 3 * H), full),
            pl.BlockSpec((H, 3 * H), full),
            pl.BlockSpec((1, 3 * H), full),
            pl.BlockSpec((2 * H, 4 * H), full),
            pl.BlockSpec((1, 4 * H), full),
            pl.BlockSpec((H, 4), full),
            pl.BlockSpec((1, 4), full),
        ],
        out_specs=pl.BlockSpec((rows_per_chunk, 4), lambda c: (c, 0)),
        scratch_shapes=[
            pltpu.VMEM((B_pad, H), jnp.float32),              # h0 carry
            pltpu.VMEM((B_pad, H), jnp.float32),              # h1 carry
            pltpu.VMEM((rows_per_chunk, 3 * H), jnp.float32),  # precomputed x-gates
            pltpu.VMEM((rows_per_chunk, H), jnp.float32),      # per-step layer-1 out
        ],
    )

    out2d = pl.pallas_call(
        _tracknet_rnn_kernel,
        out_shape=jax.ShapeDtypeStruct((T * B_pad, 4), jnp.float32),
        grid_spec=grid_spec,
        compiler_params=pltpu.CompilerParams(
            dimension_semantics=("arbitrary",)),   # time chunks carry hidden state
    )(x2d, valid2d, wih0, bih0, whh0, bhh0, w1s, b1s, whead, bhead)

    out = out2d.reshape(T, B_pad, 4)[:, :B, :]
    return jnp.transpose(out, (1, 0, 2))                # (B, T, 4) batch-first


# -------------------------- pure-JAX reference --------------------------------

def _reference_forward(inputs, input_lengths, params):
    B, T, F = inputs.shape
    H = params["whh_l0"].shape[1]

    def gru_cell(x_t, h, wih, whh, bih, bhh):
        gx = x_t @ wih.T + bih
        gh = h @ whh.T + bhh
        r = jax.nn.sigmoid(gx[:, 0:H] + gh[:, 0:H])
        z = jax.nn.sigmoid(gx[:, H:2 * H] + gh[:, H:2 * H])
        n = jnp.tanh(gx[:, 2 * H:3 * H] + r * gh[:, 2 * H:3 * H])
        return (1.0 - z) * n + z * h

    def scan_fn(carry, x_t):
        h0, h1 = carry
        h0 = gru_cell(x_t, h0, params["wih_l0"], params["whh_l0"],
                      params["bih_l0"], params["bhh_l0"])
        h1 = gru_cell(h0, h1, params["wih_l1"], params["whh_l1"],
                      params["bih_l1"], params["bhh_l1"])
        return (h0, h1), h1

    x_tbf = jnp.transpose(inputs, (1, 0, 2))
    init = (jnp.zeros((B, H)), jnp.zeros((B, H)))
    _, outs = jax.lax.scan(scan_fn, init, x_tbf)                     # (T, B, H)
    gru_outs = jnp.transpose(outs, (1, 0, 2))                        # (B, T, H)
    mask = (jnp.arange(T)[None, :] < input_lengths[:, None])[..., None]
    gru_outs = jnp.where(mask, gru_outs, 0.0)
    xy = gru_outs @ params["w_xy"].T + params["b_xy"]
    r = jax.nn.softplus(gru_outs @ params["w_r"].T + params["b_r"])
    return jnp.concatenate([xy, r], axis=-1)


# ------------------------------ parameter init --------------------------------

def init_params(key, input_features=4, conv_features=32):
    F, H = input_features, conv_features
    k_rnn = 1.0 / jnp.sqrt(H)
    k_lin = 1.0 / jnp.sqrt(H)
    keys = jax.random.split(key, 12)

    def u(k, shape, bound):
        return jax.random.uniform(k, shape, jnp.float32, -bound, bound)

    return {
        "wih_l0": u(keys[0], (3 * H, F), k_rnn),
        "whh_l0": u(keys[1], (3 * H, H), k_rnn),
        "bih_l0": u(keys[2], (3 * H,), k_rnn),
        "bhh_l0": u(keys[3], (3 * H,), k_rnn),
        "wih_l1": u(keys[4], (3 * H, H), k_rnn),
        "whh_l1": u(keys[5], (3 * H, H), k_rnn),
        "bih_l1": u(keys[6], (3 * H,), k_rnn),
        "bhh_l1": u(keys[7], (3 * H,), k_rnn),
        "w_xy": u(keys[8], (2, H), k_lin),
        "b_xy": u(keys[9], (2,), k_lin),
        "w_r": u(keys[10], (2, H), k_lin),
        "b_r": u(keys[11], (2,), k_lin),
    }


if __name__ == "__main__":
    B, T, F, H = 2, 8, 4, 32
    key = jax.random.PRNGKey(0)
    k_x, k_p = jax.random.split(key)

    inputs = jax.random.normal(k_x, (B, T, F), jnp.float32)
    input_lengths = jnp.array([T, 5], jnp.int32)      # max length == T (static shape)
    params = init_params(k_p, input_features=F, conv_features=H)

    out = tracknet_v2_rnn_forward(inputs, input_lengths, params)
    out = jax.block_until_ready(out)
    assert out.shape == (B, T, 4), out.shape

    ref = _reference_forward(inputs, input_lengths, params)
    assert jnp.allclose(out, ref, rtol=1e-4, atol=1e-4), (
        float(jnp.max(jnp.abs(out - ref))))

    print("KERNEL_OK")
</pallas_src>

<mosaic_0001>
module attributes {stable_mosaic.version = 11 : i64} {
  func.func @_tracknet_rnn_kernel(%arg0: i32, %arg1: memref<64x4xf32, #tpu.memory_space<vmem>>, %arg2: memref<64x1xf32, #tpu.memory_space<vmem>>, %arg3: memref<4x96xf32, #tpu.memory_space<vmem>>, %arg4: memref<1x96xf32, #tpu.memory_space<vmem>>, %arg5: memref<32x96xf32, #tpu.memory_space<vmem>>, %arg6: memref<1x96xf32, #tpu.memory_space<vmem>>, %arg7: memref<64x128xf32, #tpu.memory_space<vmem>>, %arg8: memref<1x128xf32, #tpu.memory_space<vmem>>, %arg9: memref<32x4xf32, #tpu.memory_space<vmem>>, %arg10: memref<1x4xf32, #tpu.memory_space<vmem>>, %arg11: memref<64x4xf32, #tpu.memory_space<vmem>>, %arg12: memref<8x32xf32, #tpu.memory_space<vmem>>, %arg13: memref<8x32xf32, #tpu.memory_space<vmem>>, %arg14: memref<64x96xf32, #tpu.memory_space<vmem>>, %arg15: memref<64x32xf32, #tpu.memory_space<vmem>>) attributes {dimension_semantics = [#tpu.dimension_semantics<arbitrary>], iteration_bounds = array<i64: 1>, scalar_prefetch = 0 : i64, scratch_operands = 4 : i64, tpu.core_type = #tpu.core_type<tc>, window_params = [{transform_indices = @transform_0, window_bounds = array<i64: 64, 4>}, {transform_indices = @transform_1, window_bounds = array<i64: 64, 1>}, {pipeline_mode = #tpu.pipeline_mode<synchronous>, transform_indices = @transform_2, window_bounds = array<i64: 4, 96>}, {pipeline_mode = #tpu.pipeline_mode<synchronous>, transform_indices = @transform_3, window_bounds = array<i64: 1, 96>}, {pipeline_mode = #tpu.pipeline_mode<synchronous>, transform_indices = @transform_4, window_bounds = array<i64: 32, 96>}, {pipeline_mode = #tpu.pipeline_mode<synchronous>, transform_indices = @transform_5, window_bounds = array<i64: 1, 96>}, {pipeline_mode = #tpu.pipeline_mode<synchronous>, transform_indices = @transform_6, window_bounds = array<i64: 64, 128>}, {pipeline_mode = #tpu.pipeline_mode<synchronous>, transform_indices = @transform_7, window_bounds = array<i64: 1, 128>}, {pipeline_mode = #tpu.pipeline_mode<synchronous>, transform_indices = @transform_8, window_bounds = array<i64: 32, 4>}, {pipeline_mode = #tpu.pipeline_mode<synchronous>, transform_indices = @transform_9, window_bounds = array<i64: 1, 4>}, {transform_indices = @transform_10, window_bounds = array<i64: 64, 4>}]} {
    %c0_i32 = arith.constant 0 : i32
    %0 = arith.cmpi eq, %arg0, %c0_i32 : i32
    %1 = arith.extui %0 : i1 to i32
    %c0_i32_0 = arith.constant 0 : i32
    %2 = arith.cmpi ne, %1, %c0_i32_0 : i32
    scf.if %2 {
      %cst_127 = arith.constant 0.000000e+00 : f32
      %527 = vector.broadcast %cst_127 : f32 to vector<8x32xf32>
      %c0_128 = arith.constant 0 : index
      %c0_129 = arith.constant 0 : index
      %528 = vector.load %arg12[%c0_128, %c0_129] : memref<8x32xf32, #tpu.memory_space<vmem>>, vector<8x32xf32>
      tpu.vector_store %arg12[%c0_128, %c0_129], %527 {strides = array<i32>} : memref<8x32xf32, #tpu.memory_space<vmem>>, vector<8x32xf32>,
      %cst_130 = arith.constant 0.000000e+00 : f32
      %529 = vector.broadcast %cst_130 : f32 to vector<8x32xf32>
      %c0_131 = arith.constant 0 : index
      %c0_132 = arith.constant 0 : index
      %530 = vector.load %arg13[%c0_131, %c0_132] : memref<8x32xf32, #tpu.memory_space<vmem>>, vector<8x32xf32>
      tpu.vector_store %arg13[%c0_131, %c0_132], %529 {strides = array<i32>} : memref<8x32xf32, #tpu.memory_space<vmem>>, vector<8x32xf32>,
    } else {
    }
    %c0 = arith.constant 0 : index
    %c0_1 = arith.constant 0 : index
    %3 = vector.load %arg1[%c0, %c0_1] : memref<64x4xf32, #tpu.memory_space<vmem>>, vector<64x4xf32>
    %c0_2 = arith.constant 0 : index
    %c0_3 = arith.constant 0 : index
    %4 = vector.load %arg3[%c0_2, %c0_3] : memref<4x96xf32, #tpu.memory_space<vmem>>, vector<4x96xf32>
    %cst = arith.constant dense<0.000000e+00> : vector<64x96xf32>
    %5 = tpu.matmul %3, %4, %cst {dimension_numbers = #tpu.dot_dimension_numbers<[1], [0], [0], [1], [0, 0, 1, 1], [], []>} : vector<64x4xf32>, vector<4x96xf32>, vector<64x96xf32> -> vector<64x96xf32>
    %c0_4 = arith.constant 0 : index
    %c0_5 = arith.constant 0 : index
    %6 = vector.load %arg4[%c0_4, %c0_5] : memref<1x96xf32, #tpu.memory_space<vmem>>, vector<1x96xf32>
    %7 = vector.broadcast %6 : vector<1x96xf32> to vector<64x96xf32>
    %8 = arith.addf %5, %7 : vector<64x96xf32>
    %c0_6 = arith.constant 0 : index
    %c0_7 = arith.constant 0 : index
    %9 = vector.load %arg14[%c0_6, %c0_7] : memref<64x96xf32, #tpu.memory_space<vmem>>, vector<64x96xf32>
    tpu.vector_store %arg14[%c0_6, %c0_7], %8 {strides = array<i32>} : memref<64x96xf32, #tpu.memory_space<vmem>>, vector<64x96xf32>,
    %c0_8 = arith.constant 0 : index
    %c0_9 = arith.constant 0 : index
    %10 = vector.load %arg5[%c0_8, %c0_9] : memref<32x96xf32, #tpu.memory_space<vmem>>, vector<32x96xf32>
    %c0_10 = arith.constant 0 : index
    %c0_11 = arith.constant 0 : index
    %11 = vector.load %arg6[%c0_10, %c0_11] : memref<1x96xf32, #tpu.memory_space<vmem>>, vector<1x96xf32>
    %c0_12 = arith.constant 0 : index
    %c0_13 = arith.constant 0 : index
    %12 = vector.load %arg7[%c0_12, %c0_13] : memref<64x128xf32, #tpu.memory_space<vmem>>, vector<64x128xf32>
    %c0_14 = arith.constant 0 : index
    %c0_15 = arith.constant 0 : index
    %13 = vector.load %arg8[%c0_14, %c0_15] : memref<1x128xf32, #tpu.memory_space<vmem>>, vector<1x128xf32>
    %c0_16 = arith.constant 0 : index
    %c0_17 = arith.constant 0 : index
    %14 = vector.load %arg12[%c0_16, %c0_17] : memref<8x32xf32, #tpu.memory_space<vmem>>, vector<8x32xf32>
    %c0_18 = arith.constant 0 : index
    %c0_19 = arith.constant 0 : index
    %15 = vector.load %arg13[%c0_18, %c0_19] : memref<8x32xf32, #tpu.memory_space<vmem>>, vector<8x32xf32>
    %c0_i32_20 = arith.constant 0 : i32
    %c8_i32 = arith.constant 8 : i32
    %16 = arith.muli %c0_i32_20, %c8_i32 : i32
    %17 = tpu.assume_multiple %16, 8 : i32
    %18 = arith.index_cast %17 : i32 to index
    %c0_21 = arith.constant 0 : index
    %19 = vector.load %arg14[%18, %c0_21] : memref<64x96xf32, #tpu.memory_space<vmem>>, vector<8x96xf32>
    %cst_22 = arith.constant dense<0.000000e+00> : vector<8x96xf32>
    %20 = tpu.matmul %14, %10, %cst_22 {dimension_numbers = #tpu.dot_dimension_numbers<[1], [0], [0], [1], [0, 0, 1, 1], [], []>} : vector<8x32xf32>, vector<32x96xf32>, vector<8x96xf32> -> vector<8x96xf32>
    %21 = vector.broadcast %11 : vector<1x96xf32> to vector<8x96xf32>
    %22 = arith.addf %20, %21 : vector<8x96xf32>
    %23 = vector.extract_strided_slice %19 {offsets = [0, 0], sizes = [8, 32], strides = [1, 1]} : vector<8x96xf32> to vector<8x32xf32>
    %24 = vector.extract_strided_slice %22 {offsets = [0, 0], sizes = [8, 32], strides = [1, 1]} : vector<8x96xf32> to vector<8x32xf32>
    %25 = arith.addf %23, %24 : vector<8x32xf32>
    %26 = arith.negf %25 : vector<8x32xf32>
    %27 = math.exp %26 : vector<8x32xf32>
    %cst_23 = arith.constant 1.000000e+00 : f32
    %28 = vector.broadcast %cst_23 : f32 to vector<8x32xf32>
    %29 = arith.addf %28, %27 : vector<8x32xf32>
    %30 = arith.divf %28, %29 : vector<8x32xf32>
    %31 = vector.extract_strided_slice %19 {offsets = [0, 32], sizes = [8, 32], strides = [1, 1]} : vector<8x96xf32> to vector<8x32xf32>
    %32 = vector.extract_strided_slice %22 {offsets = [0, 32], sizes = [8, 32], strides = [1, 1]} : vector<8x96xf32> to vector<8x32xf32>
    %33 = arith.addf %31, %32 : vector<8x32xf32>
    %34 = arith.negf %33 : vector<8x32xf32>
    %35 = math.exp %34 : vector<8x32xf32>
    %cst_24 = arith.constant 1.000000e+00 : f32
    %36 = vector.broadcast %cst_24 : f32 to vector<8x32xf32>
    %37 = arith.addf %36, %35 : vector<8x32xf32>
    %38 = arith.divf %36, %37 : vector<8x32xf32>
    %39 = vector.extract_strided_slice %19 {offsets = [0, 64], sizes = [8, 32], strides = [1, 1]} : vector<8x96xf32> to vector<8x32xf32>
    %40 = vector.extract_strided_slice %22 {offsets = [0, 64], sizes = [8, 32], strides = [1, 1]} : vector<8x96xf32> to vector<8x32xf32>
    %41 = arith.mulf %30, %40 : vector<8x32xf32>
    %42 = arith.addf %39, %41 : vector<8x32xf32>
    %43 = math.tanh %42 : vector<8x32xf32>
    %cst_25 = arith.constant 1.000000e+00 : f32
    %44 = vector.broadcast %cst_25 : f32 to vector<8x32xf32>
    %45 = arith.subf %44, %38 : vector<8x32xf32>
    %46 = arith.mulf %45, %43 : vector<8x32xf32>
    %47 = arith.mulf %38, %14 : vector<8x32xf32>
    %48 = arith.addf %46, %47 : vector<8x32xf32>
    %49 = tpu.concatenate %48, %15 in 1 : vector<8x32xf32>, vector<8x32xf32> -> vector<8x64xf32>
    %cst_26 = arith.constant dense<0.000000e+00> : vector<8x128xf32>
    %50 = tpu.matmul %49, %12, %cst_26 {dimension_numbers = #tpu.dot_dimension_numbers<[1], [0], [0], [1], [0, 0, 1, 1], [], []>} : vector<8x64xf32>, vector<64x128xf32>, vector<8x128xf32> -> vector<8x128xf32>
    %51 = vector.broadcast %13 : vector<1x128xf32> to vector<8x128xf32>
    %52 = arith.addf %50, %51 : vector<8x128xf32>
    %53 = vector.extract_strided_slice %52 {offsets = [0, 0], sizes = [8, 32], strides = [1, 1]} : vector<8x128xf32> to vector<8x32xf32>
    %54 = arith.negf %53 : vector<8x32xf32>
    %55 = math.exp %54 : vector<8x32xf32>
    %cst_27 = arith.constant 1.000000e+00 : f32
    %56 = vector.broadcast %cst_27 : f32 to vector<8x32xf32>
    %57 = arith.addf %56, %55 : vector<8x32xf32>
    %58 = arith.divf %56, %57 : vector<8x32xf32>
    %59 = vector.extract_strided_slice %52 {offsets = [0, 32], sizes = [8, 32], strides = [1, 1]} : vector<8x128xf32> to vector<8x32xf32>
    %60 = arith.negf %59 : vector<8x32xf32>
    %61 = math.exp %60 : vector<8x32xf32>
    %cst_28 = arith.constant 1.000000e+00 : f32
    %62 = vector.broadcast %cst_28 : f32 to vector<8x32xf32>
    %63 = arith.addf %62, %61 : vector<8x32xf32>
    %64 = arith.divf %62, %63 : vector<8x32xf32>
    %65 = vector.extract_strided_slice %52 {offsets = [0, 64], sizes = [8, 32], strides = [1, 1]} : vector<8x128xf32> to vector<8x32xf32>
    %66 = vector.extract_strided_slice %52 {offsets = [0, 96], sizes = [8, 32], strides = [1, 1]} : vector<8x128xf32> to vector<8x32xf32>
    %67 = arith.mulf %58, %66 : vector<8x32xf32>
    %68 = arith.addf %65, %67 : vector<8x32xf32>
    %69 = math.tanh %68 : vector<8x32xf32>
    %cst_29 = arith.constant 1.000000e+00 : f32
    %70 = vector.broadcast %cst_29 : f32 to vector<8x32xf32>
    %71 = arith.subf %70, %64 : vector<8x32xf32>
    %72 = arith.mulf %71, %69 : vector<8x32xf32>
    %73 = arith.mulf %64, %15 : vector<8x32xf32>
    %74 = arith.addf %72, %73 : vector<8x32xf32>
    %75 = arith.index_cast %17 : i32 to index
    %c0_30 = arith.constant 0 : index
    %76 = vector.load %arg15[%75, %c0_30] : memref<64x32xf32, #tpu.memory_space<vmem>>, vector<8x32xf32>
    tpu.vector_store %arg15[%75, %c0_30], %74 {strides = array<i32>} : memref<64x32xf32, #tpu.memory_space<vmem>>, vector<8x32xf32>,
    %c1_i32 = arith.constant 1 : i32
    %c8_i32_31 = arith.constant 8 : i32
    %77 = arith.muli %c1_i32, %c8_i32_31 : i32
    %78 = tpu.assume_multiple %77, 8 : i32
    %79 = arith.index_cast %78 : i32 to index
    %c0_32 = arith.constant 0 : index
    %80 = vector.load %arg14[%79, %c0_32] : memref<64x96xf32, #tpu.memory_space<vmem>>, vector<8x96xf32>
    %cst_33 = arith.constant dense<0.000000e+00> : vector<8x96xf32>
    %81 = tpu.matmul %48, %10, %cst_33 {dimension_numbers = #tpu.dot_dimension_numbers<[1], [0], [0], [1], [0, 0, 1, 1], [], []>} : vector<8x32xf32>, vector<32x96xf32>, vector<8x96xf32> -> vector<8x96xf32>
    %82 = vector.broadcast %11 : vector<1x96xf32> to vector<8x96xf32>
    %83 = arith.addf %81, %82 : vector<8x96xf32>
    %84 = vector.extract_strided_slice %80 {offsets = [0, 0], sizes = [8, 32], strides = [1, 1]} : vector<8x96xf32> to vector<8x32xf32>
    %85 = vector.extract_strided_slice %83 {offsets = [0, 0], sizes = [8, 32], strides = [1, 1]} : vector<8x96xf32> to vector<8x32xf32>
    %86 = arith.addf %84, %85 : vector<8x32xf32>
    %87 = arith.negf %86 : vector<8x32xf32>
    %88 = math.exp %87 : vector<8x32xf32>
    %cst_34 = arith.constant 1.000000e+00 : f32
    %89 = vector.broadcast %cst_34 : f32 to vector<8x32xf32>
    %90 = arith.addf %89, %88 : vector<8x32xf32>
    %91 = arith.divf %89, %90 : vector<8x32xf32>
    %92 = vector.extract_strided_slice %80 {offsets = [0, 32], sizes = [8, 32], strides = [1, 1]} : vector<8x96xf32> to vector<8x32xf32>
    %93 = vector.extract_strided_slice %83 {offsets = [0, 32], sizes = [8, 32], strides = [1, 1]} : vector<8x96xf32> to vector<8x32xf32>
    %94 = arith.addf %92, %93 : vector<8x32xf32>
    %95 = arith.negf %94 : vector<8x32xf32>
    %96 = math.exp %95 : vector<8x32xf32>
    %cst_35 = arith.constant 1.000000e+00 : f32
    %97 = vector.broadcast %cst_35 : f32 to vector<8x32xf32>
    %98 = arith.addf %97, %96 : vector<8x32xf32>
    %99 = arith.divf %97, %98 : vector<8x32xf32>
    %100 = vector.extract_strided_slice %80 {offsets = [0, 64], sizes = [8, 32], strides = [1, 1]} : vector<8x96xf32> to vector<8x32xf32>
    %101 = vector.extract_strided_slice %83 {offsets = [0, 64], sizes = [8, 32], strides = [1, 1]} : vector<8x96xf32> to vector<8x32xf32>
    %102 = arith.mulf %91, %101 : vector<8x32xf32>
    %103 = arith.addf %100, %102 : vector<8x32xf32>
    %104 = math.tanh %103 : vector<8x32xf32>
    %cst_36 = arith.constant 1.000000e+00 : f32
    %105 = vector.broadcast %cst_36 : f32 to vector<8x32xf32>
    %106 = arith.subf %105, %99 : vector<8x32xf32>
    %107 = arith.mulf %106, %104 : vector<8x32xf32>
    %108 = arith.mulf %99, %48 : vector<8x32xf32>
    %109 = arith.addf %107, %108 : vector<8x32xf32>
    %110 = tpu.concatenate %109, %74 in 1 : vector<8x32xf32>, vector<8x32xf32> -> vector<8x64xf32>
    %cst_37 = arith.constant dense<0.000000e+00> : vector<8x128xf32>
    %111 = tpu.matmul %110, %12, %cst_37 {dimension_numbers = #tpu.dot_dimension_numbers<[1], [0], [0], [1], [0, 0, 1, 1], [], []>} : vector<8x64xf32>, vector<64x128xf32>, vector<8x128xf32> -> vector<8x128xf32>
    %112 = vector.broadcast %13 : vector<1x128xf32> to vector<8x128xf32>
    %113 = arith.addf %111, %112 : vector<8x128xf32>
    %114 = vector.extract_strided_slice %113 {offsets = [0, 0], sizes = [8, 32], strides = [1, 1]} : vector<8x128xf32> to vector<8x32xf32>
    %115 = arith.negf %114 : vector<8x32xf32>
    %116 = math.exp %115 : vector<8x32xf32>
    %cst_38 = arith.constant 1.000000e+00 : f32
    %117 = vector.broadcast %cst_38 : f32 to vector<8x32xf32>
    %118 = arith.addf %117, %116 : vector<8x32xf32>
    %119 = arith.divf %117, %118 : vector<8x32xf32>
    %120 = vector.extract_strided_slice %113 {offsets = [0, 32], sizes = [8, 32], strides = [1, 1]} : vector<8x128xf32> to vector<8x32xf32>
    %121 = arith.negf %120 : vector<8x32xf32>
    %122 = math.exp %121 : vector<8x32xf32>
    %cst_39 = arith.constant 1.000000e+00 : f32
    %123 = vector.broadcast %cst_39 : f32 to vector<8x32xf32>
    %124 = arith.addf %123, %122 : vector<8x32xf32>
    %125 = arith.divf %123, %124 : vector<8x32xf32>
    %126 = vector.extract_strided_slice %113 {offsets = [0, 64], sizes = [8, 32], strides = [1, 1]} : vector<8x128xf32> to vector<8x32xf32>
    %127 = vector.extract_strided_slice %113 {offsets = [0, 96], sizes = [8, 32], strides = [1, 1]} : vector<8x128xf32> to vector<8x32xf32>
    %128 = arith.mulf %119, %127 : vector<8x32xf32>
    %129 = arith.addf %126, %128 : vector<8x32xf32>
    %130 = math.tanh %129 : vector<8x32xf32>
    %cst_40 = arith.constant 1.000000e+00 : f32
    %131 = vector.broadcast %cst_40 : f32 to vector<8x32xf32>
    %132 = arith.subf %131, %125 : vector<8x32xf32>
    %133 = arith.mulf %132, %130 : vector<8x32xf32>
    %134 = arith.mulf %125, %74 : vector<8x32xf32>
    %135 = arith.addf %133, %134 : vector<8x32xf32>
    %136 = arith.index_cast %78 : i32 to index
    %c0_41 = arith.constant 0 : index
    %137 = vector.load %arg15[%136, %c0_41] : memref<64x32xf32, #tpu.memory_space<vmem>>, vector<8x32xf32>
    tpu.vector_store %arg15[%136, %c0_41], %135 {strides = array<i32>} : memref<64x32xf32, #tpu.memory_space<vmem>>, vector<8x32xf32>,
    %c2_i32 = arith.constant 2 : i32
    %c8_i32_42 = arith.constant 8 : i32
    %138 = arith.muli %c2_i32, %c8_i32_42 : i32
    %139 = tpu.assume_multiple %138, 8 : i32
    %140 = arith.index_cast %139 : i32 to index
    %c0_43 = arith.constant 0 : index
    %141 = vector.load %arg14[%140, %c0_43] : memref<64x96xf32, #tpu.memory_space<vmem>>, vector<8x96xf32>
    %cst_44 = arith.constant dense<0.000000e+00> : vector<8x96xf32>
    %142 = tpu.matmul %109, %10, %cst_44 {dimension_numbers = #tpu.dot_dimension_numbers<[1], [0], [0], [1], [0, 0, 1, 1], [], []>} : vector<8x32xf32>, vector<32x96xf32>, vector<8x96xf32> -> vector<8x96xf32>
    %143 = vector.broadcast %11 : vector<1x96xf32> to vector<8x96xf32>
    %144 = arith.addf %142, %143 : vector<8x96xf32>
    %145 = vector.extract_strided_slice %141 {offsets = [0, 0], sizes = [8, 32], strides = [1, 1]} : vector<8x96xf32> to vector<8x32xf32>
    %146 = vector.extract_strided_slice %144 {offsets = [0, 0], sizes = [8, 32], strides = [1, 1]} : vector<8x96xf32> to vector<8x32xf32>
    %147 = arith.addf %145, %146 : vector<8x32xf32>
    %148 = arith.negf %147 : vector<8x32xf32>
    %149 = math.exp %148 : vector<8x32xf32>
    %cst_45 = arith.constant 1.000000e+00 : f32
    %150 = vector.broadcast %cst_45 : f32 to vector<8x32xf32>
    %151 = arith.addf %150, %149 : vector<8x32xf32>
    %152 = arith.divf %150, %151 : vector<8x32xf32>
    %153 = vector.extract_strided_slice %141 {offsets = [0, 32], sizes = [8, 32], strides = [1, 1]} : vector<8x96xf32> to vector<8x32xf32>
    %154 = vector.extract_strided_slice %144 {offsets = [0, 32], sizes = [8, 32], strides = [1, 1]} : vector<8x96xf32> to vector<8x32xf32>
    %155 = arith.addf %153, %154 : vector<8x32xf32>
    %156 = arith.negf %155 : vector<8x32xf32>
    %157 = math.exp %156 : vector<8x32xf32>
    %cst_46 = arith.constant 1.000000e+00 : f32
    %158 = vector.broadcast %cst_46 : f32 to vector<8x32xf32>
    %159 = arith.addf %158, %157 : vector<8x32xf32>
    %160 = arith.divf %158, %159 : vector<8x32xf32>
    %161 = vector.extract_strided_slice %141 {offsets = [0, 64], sizes = [8, 32], strides = [1, 1]} : vector<8x96xf32> to vector<8x32xf32>
    %162 = vector.extract_strided_slice %144 {offsets = [0, 64], sizes = [8, 32], strides = [1, 1]} : vector<8x96xf32> to vector<8x32xf32>
    %163 = arith.mulf %152, %162 : vector<8x32xf32>
    %164 = arith.addf %161, %163 : vector<8x32xf32>
    %165 = math.tanh %164 : vector<8x32xf32>
    %cst_47 = arith.constant 1.000000e+00 : f32
    %166 = vector.broadcast %cst_47 : f32 to vector<8x32xf32>
    %167 = arith.subf %166, %160 : vector<8x32xf32>
    %168 = arith.mulf %167, %165 : vector<8x32xf32>
    %169 = arith.mulf %160, %109 : vector<8x32xf32>
    %170 = arith.addf %168, %169 : vector<8x32xf32>
    %171 = tpu.concatenate %170, %135 in 1 : vector<8x32xf32>, vector<8x32xf32> -> vector<8x64xf32>
    %cst_48 = arith.constant dense<0.000000e+00> : vector<8x128xf32>
    %172 = tpu.matmul %171, %12, %cst_48 {dimension_numbers = #tpu.dot_dimension_numbers<[1], [0], [0], [1], [0, 0, 1, 1], [], []>} : vector<8x64xf32>, vector<64x128xf32>, vector<8x128xf32> -> vector<8x128xf32>
    %173 = vector.broadcast %13 : vector<1x128xf32> to vector<8x128xf32>
    %174 = arith.addf %172, %173 : vector<8x128xf32>
    %175 = vector.extract_strided_slice %174 {offsets = [0, 0], sizes = [8, 32], strides = [1, 1]} : vector<8x128xf32> to vector<8x32xf32>
    %176 = arith.negf %175 : vector<8x32xf32>
    %177 = math.exp %176 : vector<8x32xf32>
    %cst_49 = arith.constant 1.000000e+00 : f32
    %178 = vector.broadcast %cst_49 : f32 to vector<8x32xf32>
    %179 = arith.addf %178, %177 : vector<8x32xf32>
    %180 = arith.divf %178, %179 : vector<8x32xf32>
    %181 = vector.extract_strided_slice %174 {offsets = [0, 32], sizes = [8, 32], strides = [1, 1]} : vector<8x128xf32> to vector<8x32xf32>
    %182 = arith.negf %181 : vector<8x32xf32>
    %183 = math.exp %182 : vector<8x32xf32>
    %cst_50 = arith.constant 1.000000e+00 : f32
    %184 = vector.broadcast %cst_50 : f32 to vector<8x32xf32>
    %185 = arith.addf %184, %183 : vector<8x32xf32>
    %186 = arith.divf %184, %185 : vector<8x32xf32>
    %187 = vector.extract_strided_slice %174 {offsets = [0, 64], sizes = [8, 32], strides = [1, 1]} : vector<8x128xf32> to vector<8x32xf32>
    %188 = vector.extract_strided_slice %174 {offsets = [0, 96], sizes = [8, 32], strides = [1, 1]} : vector<8x128xf32> to vector<8x32xf32>
    %189 = arith.mulf %180, %188 : vector<8x32xf32>
    %190 = arith.addf %187, %189 : vector<8x32xf32>
    %191 = math.tanh %190 : vector<8x32xf32>
    %cst_51 = arith.constant 1.000000e+00 : f32
    %192 = vector.broadcast %cst_51 : f32 to vector<8x32xf32>
    %193 = arith.subf %192, %186 : vector<8x32xf32>
    %194 = arith.mulf %193, %191 : vector<8x32xf32>
    %195 = arith.mulf %186, %135 : vector<8x32xf32>
    %196 = arith.addf %194, %195 : vector<8x32xf32>
    %197 = arith.index_cast %139 : i32 to index
    %c0_52 = arith.constant 0 : index
    %198 = vector.load %arg15[%197, %c0_52] : memref<64x32xf32, #tpu.memory_space<vmem>>, vector<8x32xf32>
    tpu.vector_store %arg15[%197, %c0_52], %196 {strides = array<i32>} : memref<64x32xf32, #tpu.memory_space<vmem>>, vector<8x32xf32>,
    %c3_i32 = arith.constant 3 : i32
    %c8_i32_53 = arith.constant 8 : i32
    %199 = arith.muli %c3_i32, %c8_i32_53 : i32
    %200 = tpu.assume_multiple %199, 8 : i32
    %201 = arith.index_cast %200 : i32 to index
    %c0_54 = arith.constant 0 : index
    %202 = vector.load %arg14[%201, %c0_54] : memref<64x96xf32, #tpu.memory_space<vmem>>, vector<8x96xf32>
    %cst_55 = arith.constant dense<0.000000e+00> : vector<8x96xf32>
    %203 = tpu.matmul %170, %10, %cst_55 {dimension_numbers = #tpu.dot_dimension_numbers<[1], [0], [0], [1], [0, 0, 1, 1], [], []>} : vector<8x32xf32>, vector<32x96xf32>, vector<8x96xf32> -> vector<8x96xf32>
    %204 = vector.broadcast %11 : vector<1x96xf32> to vector<8x96xf32>
    %205 = arith.addf %203, %204 : vector<8x96xf32>
    %206 = vector.extract_strided_slice %202 {offsets = [0, 0], sizes = [8, 32], strides = [1, 1]} : vector<8x96xf32> to vector<8x32xf32>
    %207 = vector.extract_strided_slice %205 {offsets = [0, 0], sizes = [8, 32], strides = [1, 1]} : vector<8x96xf32> to vector<8x32xf32>
    %208 = arith.addf %206, %207 : vector<8x32xf32>
    %209 = arith.negf %208 : vector<8x32xf32>
    %210 = math.exp %209 : vector<8x32xf32>
    %cst_56 = arith.constant 1.000000e+00 : f32
    %211 = vector.broadcast %cst_56 : f32 to vector<8x32xf32>
    %212 = arith.addf %211, %210 : vector<8x32xf32>
    %213 = arith.divf %211, %212 : vector<8x32xf32>
    %214 = vector.extract_strided_slice %202 {offsets = [0, 32], sizes = [8, 32], strides = [1, 1]} : vector<8x96xf32> to vector<8x32xf32>
    %215 = vector.extract_strided_slice %205 {offsets = [0, 32], sizes = [8, 32], strides = [1, 1]} : vector<8x96xf32> to vector<8x32xf32>
    %216 = arith.addf %214, %215 : vector<8x32xf32>
    %217 = arith.negf %216 : vector<8x32xf32>
    %218 = math.exp %217 : vector<8x32xf32>
    %cst_57 = arith.constant 1.000000e+00 : f32
    %219 = vector.broadcast %cst_57 : f32 to vector<8x32xf32>
    %220 = arith.addf %219, %218 : vector<8x32xf32>
    %221 = arith.divf %219, %220 : vector<8x32xf32>
    %222 = vector.extract_strided_slice %202 {offsets = [0, 64], sizes = [8, 32], strides = [1, 1]} : vector<8x96xf32> to vector<8x32xf32>
    %223 = vector.extract_strided_slice %205 {offsets = [0, 64], sizes = [8, 32], strides = [1, 1]} : vector<8x96xf32> to vector<8x32xf32>
    %224 = arith.mulf %213, %223 : vector<8x32xf32>
    %225 = arith.addf %222, %224 : vector<8x32xf32>
    %226 = math.tanh %225 : vector<8x32xf32>
    %cst_58 = arith.constant 1.000000e+00 : f32
    %227 = vector.broadcast %cst_58 : f32 to vector<8x32xf32>
    %228 = arith.subf %227, %221 : vector<8x32xf32>
    %229 = arith.mulf %228, %226 : vector<8x32xf32>
    %230 = arith.mulf %221, %170 : vector<8x32xf32>
    %231 = arith.addf %229, %230 : vector<8x32xf32>
    %232 = tpu.concatenate %231, %196 in 1 : vector<8x32xf32>, vector<8x32xf32> -> vector<8x64xf32>
    %cst_59 = arith.constant dense<0.000000e+00> : vector<8x128xf32>
    %233 = tpu.matmul %232, %12, %cst_59 {dimension_numbers = #tpu.dot_dimension_numbers<[1], [0], [0], [1], [0, 0, 1, 1], [], []>} : vector<8x64xf32>, vector<64x128xf32>, vector<8x128xf32> -> vector<8x128xf32>
    %234 = vector.broadcast %13 : vector<1x128xf32> to vector<8x128xf32>
    %235 = arith.addf %233, %234 : vector<8x128xf32>
    %236 = vector.extract_strided_slice %235 {offsets = [0, 0], sizes = [8, 32], strides = [1, 1]} : vector<8x128xf32> to vector<8x32xf32>
    %237 = arith.negf %236 : vector<8x32xf32>
    %238 = math.exp %237 : vector<8x32xf32>
    %cst_60 = arith.constant 1.000000e+00 : f32
    %239 = vector.broadcast %cst_60 : f32 to vector<8x32xf32>
    %240 = arith.addf %239, %238 : vector<8x32xf32>
    %241 = arith.divf %239, %240 : vector<8x32xf32>
    %242 = vector.extract_strided_slice %235 {offsets = [0, 32], sizes = [8, 32], strides = [1, 1]} : vector<8x128xf32> to vector<8x32xf32>
    %243 = arith.negf %242 : vector<8x32xf32>
    %244 = math.exp %243 : vector<8x32xf32>
    %cst_61 = arith.constant 1.000000e+00 : f32
    %245 = vector.broadcast %cst_61 : f32 to vector<8x32xf32>
    %246 = arith.addf %245, %244 : vector<8x32xf32>
    %247 = arith.divf %245, %246 : vector<8x32xf32>
    %248 = vector.extract_strided_slice %235 {offsets = [0, 64], sizes = [8, 32], strides = [1, 1]} : vector<8x128xf32> to vector<8x32xf32>
    %249 = vector.extract_strided_slice %235 {offsets = [0, 96], sizes = [8, 32], strides = [1, 1]} : vector<8x128xf32> to vector<8x32xf32>
    %250 = arith.mulf %241, %249 : vector<8x32xf32>
    %251 = arith.addf %248, %250 : vector<8x32xf32>
    %252 = math.tanh %251 : vector<8x32xf32>
    %cst_62 = arith.constant 1.000000e+00 : f32
    %253 = vector.broadcast %cst_62 : f32 to vector<8x32xf32>
    %254 = arith.subf %253, %247 : vector<8x32xf32>
    %255 = arith.mulf %254, %252 : vector<8x32xf32>
    %256 = arith.mulf %247, %196 : vector<8x32xf32>
    %257 = arith.addf %255, %256 : vector<8x32xf32>
    %258 = arith.index_cast %200 : i32 to index
    %c0_63 = arith.constant 0 : index
    %259 = vector.load %arg15[%258, %c0_63] : memref<64x32xf32, #tpu.memory_space<vmem>>, vector<8x32xf32>
    tpu.vector_store %arg15[%258, %c0_63], %257 {strides = array<i32>} : memref<64x32xf32, #tpu.memory_space<vmem>>, vector<8x32xf32>,
    %c4_i32 = arith.constant 4 : i32
    %c8_i32_64 = arith.constant 8 : i32
    %260 = arith.muli %c4_i32, %c8_i32_64 : i32
    %261 = tpu.assume_multiple %260, 8 : i32
    %262 = arith.index_cast %261 : i32 to index
    %c0_65 = arith.constant 0 : index
    %263 = vector.load %arg14[%262, %c0_65] : memref<64x96xf32, #tpu.memory_space<vmem>>, vector<8x96xf32>
    %cst_66 = arith.constant dense<0.000000e+00> : vector<8x96xf32>
    %264 = tpu.matmul %231, %10, %cst_66 {dimension_numbers = #tpu.dot_dimension_numbers<[1], [0], [0], [1], [0, 0, 1, 1], [], []>} : vector<8x32xf32>, vector<32x96xf32>, vector<8x96xf32> -> vector<8x96xf32>
    %265 = vector.broadcast %11 : vector<1x96xf32> to vector<8x96xf32>
    %266 = arith.addf %264, %265 : vector<8x96xf32>
    %267 = vector.extract_strided_slice %263 {offsets = [0, 0], sizes = [8, 32], strides = [1, 1]} : vector<8x96xf32> to vector<8x32xf32>
    %268 = vector.extract_strided_slice %266 {offsets = [0, 0], sizes = [8, 32], strides = [1, 1]} : vector<8x96xf32> to vector<8x32xf32>
    %269 = arith.addf %267, %268 : vector<8x32xf32>
    %270 = arith.negf %269 : vector<8x32xf32>
    %271 = math.exp %270 : vector<8x32xf32>
    %cst_67 = arith.constant 1.000000e+00 : f32
    %272 = vector.broadcast %cst_67 : f32 to vector<8x32xf32>
    %273 = arith.addf %272, %271 : vector<8x32xf32>
    %274 = arith.divf %272, %273 : vector<8x32xf32>
    %275 = vector.extract_strided_slice %263 {offsets = [0, 32], sizes = [8, 32], strides = [1, 1]} : vector<8x96xf32> to vector<8x32xf32>
    %276 = vector.extract_strided_slice %266 {offsets = [0, 32], sizes = [8, 32], strides = [1, 1]} : vector<8x96xf32> to vector<8x32xf32>
    %277 = arith.addf %275, %276 : vector<8x32xf32>
    %278 = arith.negf %277 : vector<8x32xf32>
    %279 = math.exp %278 : vector<8x32xf32>
    %cst_68 = arith.constant 1.000000e+00 : f32
    %280 = vector.broadcast %cst_68 : f32 to vector<8x32xf32>
    %281 = arith.addf %280, %279 : vector<8x32xf32>
    %282 = arith.divf %280, %281 : vector<8x32xf32>
    %283 = vector.extract_strided_slice %263 {offsets = [0, 64], sizes = [8, 32], strides = [1, 1]} : vector<8x96xf32> to vector<8x32xf32>
    %284 = vector.extract_strided_slice %266 {offsets = [0, 64], sizes = [8, 32], strides = [1, 1]} : vector<8x96xf32> to vector<8x32xf32>
    %285 = arith.mulf %274, %284 : vector<8x32xf32>
    %286 = arith.addf %283, %285 : vector<8x32xf32>
    %287 = math.tanh %286 : vector<8x32xf32>
    %cst_69 = arith.constant 1.000000e+00 : f32
    %288 = vector.broadcast %cst_69 : f32 to vector<8x32xf32>
    %289 = arith.subf %288, %282 : vector<8x32xf32>
    %290 = arith.mulf %289, %287 : vector<8x32xf32>
    %291 = arith.mulf %282, %231 : vector<8x32xf32>
    %292 = arith.addf %290, %291 : vector<8x32xf32>
    %293 = tpu.concatenate %292, %257 in 1 : vector<8x32xf32>, vector<8x32xf32> -> vector<8x64xf32>
    %cst_70 = arith.constant dense<0.000000e+00> : vector<8x128xf32>
    %294 = tpu.matmul %293, %12, %cst_70 {dimension_numbers = #tpu.dot_dimension_numbers<[1], [0], [0], [1], [0, 0, 1, 1], [], []>} : vector<8x64xf32>, vector<64x128xf32>, vector<8x128xf32> -> vector<8x128xf32>
    %295 = vector.broadcast %13 : vector<1x128xf32> to vector<8x128xf32>
    %296 = arith.addf %294, %295 : vector<8x128xf32>
    %297 = vector.extract_strided_slice %296 {offsets = [0, 0], sizes = [8, 32], strides = [1, 1]} : vector<8x128xf32> to vector<8x32xf32>
    %298 = arith.negf %297 : vector<8x32xf32>
    %299 = math.exp %298 : vector<8x32xf32>
    %cst_71 = arith.constant 1.000000e+00 : f32
    %300 = vector.broadcast %cst_71 : f32 to vector<8x32xf32>
    %301 = arith.addf %300, %299 : vector<8x32xf32>
    %302 = arith.divf %300, %301 : vector<8x32xf32>
    %303 = vector.extract_strided_slice %296 {offsets = [0, 32], sizes = [8, 32], strides = [1, 1]} : vector<8x128xf32> to vector<8x32xf32>
    %304 = arith.negf %303 : vector<8x32xf32>
    %305 = math.exp %304 : vector<8x32xf32>
    %cst_72 = arith.constant 1.000000e+00 : f32
    %306 = vector.broadcast %cst_72 : f32 to vector<8x32xf32>
    %307 = arith.addf %306, %305 : vector<8x32xf32>
    %308 = arith.divf %306, %307 : vector<8x32xf32>
    %309 = vector.extract_strided_slice %296 {offsets = [0, 64], sizes = [8, 32], strides = [1, 1]} : vector<8x128xf32> to vector<8x32xf32>
    %310 = vector.extract_strided_slice %296 {offsets = [0, 96], sizes = [8, 32], strides = [1, 1]} : vector<8x128xf32> to vector<8x32xf32>
    %311 = arith.mulf %302, %310 : vector<8x32xf32>
    %312 = arith.addf %309, %311 : vector<8x32xf32>
    %313 = math.tanh %312 : vector<8x32xf32>
    %cst_73 = arith.constant 1.000000e+00 : f32
    %314 = vector.broadcast %cst_73 : f32 to vector<8x32xf32>
    %315 = arith.subf %314, %308 : vector<8x32xf32>
    %316 = arith.mulf %315, %313 : vector<8x32xf32>
    %317 = arith.mulf %308, %257 : vector<8x32xf32>
    %318 = arith.addf %316, %317 : vector<8x32xf32>
    %319 = arith.index_cast %261 : i32 to index
    %c0_74 = arith.constant 0 : index
    %320 = vector.load %arg15[%319, %c0_74] : memref<64x32xf32, #tpu.memory_space<vmem>>, vector<8x32xf32>
    tpu.vector_store %arg15[%319, %c0_74], %318 {strides = array<i32>} : memref<64x32xf32, #tpu.memory_space<vmem>>, vector<8x32xf32>,
    %c5_i32 = arith.constant 5 : i32
    %c8_i32_75 = arith.constant 8 : i32
    %321 = arith.muli %c5_i32, %c8_i32_75 : i32
    %322 = tpu.assume_multiple %321, 8 : i32
    %323 = arith.index_cast %322 : i32 to index
    %c0_76 = arith.constant 0 : index
    %324 = vector.load %arg14[%323, %c0_76] : memref<64x96xf32, #tpu.memory_space<vmem>>, vector<8x96xf32>
    %cst_77 = arith.constant dense<0.000000e+00> : vector<8x96xf32>
    %325 = tpu.matmul %292, %10, %cst_77 {dimension_numbers = #tpu.dot_dimension_numbers<[1], [0], [0], [1], [0, 0, 1, 1], [], []>} : vector<8x32xf32>, vector<32x96xf32>, vector<8x96xf32> -> vector<8x96xf32>
    %326 = vector.broadcast %11 : vector<1x96xf32> to vector<8x96xf32>
    %327 = arith.addf %325, %326 : vector<8x96xf32>
    %328 = vector.extract_strided_slice %324 {offsets = [0, 0], sizes = [8, 32], strides = [1, 1]} : vector<8x96xf32> to vector<8x32xf32>
    %329 = vector.extract_strided_slice %327 {offsets = [0, 0], sizes = [8, 32], strides = [1, 1]} : vector<8x96xf32> to vector<8x32xf32>
    %330 = arith.addf %328, %329 : vector<8x32xf32>
    %331 = arith.negf %330 : vector<8x32xf32>
    %332 = math.exp %331 : vector<8x32xf32>
    %cst_78 = arith.constant 1.000000e+00 : f32
    %333 = vector.broadcast %cst_78 : f32 to vector<8x32xf32>
    %334 = arith.addf %333, %332 : vector<8x32xf32>
    %335 = arith.divf %333, %334 : vector<8x32xf32>
    %336 = vector.extract_strided_slice %324 {offsets = [0, 32], sizes = [8, 32], strides = [1, 1]} : vector<8x96xf32> to vector<8x32xf32>
    %337 = vector.extract_strided_slice %327 {offsets = [0, 32], sizes = [8, 32], strides = [1, 1]} : vector<8x96xf32> to vector<8x32xf32>
    %338 = arith.addf %336, %337 : vector<8x32xf32>
    %339 = arith.negf %338 : vector<8x32xf32>
    %340 = math.exp %339 : vector<8x32xf32>
    %cst_79 = arith.constant 1.000000e+00 : f32
    %341 = vector.broadcast %cst_79 : f32 to vector<8x32xf32>
    %342 = arith.addf %341, %340 : vector<8x32xf32>
    %343 = arith.divf %341, %342 : vector<8x32xf32>
    %344 = vector.extract_strided_slice %324 {offsets = [0, 64], sizes = [8, 32], strides = [1, 1]} : vector<8x96xf32> to vector<8x32xf32>
    %345 = vector.extract_strided_slice %327 {offsets = [0, 64], sizes = [8, 32], strides = [1, 1]} : vector<8x96xf32> to vector<8x32xf32>
    %346 = arith.mulf %335, %345 : vector<8x32xf32>
    %347 = arith.addf %344, %346 : vector<8x32xf32>
    %348 = math.tanh %347 : vector<8x32xf32>
    %cst_80 = arith.constant 1.000000e+00 : f32
    %349 = vector.broadcast %cst_80 : f32 to vector<8x32xf32>
    %350 = arith.subf %349, %343 : vector<8x32xf32>
    %351 = arith.mulf %350, %348 : vector<8x32xf32>
    %352 = arith.mulf %343, %292 : vector<8x32xf32>
    %353 = arith.addf %351, %352 : vector<8x32xf32>
    %354 = tpu.concatenate %353, %318 in 1 : vector<8x32xf32>, vector<8x32xf32> -> vector<8x64xf32>
    %cst_81 = arith.constant dense<0.000000e+00> : vector<8x128xf32>
    %355 = tpu.matmul %354, %12, %cst_81 {dimension_numbers = #tpu.dot_dimension_numbers<[1], [0], [0], [1], [0, 0, 1, 1], [], []>} : vector<8x64xf32>, vector<64x128xf32>, vector<8x128xf32> -> vector<8x128xf32>
    %356 = vector.broadcast %13 : vector<1x128xf32> to vector<8x128xf32>
    %357 = arith.addf %355, %356 : vector<8x128xf32>
    %358 = vector.extract_strided_slice %357 {offsets = [0, 0], sizes = [8, 32], strides = [1, 1]} : vector<8x128xf32> to vector<8x32xf32>
    %359 = arith.negf %358 : vector<8x32xf32>
    %360 = math.exp %359 : vector<8x32xf32>
    %cst_82 = arith.constant 1.000000e+00 : f32
    %361 = vector.broadcast %cst_82 : f32 to vector<8x32xf32>
    %362 = arith.addf %361, %360 : vector<8x32xf32>
    %363 = arith.divf %361, %362 : vector<8x32xf32>
    %364 = vector.extract_strided_slice %357 {offsets = [0, 32], sizes = [8, 32], strides = [1, 1]} : vector<8x128xf32> to vector<8x32xf32>
    %365 = arith.negf %364 : vector<8x32xf32>
    %366 = math.exp %365 : vector<8x32xf32>
    %cst_83 = arith.constant 1.000000e+00 : f32
    %367 = vector.broadcast %cst_83 : f32 to vector<8x32xf32>
    %368 = arith.addf %367, %366 : vector<8x32xf32>
    %369 = arith.divf %367, %368 : vector<8x32xf32>
    %370 = vector.extract_strided_slice %357 {offsets = [0, 64], sizes = [8, 32], strides = [1, 1]} : vector<8x128xf32> to vector<8x32xf32>
    %371 = vector.extract_strided_slice %357 {offsets = [0, 96], sizes = [8, 32], strides = [1, 1]} : vector<8x128xf32> to vector<8x32xf32>
    %372 = arith.mulf %363, %371 : vector<8x32xf32>
    %373 = arith.addf %370, %372 : vector<8x32xf32>
    %374 = math.tanh %373 : vector<8x32xf32>
    %cst_84 = arith.constant 1.000000e+00 : f32
    %375 = vector.broadcast %cst_84 : f32 to vector<8x32xf32>
    %376 = arith.subf %375, %369 : vector<8x32xf32>
    %377 = arith.mulf %376, %374 : vector<8x32xf32>
    %378 = arith.mulf %369, %318 : vector<8x32xf32>
    %379 = arith.addf %377, %378 : vector<8x32xf32>
    %380 = arith.index_cast %322 : i32 to index
    %c0_85 = arith.constant 0 : index
    %381 = vector.load %arg15[%380, %c0_85] : memref<64x32xf32, #tpu.memory_space<vmem>>, vector<8x32xf32>
    tpu.vector_store %arg15[%380, %c0_85], %379 {strides = array<i32>} : memref<64x32xf32, #tpu.memory_space<vmem>>, vector<8x32xf32>,
    %c6_i32 = arith.constant 6 : i32
    %c8_i32_86 = arith.constant 8 : i32
    %382 = arith.muli %c6_i32, %c8_i32_86 : i32
    %383 = tpu.assume_multiple %382, 8 : i32
    %384 = arith.index_cast %383 : i32 to index
    %c0_87 = arith.constant 0 : index
    %385 = vector.load %arg14[%384, %c0_87] : memref<64x96xf32, #tpu.memory_space<vmem>>, vector<8x96xf32>
    %cst_88 = arith.constant dense<0.000000e+00> : vector<8x96xf32>
    %386 = tpu.matmul %353, %10, %cst_88 {dimension_numbers = #tpu.dot_dimension_numbers<[1], [0], [0], [1], [0, 0, 1, 1], [], []>} : vector<8x32xf32>, vector<32x96xf32>, vector<8x96xf32> -> vector<8x96xf32>
    %387 = vector.broadcast %11 : vector<1x96xf32> to vector<8x96xf32>
    %388 = arith.addf %386, %387 : vector<8x96xf32>
    %389 = vector.extract_strided_slice %385 {offsets = [0, 0], sizes = [8, 32], strides = [1, 1]} : vector<8x96xf32> to vector<8x32xf32>
    %390 = vector.extract_strided_slice %388 {offsets = [0, 0], sizes = [8, 32], strides = [1, 1]} : vector<8x96xf32> to vector<8x32xf32>
    %391 = arith.addf %389, %390 : vector<8x32xf32>
    %392 = arith.negf %391 : vector<8x32xf32>
    %393 = math.exp %392 : vector<8x32xf32>
    %cst_89 = arith.constant 1.000000e+00 : f32
    %394 = vector.broadcast %cst_89 : f32 to vector<8x32xf32>
    %395 = arith.addf %394, %393 : vector<8x32xf32>
    %396 = arith.divf %394, %395 : vector<8x32xf32>
    %397 = vector.extract_strided_slice %385 {offsets = [0, 32], sizes = [8, 32], strides = [1, 1]} : vector<8x96xf32> to vector<8x32xf32>
    %398 = vector.extract_strided_slice %388 {offsets = [0, 32], sizes = [8, 32], strides = [1, 1]} : vector<8x96xf32> to vector<8x32xf32>
    %399 = arith.addf %397, %398 : vector<8x32xf32>
    %400 = arith.negf %399 : vector<8x32xf32>
    %401 = math.exp %400 : vector<8x32xf32>
    %cst_90 = arith.constant 1.000000e+00 : f32
    %402 = vector.broadcast %cst_90 : f32 to vector<8x32xf32>
    %403 = arith.addf %402, %401 : vector<8x32xf32>
    %404 = arith.divf %402, %403 : vector<8x32xf32>
    %405 = vector.extract_strided_slice %385 {offsets = [0, 64], sizes = [8, 32], strides = [1, 1]} : vector<8x96xf32> to vector<8x32xf32>
    %406 = vector.extract_strided_slice %388 {offsets = [0, 64], sizes = [8, 32], strides = [1, 1]} : vector<8x96xf32> to vector<8x32xf32>
    %407 = arith.mulf %396, %406 : vector<8x32xf32>
    %408 = arith.addf %405, %407 : vector<8x32xf32>
    %409 = math.tanh %408 : vector<8x32xf32>
    %cst_91 = arith.constant 1.000000e+00 : f32
    %410 = vector.broadcast %cst_91 : f32 to vector<8x32xf32>
    %411 = arith.subf %410, %404 : vector<8x32xf32>
    %412 = arith.mulf %411, %409 : vector<8x32xf32>
    %413 = arith.mulf %404, %353 : vector<8x32xf32>
    %414 = arith.addf %412, %413 : vector<8x32xf32>
    %415 = tpu.concatenate %414, %379 in 1 : vector<8x32xf32>, vector<8x32xf32> -> vector<8x64xf32>
    %cst_92 = arith.constant dense<0.000000e+00> : vector<8x128xf32>
    %416 = tpu.matmul %415, %12, %cst_92 {dimension_numbers = #tpu.dot_dimension_numbers<[1], [0], [0], [1], [0, 0, 1, 1], [], []>} : vector<8x64xf32>, vector<64x128xf32>, vector<8x128xf32> -> vector<8x128xf32>
    %417 = vector.broadcast %13 : vector<1x128xf32> to vector<8x128xf32>
    %418 = arith.addf %416, %417 : vector<8x128xf32>
    %419 = vector.extract_strided_slice %418 {offsets = [0, 0], sizes = [8, 32], strides = [1, 1]} : vector<8x128xf32> to vector<8x32xf32>
    %420 = arith.negf %419 : vector<8x32xf32>
    %421 = math.exp %420 : vector<8x32xf32>
    %cst_93 = arith.constant 1.000000e+00 : f32
    %422 = vector.broadcast %cst_93 : f32 to vector<8x32xf32>
    %423 = arith.addf %422, %421 : vector<8x32xf32>
    %424 = arith.divf %422, %423 : vector<8x32xf32>
    %425 = vector.extract_strided_slice %418 {offsets = [0, 32], sizes = [8, 32], strides = [1, 1]} : vector<8x128xf32> to vector<8x32xf32>
    %426 = arith.negf %425 : vector<8x32xf32>
    %427 = math.exp %426 : vector<8x32xf32>
    %cst_94 = arith.constant 1.000000e+00 : f32
    %428 = vector.broadcast %cst_94 : f32 to vector<8x32xf32>
    %429 = arith.addf %428, %427 : vector<8x32xf32>
    %430 = arith.divf %428, %429 : vector<8x32xf32>
    %431 = vector.extract_strided_slice %418 {offsets = [0, 64], sizes = [8, 32], strides = [1, 1]} : vector<8x128xf32> to vector<8x32xf32>
    %432 = vector.extract_strided_slice %418 {offsets = [0, 96], sizes = [8, 32], strides = [1, 1]} : vector<8x128xf32> to vector<8x32xf32>
    %433 = arith.mulf %424, %432 : vector<8x32xf32>
    %434 = arith.addf %431, %433 : vector<8x32xf32>
    %435 = math.tanh %434 : vector<8x32xf32>
    %cst_95 = arith.constant 1.000000e+00 : f32
    %436 = vector.broadcast %cst_95 : f32 to vector<8x32xf32>
    %437 = arith.subf %436, %430 : vector<8x32xf32>
    %438 = arith.mulf %437, %435 : vector<8x32xf32>
    %439 = arith.mulf %430, %379 : vector<8x32xf32>
    %440 = arith.addf %438, %439 : vector<8x32xf32>
    %441 = arith.index_cast %383 : i32 to index
    %c0_96 = arith.constant 0 : index
    %442 = vector.load %arg15[%441, %c0_96] : memref<64x32xf32, #tpu.memory_space<vmem>>, vector<8x32xf32>
    tpu.vector_store %arg15[%441, %c0_96], %440 {strides = array<i32>} : memref<64x32xf32, #tpu.memory_space<vmem>>, vector<8x32xf32>,
    %c7_i32 = arith.constant 7 : i32
    %c8_i32_97 = arith.constant 8 : i32
    %443 = arith.muli %c7_i32, %c8_i32_97 : i32
    %444 = tpu.assume_multiple %443, 8 : i32
    %445 = arith.index_cast %444 : i32 to index
    %c0_98 = arith.constant 0 : index
    %446 = vector.load %arg14[%445, %c0_98] : memref<64x96xf32, #tpu.memory_space<vmem>>, vector<8x96xf32>
    %cst_99 = arith.constant dense<0.000000e+00> : vector<8x96xf32>
    %447 = tpu.matmul %414, %10, %cst_99 {dimension_numbers = #tpu.dot_dimension_numbers<[1], [0], [0], [1], [0, 0, 1, 1], [], []>} : vector<8x32xf32>, vector<32x96xf32>, vector<8x96xf32> -> vector<8x96xf32>
    %448 = vector.broadcast %11 : vector<1x96xf32> to vector<8x96xf32>
    %449 = arith.addf %447, %448 : vector<8x96xf32>
    %450 = vector.extract_strided_slice %446 {offsets = [0, 0], sizes = [8, 32], strides = [1, 1]} : vector<8x96xf32> to vector<8x32xf32>
    %451 = vector.extract_strided_slice %449 {offsets = [0, 0], sizes = [8, 32], strides = [1, 1]} : vector<8x96xf32> to vector<8x32xf32>
    %452 = arith.addf %450, %451 : vector<8x32xf32>
    %453 = arith.negf %452 : vector<8x32xf32>
    %454 = math.exp %453 : vector<8x32xf32>
    %cst_100 = arith.constant 1.000000e+00 : f32
    %455 = vector.broadcast %cst_100 : f32 to vector<8x32xf32>
    %456 = arith.addf %455, %454 : vector<8x32xf32>
    %457 = arith.divf %455, %456 : vector<8x32xf32>
    %458 = vector.extract_strided_slice %446 {offsets = [0, 32], sizes = [8, 32], strides = [1, 1]} : vector<8x96xf32> to vector<8x32xf32>
    %459 = vector.extract_strided_slice %449 {offsets = [0, 32], sizes = [8, 32], strides = [1, 1]} : vector<8x96xf32> to vector<8x32xf32>
    %460 = arith.addf %458, %459 : vector<8x32xf32>
    %461 = arith.negf %460 : vector<8x32xf32>
    %462 = math.exp %461 : vector<8x32xf32>
    %cst_101 = arith.constant 1.000000e+00 : f32
    %463 = vector.broadcast %cst_101 : f32 to vector<8x32xf32>
    %464 = arith.addf %463, %462 : vector<8x32xf32>
    %465 = arith.divf %463, %464 : vector<8x32xf32>
    %466 = vector.extract_strided_slice %446 {offsets = [0, 64], sizes = [8, 32], strides = [1, 1]} : vector<8x96xf32> to vector<8x32xf32>
    %467 = vector.extract_strided_slice %449 {offsets = [0, 64], sizes = [8, 32], strides = [1, 1]} : vector<8x96xf32> to vector<8x32xf32>
    %468 = arith.mulf %457, %467 : vector<8x32xf32>
    %469 = arith.addf %466, %468 : vector<8x32xf32>
    %470 = math.tanh %469 : vector<8x32xf32>
    %cst_102 = arith.constant 1.000000e+00 : f32
    %471 = vector.broadcast %cst_102 : f32 to vector<8x32xf32>
    %472 = arith.subf %471, %465 : vector<8x32xf32>
    %473 = arith.mulf %472, %470 : vector<8x32xf32>
    %474 = arith.mulf %465, %414 : vector<8x32xf32>
    %475 = arith.addf %473, %474 : vector<8x32xf32>
    %476 = tpu.concatenate %475, %440 in 1 : vector<8x32xf32>, vector<8x32xf32> -> vector<8x64xf32>
    %cst_103 = arith.constant dense<0.000000e+00> : vector<8x128xf32>
    %477 = tpu.matmul %476, %12, %cst_103 {dimension_numbers = #tpu.dot_dimension_numbers<[1], [0], [0], [1], [0, 0, 1, 1], [], []>} : vector<8x64xf32>, vector<64x128xf32>, vector<8x128xf32> -> vector<8x128xf32>
    %478 = vector.broadcast %13 : vector<1x128xf32> to vector<8x128xf32>
    %479 = arith.addf %477, %478 : vector<8x128xf32>
    %480 = vector.extract_strided_slice %479 {offsets = [0, 0], sizes = [8, 32], strides = [1, 1]} : vector<8x128xf32> to vector<8x32xf32>
    %481 = arith.negf %480 : vector<8x32xf32>
    %482 = math.exp %481 : vector<8x32xf32>
    %cst_104 = arith.constant 1.000000e+00 : f32
    %483 = vector.broadcast %cst_104 : f32 to vector<8x32xf32>
    %484 = arith.addf %483, %482 : vector<8x32xf32>
    %485 = arith.divf %483, %484 : vector<8x32xf32>
    %486 = vector.extract_strided_slice %479 {offsets = [0, 32], sizes = [8, 32], strides = [1, 1]} : vector<8x128xf32> to vector<8x32xf32>
    %487 = arith.negf %486 : vector<8x32xf32>
    %488 = math.exp %487 : vector<8x32xf32>
    %cst_105 = arith.constant 1.000000e+00 : f32
    %489 = vector.broadcast %cst_105 : f32 to vector<8x32xf32>
    %490 = arith.addf %489, %488 : vector<8x32xf32>
    %491 = arith.divf %489, %490 : vector<8x32xf32>
    %492 = vector.extract_strided_slice %479 {offsets = [0, 64], sizes = [8, 32], strides = [1, 1]} : vector<8x128xf32> to vector<8x32xf32>
    %493 = vector.extract_strided_slice %479 {offsets = [0, 96], sizes = [8, 32], strides = [1, 1]} : vector<8x128xf32> to vector<8x32xf32>
    %494 = arith.mulf %485, %493 : vector<8x32xf32>
    %495 = arith.addf %492, %494 : vector<8x32xf32>
    %496 = math.tanh %495 : vector<8x32xf32>
    %cst_106 = arith.constant 1.000000e+00 : f32
    %497 = vector.broadcast %cst_106 : f32 to vector<8x32xf32>
    %498 = arith.subf %497, %491 : vector<8x32xf32>
    %499 = arith.mulf %498, %496 : vector<8x32xf32>
    %500 = arith.mulf %491, %440 : vector<8x32xf32>
    %501 = arith.addf %499, %500 : vector<8x32xf32>
    %502 = arith.index_cast %444 : i32 to index
    %c0_107 = arith.constant 0 : index
    %503 = vector.load %arg15[%502, %c0_107] : memref<64x32xf32, #tpu.memory_space<vmem>>, vector<8x32xf32>
    tpu.vector_store %arg15[%502, %c0_107], %501 {strides = array<i32>} : memref<64x32xf32, #tpu.memory_space<vmem>>, vector<8x32xf32>,
    %c8_i32_108 = arith.constant 8 : i32
    %c0_109 = arith.constant 0 : index
    %c0_110 = arith.constant 0 : index
    %504 = vector.load %arg12[%c0_109, %c0_110] : memref<8x32xf32, #tpu.memory_space<vmem>>, vector<8x32xf32>
    tpu.vector_store %arg12[%c0_109, %c0_110], %475 {strides = array<i32>} : memref<8x32xf32, #tpu.memory_space<vmem>>, vector<8x32xf32>,
    %c0_111 = arith.constant 0 : index
    %c0_112 = arith.constant 0 : index
    %505 = vector.load %arg13[%c0_111, %c0_112] : memref<8x32xf32, #tpu.memory_space<vmem>>, vector<8x32xf32>
    tpu.vector_store %arg13[%c0_111, %c0_112], %501 {strides = array<i32>} : memref<8x32xf32, #tpu.memory_space<vmem>>, vector<8x32xf32>,
    %c0_113 = arith.constant 0 : index
    %c0_114 = arith.constant 0 : index
    %506 = vector.load %arg15[%c0_113, %c0_114] : memref<64x32xf32, #tpu.memory_space<vmem>>, vector<64x32xf32>
    %c0_115 = arith.constant 0 : index
    %c0_116 = arith.constant 0 : index
    %507 = vector.load %arg2[%c0_115, %c0_116] : memref<64x1xf32, #tpu.memory_space<vmem>>, vector<64x1xf32>
    %508 = vector.broadcast %507 : vector<64x1xf32> to vector<64x32xf32>
    %509 = arith.mulf %506, %508 : vector<64x32xf32>
    %c0_117 = arith.constant 0 : index
    %c0_118 = arith.constant 0 : index
    %510 = vector.load %arg9[%c0_117, %c0_118] : memref<32x4xf32, #tpu.memory_space<vmem>>, vector<32x4xf32>
    %cst_119 = arith.constant dense<0.000000e+00> : vector<64x4xf32>
    %511 = tpu.matmul %509, %510, %cst_119 {dimension_numbers = #tpu.dot_dimension_numbers<[1], [0], [0], [1], [0, 0, 1, 1], [], []>} : vector<64x32xf32>, vector<32x4xf32>, vector<64x4xf32> -> vector<64x4xf32>
    %c0_120 = arith.constant 0 : index
    %c0_121 = arith.constant 0 : index
    %512 = vector.load %arg10[%c0_120, %c0_121] : memref<1x4xf32, #tpu.memory_space<vmem>>, vector<1x4xf32>
    %513 = vector.broadcast %512 : vector<1x4xf32> to vector<64x4xf32>
    %514 = arith.addf %511, %513 : vector<64x4xf32>
    %cst_122 = arith.constant 2.000000e+01 : f32
    %515 = vector.broadcast %cst_122 : f32 to vector<64x4xf32>
    %516 = arith.cmpf ogt, %514, %515 : vector<64x4xf32>
    %cst_123 = arith.constant 2.000000e+01 : f32
    %517 = vector.broadcast %cst_123 : f32 to vector<64x4xf32>
    %518 = arith.minimumf %514, %517 : vector<64x4xf32>
    %519 = math.exp %518 : vector<64x4xf32>
    %520 = math.log1p %519 : vector<64x4xf32>
    %521 = arith.select %516, %514, %520 : vector<64x4xi1>, vector<64x4xf32>
    %522 = tpu.iota {dimensions = array<i32: 1>} : vector<64x4xi32>
    %c2_i32_124 = arith.constant 2 : i32
    %523 = vector.broadcast %c2_i32_124 : i32 to vector<64x4xi32>
    %524 = arith.cmpi slt, %522, %523 : vector<64x4xi32>
    %525 = arith.select %524, %514, %521 : vector<64x4xi1>, vector<64x4xf32>
    %c0_125 = arith.constant 0 : index
    %c0_126 = arith.constant 0 : index
    %526 = vector.load %arg11[%c0_125, %c0_126] : memref<64x4xf32, #tpu.memory_space<vmem>>, vector<64x4xf32>
    tpu.vector_store %arg11[%c0_125, %c0_126], %525 {strides = array<i32>} : memref<64x4xf32, #tpu.memory_space<vmem>>, vector<64x4xf32>,
    return
  }
  func.func @transform_0(%arg0: i32) -> (i32, i32) {
    %c0_i32 = arith.constant 0 : i32
    %c0_i32_0 = arith.constant 0 : i32
    return %arg0, %c0_i32 : i32, i32
  }
  func.func @transform_1(%arg0: i32) -> (i32, i32) {
    %c0_i32 = arith.constant 0 : i32
    %c0_i32_0 = arith.constant 0 : i32
    return %arg0, %c0_i32 : i32, i32
  }
  func.func @transform_2(%arg0: i32) -> (i32, i32) {
    %c0_i32 = arith.constant 0 : i32
    %c0_i32_0 = arith.constant 0 : i32
    %c0_i32_1 = arith.constant 0 : i32
    return %c0_i32, %c0_i32_0 : i32, i32
  }
  func.func @transform_3(%arg0: i32) -> (i32, i32) {
    %c0_i32 = arith.constant 0 : i32
    %c0_i32_0 = arith.constant 0 : i32
    %c0_i32_1 = arith.constant 0 : i32
    return %c0_i32, %c0_i32_0 : i32, i32
  }
  func.func @transform_4(%arg0: i32) -> (i32, i32) {
    %c0_i32 = arith.constant 0 : i32
    %c0_i32_0 = arith.constant 0 : i32
    %c0_i32_1 = arith.constant 0 : i32
    return %c0_i32, %c0_i32_0 : i32, i32
  }
  func.func @transform_5(%arg0: i32) -> (i32, i32) {
    %c0_i32 = arith.constant 0 : i32
    %c0_i32_0 = arith.constant 0 : i32
    %c0_i32_1 = arith.constant 0 : i32
    return %c0_i32, %c0_i32_0 : i32, i32
  }
  func.func @transform_6(%arg0: i32) -> (i32, i32) {
    %c0_i32 = arith.constant 0 : i32
    %c0_i32_0 = arith.constant 0 : i32
    %c0_i32_1 = arith.constant 0 : i32
    return %c0_i32, %c0_i32_0 : i32, i32
  }
  func.func @transform_7(%arg0: i32) -> (i32, i32) {
    %c0_i32 = arith.constant 0 : i32
    %c0_i32_0 = arith.constant 0 : i32
    %c0_i32_1 = arith.constant 0 : i32
    return %c0_i32, %c0_i32_0 : i32, i32
  }
  func.func @transform_8(%arg0: i32) -> (i32, i32) {
    %c0_i32 = arith.constant 0 : i32
    %c0_i32_0 = arith.constant 0 : i32
    %c0_i32_1 = arith.constant 0 : i32
    return %c0_i32, %c0_i32_0 : i32, i32
  }
  func.func @transform_9(%arg0: i32) -> (i32, i32) {
    %c0_i32 = arith.constant 0 : i32
    %c0_i32_0 = arith.constant 0 : i32
    %c0_i32_1 = arith.constant 0 : i32
    return %c0_i32, %c0_i32_0 : i32, i32
  }
  func.func @transform_10(%arg0: i32) -> (i32, i32) {
    %c0_i32 = arith.constant 0 : i32
    %c0_i32_0 = arith.constant 0 : i32
    return %arg0, %c0_i32 : i32, i32
  }
}

</mosaic_0001>

<llo_original>
// kernel: tracknet_v2_rnn_forward.1
$region0: #{tracknet_v2_rnn_forward.1}
  #allocation0 [shape = 'u32[]', space=smem, size = 0x4, offset = 0x4, fixed_abs, tag = 'smem constant byte address 0x4 - core index']
  #allocation1 [shape = 'u32[144,128]{1,0:T(1,128)}', space=vmem, size = 0x12000, scoped, tag = 'internal scratch']
  #allocation2 [shape = 'f32[8,32]{1,0:T(8,128)}', space=vmem, size = 0x1000, scoped, tag = 'scratch operand']
  #allocation3 [shape = 'f32[8,32]{1,0:T(8,128)}', space=vmem, size = 0x1000, scoped, tag = 'scratch operand']
  #allocation4 [shape = 'f32[64,96]{1,0:T(8,128)}', space=vmem, size = 0x8000, scoped, tag = 'scratch operand']
  #allocation5 [shape = 'f32[64,32]{1,0:T(8,128)}', space=vmem, size = 0x8000, scoped, tag = 'scratch operand']
  %s0 = inlined_call_operand.vmem [shape: f32[64,4], index: 0, kind: input, shape index: {}]
  %s1 = inlined_call_operand.vmem [shape: f32[64,1], index: 1, kind: input, shape index: {}]
  %s2 = inlined_call_operand.vmem [shape: f32[4,96], index: 2, kind: input, shape index: {}]
  %s3 = inlined_call_operand.vmem [shape: f32[1,96], index: 3, kind: input, shape index: {}]
  %s4 = inlined_call_operand.vmem [shape: f32[32,96], index: 4, kind: input, shape index: {}]
  %s5 = inlined_call_operand.vmem [shape: f32[1,96], index: 5, kind: input, shape index: {}]
  %s6 = inlined_call_operand.vmem [shape: f32[64,128], index: 6, kind: input, shape index: {}]
  %s7 = inlined_call_operand.vmem [shape: f32[1,128], index: 7, kind: input, shape index: {}]
  %s8 = inlined_call_operand.vmem [shape: f32[32,4], index: 8, kind: input, shape index: {}]
  %s9 = inlined_call_operand.vmem [shape: f32[1,4], index: 9, kind: input, shape index: {}]
  %s10 = inlined_call_operand.vmem [shape: f32[64,4], index: 10, kind: output, shape index: {}]
  %s11 = sld [smem:[#allocation0]]
  $region54: #{tracknet_v2_rnn_forward.1} parent=0
    _
  %s13 = ssub.s32 1, %s11
  %s14 = scalar_select 0, %s13, %s11
  // Predicated region
  $region2: #{tracknet_v2_rnn_forward.1} parent=0 // pred_check
    _
  $region3: #{tracknet_v2_rnn_forward.1} parent=0 // pred_check_branch
    %16 = sbr.rel (0) target = $region5
  $region4: #{tracknet_v2_rnn_forward.1} parent=0 // pred_region
    _
  $region5: #{tracknet_v2_rnn_forward.1} parent=0 // pred_fallthru
    _
  // Predicated region
  $region6: #{tracknet_v2_rnn_forward.1} parent=0 // pred_check
    _
  $region7: #{tracknet_v2_rnn_forward.1} parent=0 // pred_check_branch
    %18 = sbr.rel (0) target = $region9
  $region8: #{tracknet_v2_rnn_forward.1} parent=0 // pred_region
    _
  $region9: #{tracknet_v2_rnn_forward.1} parent=0 // pred_fallthru
    _
  // Predicated region
  $region10: #{tracknet_v2_rnn_forward.1} parent=0 // pred_check
    _
  $region11: #{tracknet_v2_rnn_forward.1} parent=0 // pred_check_branch
    %20 = sbr.rel (0) target = $region13
  $region12: #{tracknet_v2_rnn_forward.1} parent=0 // pred_region
    _
  $region13: #{tracknet_v2_rnn_forward.1} parent=0 // pred_fallthru
    _
  // Predicated region
  $region14: #{tracknet_v2_rnn_forward.1} parent=0 // pred_check
    _
  $region15: #{tracknet_v2_rnn_forward.1} parent=0 // pred_check_branch
    %22 = sbr.rel (0) target = $region17
  $region16: #{tracknet_v2_rnn_forward.1} parent=0 // pred_region
    _
  $region17: #{tracknet_v2_rnn_forward.1} parent=0 // pred_fallthru
    _
  // Predicated region
  $region18: #{tracknet_v2_rnn_forward.1} parent=0 // pred_check
    _
  $region19: #{tracknet_v2_rnn_forward.1} parent=0 // pred_check_branch
    %24 = sbr.rel (0) target = $region21
  $region20: #{tracknet_v2_rnn_forward.1} parent=0 // pred_region
    _
  $region21: #{tracknet_v2_rnn_forward.1} parent=0 // pred_fallthru
    _
  // Predicated region
  $region22: #{tracknet_v2_rnn_forward.1} parent=0 // pred_check
    _
  $region23: #{tracknet_v2_rnn_forward.1} parent=0 // pred_check_branch
    %26 = sbr.rel (0) target = $region25
  $region24: #{tracknet_v2_rnn_forward.1} parent=0 // pred_region
    _
  $region25: #{tracknet_v2_rnn_forward.1} parent=0 // pred_fallthru
    _
  // Predicated region
  $region26: #{tracknet_v2_rnn_forward.1} parent=0 // pred_check
    _
  $region27: #{tracknet_v2_rnn_forward.1} parent=0 // pred_check_branch
    %28 = sbr.rel (0) target = $region29
  $region28: #{tracknet_v2_rnn_forward.1} parent=0 // pred_region
    _
  $region29: #{tracknet_v2_rnn_forward.1} parent=0 // pred_fallthru
    _
  // Predicated region
  $region30: #{tracknet_v2_rnn_forward.1} parent=0 // pred_check
    _
  $region31: #{tracknet_v2_rnn_forward.1} parent=0 // pred_check_branch
    %30 = sbr.rel (0) target = $region33
  $region32: #{tracknet_v2_rnn_forward.1} parent=0 // pred_region
    _
  $region33: #{tracknet_v2_rnn_forward.1} parent=0 // pred_fallthru
    _
  // Predicated region
  $region34: #{tracknet_v2_rnn_forward.1} parent=0 // pred_check
    _
  $region35: #{tracknet_v2_rnn_forward.1} parent=0 // pred_check_branch
    %32 = sbr.rel (0) target = $region37
  $region36: #{tracknet_v2_rnn_forward.1} parent=0 // pred_region
    _
  $region37: #{tracknet_v2_rnn_forward.1} parent=0 // pred_fallthru
    _
  // Predicated region
  $region38: #{tracknet_v2_rnn_forward.1} parent=0 // pred_check
    _
  $region39: #{tracknet_v2_rnn_forward.1} parent=0 // pred_check_branch
    %34 = sbr.rel (0) target = $region41
  $region40: #{tracknet_v2_rnn_forward.1} parent=0 // pred_region
    _
  $region41: #{tracknet_v2_rnn_forward.1} parent=0 // pred_fallthru
    _
  %p35 = scmp.eq.s32.totalorder 0, 0
  // Predicated region
  $region42: #{tracknet_v2_rnn_forward.1} parent=0 // pred_check
    %p36 = pneg %p35
  $region43: #{tracknet_v2_rnn_forward.1} parent=0 // pred_check_branch
    %38 = sbr.rel (%p36) target = $region45
  $region44: #{tracknet_v2_rnn_forward.1} parent=0 // pred_region
    %vm39 = vcmask 261120
    %40 = vst.msk [vmem:[#allocation2] sm:$0xff] %vm39, 0.0
    %41 = vst.msk [vmem:[#allocation3] sm:$0xff] %vm39, 0.0
  $region45: #{tracknet_v2_rnn_forward.1} parent=0 // pred_fallthru
    _
  %v42 = vld [vmem:[%s0] sm:$0xff]
  %v43 = vld [vmem:[%s0 + $0x8] sm:$0xff]
  %v44 = vld [vmem:[%s0 + $0x10] sm:$0xff]
  %v45 = vld [vmem:[%s0 + $0x18] sm:$0xff]
  %v46 = vld [vmem:[%s0 + $0x20] sm:$0xff]
  %v47 = vld [vmem:[%s0 + $0x28] sm:$0xff]
  %v48 = vld [vmem:[%s0 + $0x30] sm:$0xff]
  %v49 = vld [vmem:[%s0 + $0x38] sm:$0xff]
  %v50 = vld [vmem:[%s2] sm:$0xf]
  %v51 = vld [vmem:[%s3] sm:$0x1]
  %v53 = vlaneseq
  %v54 = vshrl.u32 %v53, 7
  %v55 = vsub.s32 0, %v54
  %v56 = vrot.slane %v51, %v55
  %vm58 = vcmask 31744
  %v60 = vsel %vm58, %v42, 0
  %v63 = vsel %vm58, %v43, 0
  %v66 = vsel %vm58, %v44, 0
  %v69 = vsel %vm58, %v45, 0
  %v72 = vsel %vm58, %v46, 0
  %v75 = vsel %vm58, %v47, 0
  %v78 = vsel %vm58, %v48, 0
  %v81 = vsel %vm58, %v49, 0
  %vm83 = vcmask 1043456
  %v85 = vsel %vm83, %v50, 0
  %87 = vmatprep.subr.mxu0 0.0
  %88 = vmatpush1.msra.mxu0 %v85
  %89 = vmatprep.subr.mxu0 0.0
  %90 = vmatpush1.msra.mxu0 0.0
  %91 = vmatprep.subr.mxu0 0.0
  %92 = vmatpush1.msra.mxu0 0.0
  %93 = vmatprep.subr.mxu0 0.0
  %94 = vmatpush1.msra.mxu0 0.0
  %95 = vmatprep.subr.mxu0 0.0
  %96 = vmatpush1.msra.mxu0 0.0
  %97 = vmatprep.subr.mxu0 0.0
  %98 = vmatpush1.msra.mxu0 0.0
  %99 = vmatprep.subr.mxu0 0.0
  %100 = vmatpush1.msra.mxu0 0.0
  %101 = vmatprep.subr.mxu0 0.0
  %102 = vmatpush1.msra.mxu0 0.0
  %103 = vmatprep.subr.mxu0 0.0
  %104 = vmatpush1.msra.mxu0 0.0
  %105 = vmatprep.subr.mxu0 0.0
  %106 = vmatpush1.msra.mxu0 0.0
  %107 = vmatprep.subr.mxu0 0.0
  %108 = vmatpush1.msra.mxu0 0.0
  %109 = vmatprep.subr.mxu0 0.0
  %110 = vmatpush1.msra.mxu0 0.0
  %111 = vmatprep.subr.mxu0 0.0
  %112 = vmatpush1.msra.mxu0 0.0
  %113 = vmatprep.subr.mxu0 0.0
  %114 = vmatpush1.msra.mxu0 0.0
  %115 = vmatprep.subr.mxu0 0.0
  %116 = vmatpush1.msra.mxu0 0.0
  %117 = vmatprep.subr.mxu0 0.0
  %118 = vmatpush1.msra.mxu0 0.0
  %119 = vmatprep.subr.mxu0 0.0
  %120 = vmatpush1.msra.mxu0 0.0
  %121 = vmatprep.subr.mxu0 0.0
  %122 = vmatpush1.msra.mxu0 0.0
  %123 = vmatprep.subr.mxu0 0.0
  %124 = vmatpush1.msra.mxu0 0.0
  %125 = vmatprep.subr.mxu0 0.0
  %126 = vmatpush1.msra.mxu0 0.0
  %127 = vmatprep.subr.mxu0 0.0
  %128 = vmatpush1.msra.mxu0 0.0
  %129 = vmatprep.subr.mxu0 0.0
  %130 = vmatpush1.msra.mxu0 0.0
  %131 = vmatprep.subr.mxu0 0.0
  %132 = vmatpush1.msra.mxu0 0.0
  %133 = vmatprep.subr.mxu0 0.0
  %134 = vmatpush1.msra.mxu0 0.0
  %135 = vmatprep.subr.mxu0 0.0
  %136 = vmatpush1.msra.mxu0 0.0
  %137 = vmatprep.subr.mxu0 0.0
  %138 = vmatpush1.msra.mxu0 0.0
  %139 = vmatprep.subr.mxu0 0.0
  %140 = vmatpush1.msra.mxu0 0.0
  %141 = vmatprep.subr.mxu0 0.0
  %142 = vmatpush1.msra.mxu0 0.0
  %143 = vmatprep.subr.mxu0 0.0
  %144 = vmatpush1.msra.mxu0 0.0
  %145 = vmatprep.subr.mxu0 0.0
  %146 = vmatpush1.msra.mxu0 0.0
  %147 = vmatprep.subr.mxu0 0.0
  %148 = vmatpush1.msra.mxu0 0.0
  %149 = vmatprep.subr.mxu0 0.0
  %150 = vmatpush1.msra.mxu0 0.0
  %151 = vmatprep.mubr.f32.mxu0 0.0
  %152 = vmatmul.mubr.f32.gmra.mrb[0].mxu0 %v60
  %v153 = vpop.f32.mrb[0].mxu0
  %v154 = vadd.f32 %v56, %v153
  %v155 = vpop.f32.mrb[0].mxu0
  %156 = vmatprep.mubr.f32.mxu0 0.0
  %157 = vmatmul.mubr.f32.gmra.mrb[0].mxu0 %v63
  %v158 = vpop.f32.mrb[0].mxu0
  %v159 = vadd.f32 %v56, %v158
  %v160 = vpop.f32.mrb[0].mxu0
  %161 = vmatprep.mubr.f32.mxu0 0.0
  %162 = vmatmul.mubr.f32.gmra.mrb[0].mxu0 %v66
  %v163 = vpop.f32.mrb[0].mxu0
  %v164 = vadd.f32 %v56, %v163
  %v165 = vpop.f32.mrb[0].mxu0
  %166 = vmatprep.mubr.f32.mxu0 0.0
  %167 = vmatmul.mubr.f32.gmra.mrb[0].mxu0 %v69
  %v168 = vpop.f32.mrb[0].mxu0
  %v169 = vadd.f32 %v56, %v168
  %v170 = vpop.f32.mrb[0].mxu0
  %171 = vmatprep.mubr.f32.mxu0 0.0
  %172 = vmatmul.mubr.f32.gmra.mrb[0].mxu0 %v72
  %v173 = vpop.f32.mrb[0].mxu0
  %v174 = vadd.f32 %v56, %v173
  %v175 = vpop.f32.mrb[0].mxu0
  %176 = vmatprep.mubr.f32.mxu0 0.0
  %177 = vmatmul.mubr.f32.gmra.mrb[0].mxu0 %v75
  %v178 = vpop.f32.mrb[0].mxu0
  %v179 = vadd.f32 %v56, %v178
  %v180 = vpop.f32.mrb[0].mxu0
  %181 = vmatprep.mubr.f32.mxu0 0.0
  %182 = vmatmul.mubr.f32.gmra.mrb[0].mxu0 %v78
  %v183 = vpop.f32.mrb[0].mxu0
  %v184 = vadd.f32 %v56, %v183
  %v185 = vpop.f32.mrb[0].mxu0
  %186 = vmatprep.mubr.f32.mxu0 0.0
  %187 = vmatmul.mubr.f32.gmra.mrb[0].mxu0 %v81
  %v188 = vpop.f32.mrb[0].mxu0
  %v189 = vadd.f32 %v56, %v188
  %v190 = vpop.f32.mrb[0].mxu0
  %191 = vdwg.mxu0
  %vm192 = vcmask 785408
  %193 = vst.msk [vmem:[#allocation4] sm:$0xff] %vm192, %v154
  %194 = vst.msk [vmem:[#allocation4 + $0x8] sm:$0xff] %vm192, %v159
  %195 = vst.msk [vmem:[#allocation4 + $0x10] sm:$0xff] %vm192, %v164
  %196 = vst.msk [vmem:[#allocation4 + $0x18] sm:$0xff] %vm192, %v169
  %197 = vst.msk [vmem:[#allocation4 + $0x20] sm:$0xff] %vm192, %v174
  %198 = vst.msk [vmem:[#allocation4 + $0x28] sm:$0xff] %vm192, %v179
  %199 = vst.msk [vmem:[#allocation4 + $0x30] sm:$0xff] %vm192, %v184
  %200 = vst.msk [vmem:[#allocation4 + $0x38] sm:$0xff] %vm192, %v189
  %v201 = vld [vmem:[%s4] sm:$0xff]
  %v202 = vld [vmem:[%s4 + $0x8] sm:$0xff]
  %v203 = vld [vmem:[%s4 + $0x10] sm:$0xff]
  %v204 = vld [vmem:[%s4 + $0x18] sm:$0xff]
  %v205 = vld [vmem:[%s5] sm:$0x1]
  %v206 = vld [vmem:[%s6] sm:$0xff]
  %v207 = vld [vmem:[%s6 + $0x8] sm:$0xff]
  %v208 = vld [vmem:[%s6 + $0x10] sm:$0xff]
  %v209 = vld [vmem:[%s6 + $0x18] sm:$0xff]
  %v210 = vld [vmem:[%s6 + $0x20] sm:$0xff]
  %v211 = vld [vmem:[%s6 + $0x28] sm:$0xff]
  %v212 = vld [vmem:[%s6 + $0x30] sm:$0xff]
  %v213 = vld [vmem:[%s6 + $0x38] sm:$0xff]
  %v214 = vld [vmem:[%s7] sm:$0x1]
  %v215 = vld [vmem:[#allocation2] sm:$0xff]
  %v216 = vld [vmem:[#allocation3] sm:$0xff]
  %v217 = vld [vmem:[#allocation4] sm:$0xff]
  %v219 = vlaneseq
  %v220 = vshrl.u32 %v219, 7
  %v221 = vsub.s32 0, %v220
  %v222 = vrot.slane %v205, %v221
  %vm224 = vcmask 261120
  %v226 = vsel %vm224, %v215, 0
  %228 = vmatprep.subr.mxu0 0.0
  %229 = vmatpush1.msra.mxu0 %v201
  %230 = vmatprep.subr.mxu0 0.0
  %231 = vmatpush1.msra.mxu0 %v202
  %232 = vmatprep.subr.mxu0 0.0
  %233 = vmatpush1.msra.mxu0 %v203
  %234 = vmatprep.subr.mxu0 0.0
  %235 = vmatpush1.msra.mxu0 %v204
  %236 = vmatprep.subr.mxu0 0.0
  %237 = vmatpush1.msra.mxu0 0.0
  %238 = vmatprep.subr.mxu0 0.0
  %239 = vmatpush1.msra.mxu0 0.0
  %240 = vmatprep.subr.mxu0 0.0
  %241 = vmatpush1.msra.mxu0 0.0
  %242 = vmatprep.subr.mxu0 0.0
  %243 = vmatpush1.msra.mxu0 0.0
  %244 = vmatprep.subr.mxu0 0.0
  %245 = vmatpush1.msra.mxu0 0.0
  %246 = vmatprep.subr.mxu0 0.0
  %247 = vmatpush1.msra.mxu0 0.0
  %248 = vmatprep.subr.mxu0 0.0
  %249 = vmatpush1.msra.mxu0 0.0
  %250 = vmatprep.subr.mxu0 0.0
  %251 = vmatpush1.msra.mxu0 0.0
  %252 = vmatprep.subr.mxu0 0.0
  %253 = vmatpush1.msra.mxu0 0.0
  %254 = vmatprep.subr.mxu0 0.0
  %255 = vmatpush1.msra.mxu0 0.0
  %256 = vmatprep.subr.mxu0 0.0
  %257 = vmatpush1.msra.mxu0 0.0
  %258 = vmatprep.subr.mxu0 0.0
  %259 = vmatpush1.msra.mxu0 0.0
  %260 = vmatprep.subr.mxu0 0.0
  %261 = vmatpush1.msra.mxu0 0.0
  %262 = vmatprep.subr.mxu0 0.0
  %263 = vmatpush1.msra.mxu0 0.0
  %264 = vmatprep.subr.mxu0 0.0
  %265 = vmatpush1.msra.mxu0 0.0
  %266 = vmatprep.subr.mxu0 0.0
  %267 = vmatpush1.msra.mxu0 0.0
  %268 = vmatprep.subr.mxu0 0.0
  %269 = vmatpush1.msra.mxu0 0.0
  %270 = vmatprep.subr.mxu0 0.0
  %271 = vmatpush1.msra.mxu0 0.0
  %272 = vmatprep.subr.mxu0 0.0
  %273 = vmatpush1.msra.mxu0 0.0
  %274 = vmatprep.subr.mxu0 0.0
  %275 = vmatpush1.msra.mxu0 0.0
  %276 = vmatprep.subr.mxu0 0.0
  %277 = vmatpush1.msra.mxu0 0.0
  %278 = vmatprep.subr.mxu0 0.0
  %279 = vmatpush1.msra.mxu0 0.0
  %280 = vmatprep.subr.mxu0 0.0
  %281 = vmatpush1.msra.mxu0 0.0
  %282 = vmatprep.subr.mxu0 0.0
  %283 = vmatpush1.msra.mxu0 0.0
  %284 = vmatprep.subr.mxu0 0.0
  %285 = vmatpush1.msra.mxu0 0.0
  %286 = vmatprep.subr.mxu0 0.0
  %287 = vmatpush1.msra.mxu0 0.0
  %288 = vmatprep.subr.mxu0 0.0
  %289 = vmatpush1.msra.mxu0 0.0
  %290 = vmatprep.subr.mxu0 0.0
  %291 = vmatpush1.msra.mxu0 0.0
  %292 = vmatprep.mubr.f32.mxu0 0.0
  %293 = vmatmul.mubr.f32.gmra.mrb[0].mxu0 %v226
  %v294 = vpop.f32.mrb[0].mxu0
  %v295 = vadd.f32 %v222, %v294
  %v296 = vpop.f32.mrb[0].mxu0
  %297 = vdwg.mxu0
  %v298 = vadd.f32 %v217, %v295
  %v299 = vxor.u32 %v298, 2147483648
  %v300 = vmul.f32 %v299, 1.442695
  %v301 = vpow.pop %v300
  %v302 = vadd.f32 %v301, 1.0
  %v303 = vrcp.pop %v302
  %v304 = vmul.f32 1.0, %v303
  %306 = vrot.lane.b32.xlu0 %v295, 64
  %v307 = vpop.permute.xlu0 %306
  %v309 = vmul.f32 %v304, %v307
  %311 = vrot.lane.b32.xlu0 %v309, 64
  %v312 = vpop.permute.xlu0 %311
  %v314 = vadd.f32 %v217, %v312
  %v315 = vtanh.pop %v314
  %v316 = vsub.f32 1.0, %v304
  %318 = vrot.lane.b32.xlu0 %v315, 96
  %v319 = vpop.permute.xlu0 %318
  %v321 = vmul.f32 %v316, %v319
  %322 = vrot.lane.b32.xlu0 %v215, 32
  %v323 = vpop.permute.xlu0 %322
  %v325 = vmul.f32 %v304, %v323
  %v326 = vadd.f32 %v321, %v325
  %328 = vrot.lane.b32.xlu0 %v326, 96
  %v329 = vpop.permute.xlu0 %328
  %332 = vrot.lane.b32.xlu0 %v216, 32
  %v333 = vpop.permute.xlu0 %332
  %v335 = vsel %vm224, %v329, %v333
  %v337 = vlaneseq
  %v338 = vshrl.u32 %v337, 7
  %v339 = vsub.s32 0, %v338
  %v340 = vrot.slane %v214, %v339
  %vm342 = vcmask 523264
  %v344 = vsel %vm342, %v335, 0
  %346 = vmatprep.subr.mxu0 0.0
  %347 = vmatpush1.msra.mxu0 %v206
  %348 = vmatprep.subr.mxu0 0.0
  %349 = vmatpush1.msra.mxu0 %v207
  %350 = vmatprep.subr.mxu0 0.0
  %351 = vmatpush1.msra.mxu0 %v208
  %352 = vmatprep.subr.mxu0 0.0
  %353 = vmatpush1.msra.mxu0 %v209
  %354 = vmatprep.subr.mxu0 0.0
  %355 = vmatpush1.msra.mxu0 %v210
  %356 = vmatprep.subr.mxu0 0.0
  %357 = vmatpush1.msra.mxu0 %v211
  %358 = vmatprep.subr.mxu0 0.0
  %359 = vmatpush1.msra.mxu0 %v212
  %360 = vmatprep.subr.mxu0 0.0
  %361 = vmatpush1.msra.mxu0 %v213
  %362 = vmatprep.subr.mxu0 0.0
  %363 = vmatpush1.msra.mxu0 0.0
  %364 = vmatprep.subr.mxu0 0.0
  %365 = vmatpush1.msra.mxu0 0.0
  %366 = vmatprep.subr.mxu0 0.0
  %367 = vmatpush1.msra.mxu0 0.0
  %368 = vmatprep.subr.mxu0 0.0
  %369 = vmatpush1.msra.mxu0 0.0
  %370 = vmatprep.subr.mxu0 0.0
  %371 = vmatpush1.msra.mxu0 0.0
  %372 = vmatprep.subr.mxu0 0.0
  %373 = vmatpush1.msra.mxu0 0.0
  %374 = vmatprep.subr.mxu0 0.0
  %375 = vmatpush1.msra.mxu0 0.0
  %376 = vmatprep.subr.mxu0 0.0
  %377 = vmatpush1.msra.mxu0 0.0
  %378 = vmatprep.subr.mxu0 0.0
  %379 = vmatpush1.msra.mxu0 0.0
  %380 = vmatprep.subr.mxu0 0.0
  %381 = vmatpush1.msra.mxu0 0.0
  %382 = vmatprep.subr.mxu0 0.0
  %383 = vmatpush1.msra.mxu0 0.0
  %384 = vmatprep.subr.mxu0 0.0
  %385 = vmatpush1.msra.mxu0 0.0
  %386 = vmatprep.subr.mxu0 0.0
  %387 = vmatpush1.msra.mxu0 0.0
  %388 = vmatprep.subr.mxu0 0.0
  %389 = vmatpush1.msra.mxu0 0.0
  %390 = vmatprep.subr.mxu0 0.0
  %391 = vmatpush1.msra.mxu0 0.0
  %392 = vmatprep.subr.mxu0 0.0
  %393 = vmatpush1.msra.mxu0 0.0
  %394 = vmatprep.subr.mxu0 0.0
  %395 = vmatpush1.msra.mxu0 0.0
  %396 = vmatprep.subr.mxu0 0.0
  %397 = vmatpush1.msra.mxu0 0.0
  %398 = vmatprep.subr.mxu0 0.0
  %399 = vmatpush1.msra.mxu0 0.0
  %400 = vmatprep.subr.mxu0 0.0
  %401 = vmatpush1.msra.mxu0 0.0
  %402 = vmatprep.subr.mxu0 0.0
  %403 = vmatpush1.msra.mxu0 0.0
  %404 = vmatprep.subr.mxu0 0.0
  %405 = vmatpush1.msra.mxu0 0.0
  %406 = vmatprep.subr.mxu0 0.0
  %407 = vmatpush1.msra.mxu0 0.0
  %408 = vmatprep.subr.mxu0 0.0
  %409 = vmatpush1.msra.mxu0 0.0
  %410 = vmatprep.mubr.f32.mxu0 0.0
  %411 = vmatmul.mubr.f32.gmra.mrb[0].mxu0 %v344
  %v412 = vpop.f32.mrb[0].mxu0
  %v413 = vadd.f32 %v340, %v412
  %v414 = vpop.f32.mrb[0].mxu0
  %415 = vdwg.mxu0
  %v416 = vxor.u32 %v413, 2147483648
  %v417 = vmul.f32 %v416, 1.442695
  %v418 = vpow.pop %v417
  %v419 = vadd.f32 %v418, 1.0
  %v420 = vrcp.pop %v419
  %v421 = vmul.f32 1.0, %v420
  %423 = vrot.lane.b32.xlu0 %v413, 32
  %v424 = vpop.permute.xlu0 %423
  %v426 = vmul.f32 %v421, %v424
  %428 = vrot.lane.b32.xlu0 %v426, 64
  %v429 = vpop.permute.xlu0 %428
  %v431 = vadd.f32 %v413, %v429
  %v432 = vtanh.pop %v431
  %v433 = vsub.f32 1.0, %v421
  %435 = vrot.lane.b32.xlu0 %v432, 96
  %v436 = vpop.permute.xlu0 %435
  %v438 = vmul.f32 %v433, %v436
  %v439 = vmul.f32 %v421, %v333
  %v440 = vadd.f32 %v438, %v439
  %442 = vrot.lane.b32.xlu0 %v440, 96
  %v443 = vpop.permute.xlu0 %442
  %445 = vst.msk [vmem:[#allocation5] sm:$0xff] %vm224, %v443
  %s446 = scalar_lea.vmem [#allocation4], 8
  %v447 = vld [vmem:[%s446] sm:$0xff]
  %v448 = vsel %vm224, %v329, 0
  %450 = vmatprep.subr.mxu0 0.0
  %451 = vmatpush1.msra.mxu0 %v201
  %452 = vmatprep.subr.mxu0 0.0
  %453 = vmatpush1.msra.mxu0 %v202
  %454 = vmatprep.subr.mxu0 0.0
  %455 = vmatpush1.msra.mxu0 %v203
  %456 = vmatprep.subr.mxu0 0.0
  %457 = vmatpush1.msra.mxu0 %v204
  %458 = vmatprep.subr.mxu0 0.0
  %459 = vmatpush1.msra.mxu0 0.0
  %460 = vmatprep.subr.mxu0 0.0
  %461 = vmatpush1.msra.mxu0 0.0
  %462 = vmatprep.subr.mxu0 0.0
  %463 = vmatpush1.msra.mxu0 0.0
  %464 = vmatprep.subr.mxu0 0.0
  %465 = vmatpush1.msra.mxu0 0.0
  %466 = vmatprep.subr.mxu0 0.0
  %467 = vmatpush1.msra.mxu0 0.0
  %468 = vmatprep.subr.mxu0 0.0
  %469 = vmatpush1.msra.mxu0 0.0
  %470 = vmatprep.subr.mxu0 0.0
  %471 = vmatpush1.msra.mxu0 0.0
  %472 = vmatprep.subr.mxu0 0.0
  %473 = vmatpush1.msra.mxu0 0.0
  %474 = vmatprep.subr.mxu0 0.0
  %475 = vmatpush1.msra.mxu0 0.0
  %476 = vmatprep.subr.mxu0 0.0
  %477 = vmatpush1.msra.mxu0 0.0
  %478 = vmatprep.subr.mxu0 0.0
  %479 = vmatpush1.msra.mxu0 0.0
  %480 = vmatprep.subr.mxu0 0.0
  %481 = vmatpush1.msra.mxu0 0.0
  %482 = vmatprep.subr.mxu0 0.0
  %483 = vmatpush1.msra.mxu0 0.0
  %484 = vmatprep.subr.mxu0 0.0
  %485 = vmatpush1.msra.mxu0 0.0
  %486 = vmatprep.subr.mxu0 0.0
  %487 = vmatpush1.msra.mxu0 0.0
  %488 = vmatprep.subr.mxu0 0.0
  %489 = vmatpush1.msra.mxu0 0.0
  %490 = vmatprep.subr.mxu0 0.0
  %491 = vmatpush1.msra.mxu0 0.0
  %492 = vmatprep.subr.mxu0 0.0
  %493 = vmatpush1.msra.mxu0 0.0
  %494 = vmatprep.subr.mxu0 0.0
  %495 = vmatpush1.msra.mxu0 0.0
  %496 = vmatprep.subr.mxu0 0.0
  %497 = vmatpush1.msra.mxu0 0.0
  %498 = vmatprep.subr.mxu0 0.0
  %499 = vmatpush1.msra.mxu0 0.0
  %500 = vmatprep.subr.mxu0 0.0
  %501 = vmatpush1.msra.mxu0 0.0
  %502 = vmatprep.subr.mxu0 0.0
  %503 = vmatpush1.msra.mxu0 0.0
  %504 = vmatprep.subr.mxu0 0.0
  %505 = vmatpush1.msra.mxu0 0.0
  %506 = vmatprep.subr.mxu0 0.0
  %507 = vmatpush1.msra.mxu0 0.0
  %508 = vmatprep.subr.mxu0 0.0
  %509 = vmatpush1.msra.mxu0 0.0
  %510 = vmatprep.subr.mxu0 0.0
  %511 = vmatpush1.msra.mxu0 0.0
  %512 = vmatprep.subr.mxu0 0.0
  %513 = vmatpush1.msra.mxu0 0.0
  %514 = vmatprep.mubr.f32.mxu0 0.0
  %515 = vmatmul.mubr.f32.gmra.mrb[0].mxu0 %v448
  %v516 = vpop.f32.mrb[0].mxu0
  %v517 = vadd.f32 %v222, %v516
  %v518 = vpop.f32.mrb[0].mxu0
  %519 = vdwg.mxu0
  %v520 = vadd.f32 %v447, %v517
  %v521 = vxor.u32 %v520, 2147483648
  %v522 = vmul.f32 %v521, 1.442695
  %v523 = vpow.pop %v522
  %v524 = vadd.f32 %v523, 1.0
  %v525 = vrcp.pop %v524
  %v526 = vmul.f32 1.0, %v525
  %528 = vrot.lane.b32.xlu0 %v517, 64
  %v529 = vpop.permute.xlu0 %528
  %v531 = vmul.f32 %v526, %v529
  %533 = vrot.lane.b32.xlu0 %v531, 64
  %v534 = vpop.permute.xlu0 %533
  %v536 = vadd.f32 %v447, %v534
  %v537 = vtanh.pop %v536
  %v538 = vsub.f32 1.0, %v526
  %540 = vrot.lane.b32.xlu0 %v537, 96
  %v541 = vpop.permute.xlu0 %540
  %v543 = vmul.f32 %v538, %v541
  %v544 = vmul.f32 %v526, %v326
  %v545 = vadd.f32 %v543, %v544
  %547 = vrot.lane.b32.xlu0 %v545, 96
  %v548 = vpop.permute.xlu0 %547
  %v550 = vsel %vm224, %v548, %v440
  %v552 = vsel %vm342, %v550, 0
  %554 = vmatprep.subr.mxu0 0.0
  %555 = vmatpush1.msra.mxu0 %v206
  %556 = vmatprep.subr.mxu0 0.0
  %557 = vmatpush1.msra.mxu0 %v207
  %558 = vmatprep.subr.mxu0 0.0
  %559 = vmatpush1.msra.mxu0 %v208
  %560 = vmatprep.subr.mxu0 0.0
  %561 = vmatpush1.msra.mxu0 %v209
  %562 = vmatprep.subr.mxu0 0.0
  %563 = vmatpush1.msra.mxu0 %v210
  %564 = vmatprep.subr.mxu0 0.0
  %565 = vmatpush1.msra.mxu0 %v211
  %566 = vmatprep.subr.mxu0 0.0
  %567 = vmatpush1.msra.mxu0 %v212
  %568 = vmatprep.subr.mxu0 0.0
  %569 = vmatpush1.msra.mxu0 %v213
  %570 = vmatprep.subr.mxu0 0.0
  %571 = vmatpush1.msra.mxu0 0.0
  %572 = vmatprep.subr.mxu0 0.0
  %573 = vmatpush1.msra.mxu0 0.0
  %574 = vmatprep.subr.mxu0 0.0
  %575 = vmatpush1.msra.mxu0 0.0
  %576 = vmatprep.subr.mxu0 0.0
  %577 = vmatpush1.msra.mxu0 0.0
  %578 = vmatprep.subr.mxu0 0.0
  %579 = vmatpush1.msra.mxu0 0.0
  %580 = vmatprep.subr.mxu0 0.0
  %581 = vmatpush1.msra.mxu0 0.0
  %582 = vmatprep.subr.mxu0 0.0
  %583 = vmatpush1.msra.mxu0 0.0
  %584 = vmatprep.subr.mxu0 0.0
  %585 = vmatpush1.msra.mxu0 0.0
  %586 = vmatprep.subr.mxu0 0.0
  %587 = vmatpush1.msra.mxu0 0.0
  %588 = vmatprep.subr.mxu0 0.0
  %589 = vmatpush1.msra.mxu0 0.0
  %590 = vmatprep.subr.mxu0 0.0
  %591 = vmatpush1.msra.mxu0 0.0
  %592 = vmatprep.subr.mxu0 0.0
  %593 = vmatpush1.msra.mxu0 0.0
  %594 = vmatprep.subr.mxu0 0.0
  %595 = vmatpush1.msra.mxu0 0.0
  %596 = vmatprep.subr.mxu0 0.0
  %597 = vmatpush1.msra.mxu0 0.0
  %598 = vmatprep.subr.mxu0 0.0
  %599 = vmatpush1.msra.mxu0 0.0
  %600 = vmatprep.subr.mxu0 0.0
  %601 = vmatpush1.msra.mxu0 0.0
  %602 = vmatprep.subr.mxu0 0.0
  %603 = vmatpush1.msra.mxu0 0.0
  %604 = vmatprep.subr.mxu0 0.0
  %605 = vmatpush1.msra.mxu0 0.0
  %606 = vmatprep.subr.mxu0 0.0
  %607 = vmatpush1.msra.mxu0 0.0
  %608 = vmatprep.subr.mxu0 0.0
  %609 = vmatpush1.msra.mxu0 0.0
  %610 = vmatprep.subr.mxu0 0.0
  %611 = vmatpush1.msra.mxu0 0.0
  %612 = vmatprep.subr.mxu0 0.0
  %613 = vmatpush1.msra.mxu0 0.0
  %614 = vmatprep.subr.mxu0 0.0
  %615 = vmatpush1.msra.mxu0 0.0
  %616 = vmatprep.subr.mxu0 0.0
  %617 = vmatpush1.msra.mxu0 0.0
  %618 = vmatprep.mubr.f32.mxu0 0.0
  %619 = vmatmul.mubr.f32.gmra.mrb[0].mxu0 %v552
  %v620 = vpop.f32.mrb[0].mxu0
  %v621 = vadd.f32 %v340, %v620
  %v622 = vpop.f32.mrb[0].mxu0
  %623 = vdwg.mxu0
  %v624 = vxor.u32 %v621, 2147483648
  %v625 = vmul.f32 %v624, 1.442695
  %v626 = vpow.pop %v625
  %v627 = vadd.f32 %v626, 1.0
  %v628 = vrcp.pop %v627
  %v629 = vmul.f32 1.0, %v628
  %631 = vrot.lane.b32.xlu0 %v621, 32
  %v632 = vpop.permute.xlu0 %631
  %v634 = vmul.f32 %v629, %v632
  %636 = vrot.lane.b32.xlu0 %v634, 64
  %v637 = vpop.permute.xlu0 %636
  %v639 = vadd.f32 %v621, %v637
  %v640 = vtanh.pop %v639
  %v641 = vsub.f32 1.0, %v629
  %643 = vrot.lane.b32.xlu0 %v640, 96
  %v644 = vpop.permute.xlu0 %643
  %v646 = vmul.f32 %v641, %v644
  %v647 = vmul.f32 %v629, %v440
  %v648 = vadd.f32 %v646, %v647
  %650 = vrot.lane.b32.xlu0 %v648, 96
  %v651 = vpop.permute.xlu0 %650
  %s653 = scalar_lea.vmem [#allocation5], 8
  %654 = vst.msk [vmem:[%s653] sm:$0xff] %vm224, %v651
  %s655 = scalar_lea.vmem [#allocation4], 16
  %v656 = vld [vmem:[%s655] sm:$0xff]
  %v657 = vsel %vm224, %v548, 0
  %659 = vmatprep.subr.mxu0 0.0
  %660 = vmatpush1.msra.mxu0 %v201
  %661 = vmatprep.subr.mxu0 0.0
  %662 = vmatpush1.msra.mxu0 %v202
  %663 = vmatprep.subr.mxu0 0.0
  %664 = vmatpush1.msra.mxu0 %v203
  %665 = vmatprep.subr.mxu0 0.0
  %666 = vmatpush1.msra.mxu0 %v204
  %667 = vmatprep.subr.mxu0 0.0
  %668 = vmatpush1.msra.mxu0 0.0
  %669 = vmatprep.subr.mxu0 0.0
  %670 = vmatpush1.msra.mxu0 0.0
  %671 = vmatprep.subr.mxu0 0.0
  %672 = vmatpush1.msra.mxu0 0.0
  %673 = vmatprep.subr.mxu0 0.0
  %674 = vmatpush1.msra.mxu0 0.0
  %675 = vmatprep.subr.mxu0 0.0
  %676 = vmatpush1.msra.mxu0 0.0
  %677 = vmatprep.subr.mxu0 0.0
  %678 = vmatpush1.msra.mxu0 0.0
  %679 = vmatprep.subr.mxu0 0.0
  %680 = vmatpush1.msra.mxu0 0.0
  %681 = vmatprep.subr.mxu0 0.0
  %682 = vmatpush1.msra.mxu0 0.0
  %683 = vmatprep.subr.mxu0 0.0
  %684 = vmatpush1.msra.mxu0 0.0
  %685 = vmatprep.subr.mxu0 0.0
  %686 = vmatpush1.msra.mxu0 0.0
  %687 = vmatprep.subr.mxu0 0.0
  %688 = vmatpush1.msra.mxu0 0.0
  %689 = vmatprep.subr.mxu0 0.0
  %690 = vmatpush1.msra.mxu0 0.0
  %691 = vmatprep.subr.mxu0 0.0
  %692 = vmatpush1.msra.mxu0 0.0
  %693 = vmatprep.subr.mxu0 0.0
  %694 = vmatpush1.msra.mxu0 0.0
  %695 = vmatprep.subr.mxu0 0.0
  %696 = vmatpush1.msra.mxu0 0.0
  %697 = vmatprep.subr.mxu0 0.0
  %698 = vmatpush1.msra.mxu0 0.0
  %699 = vmatprep.subr.mxu0 0.0
  %700 = vmatpush1.msra.mxu0 0.0
  %701 = vmatprep.subr.mxu0 0.0
  %702 = vmatpush1.msra.mxu0 0.0
  %703 = vmatprep.subr.mxu0 0.0
  %704 = vmatpush1.msra.mxu0 0.0
  %705 = vmatprep.subr.mxu0 0.0
  %706 = vmatpush1.msra.mxu0 0.0
  %707 = vmatprep.subr.mxu0 0.0
  %708 = vmatpush1.msra.mxu0 0.0
  %709 = vmatprep.subr.mxu0 0.0
  %710 = vmatpush1.msra.mxu0 0.0
  %711 = vmatprep.subr.mxu0 0.0
  %712 = vmatpush1.msra.mxu0 0.0
  %713 = vmatprep.subr.mxu0 0.0
  %714 = vmatpush1.msra.mxu0 0.0
  %715 = vmatprep.subr.mxu0 0.0
  %716 = vmatpush1.msra.mxu0 0.0
  %717 = vmatprep.subr.mxu0 0.0
  %718 = vmatpush1.msra.mxu0 0.0
  %719 = vmatprep.subr.mxu0 0.0
  %720 = vmatpush1.msra.mxu0 0.0
  %721 = vmatprep.subr.mxu0 0.0
  %722 = vmatpush1.msra.mxu0 0.0
  %723 = vmatprep.mubr.f32.mxu0 0.0
  %724 = vmatmul.mubr.f32.gmra.mrb[0].mxu0 %v657
  %v725 = vpop.f32.mrb[0].mxu0
  %v726 = vadd.f32 %v222, %v725
  %v727 = vpop.f32.mrb[0].mxu0
  %728 = vdwg.mxu0
  %v729 = vadd.f32 %v656, %v726
  %v730 = vxor.u32 %v729, 2147483648
  %v731 = vmul.f32 %v730, 1.442695
  %v732 = vpow.pop %v731
  %v733 = vadd.f32 %v732, 1.0
  %v734 = vrcp.pop %v733
  %v735 = vmul.f32 1.0, %v734
  %737 = vrot.lane.b32.xlu0 %v726, 64
  %v738 = vpop.permute.xlu0 %737
  %v740 = vmul.f32 %v735, %v738
  %742 = vrot.lane.b32.xlu0 %v740, 64
  %v743 = vpop.permute.xlu0 %742
  %v745 = vadd.f32 %v656, %v743
  %v746 = vtanh.pop %v745
  %v747 = vsub.f32 1.0, %v735
  %749 = vrot.lane.b32.xlu0 %v746, 96
  %v750 = vpop.permute.xlu0 %749
  %v752 = vmul.f32 %v747, %v750
  %v753 = vmul.f32 %v735, %v545
  %v754 = vadd.f32 %v752, %v753
  %756 = vrot.lane.b32.xlu0 %v754, 96
  %v757 = vpop.permute.xlu0 %756
  %v759 = vsel %vm224, %v757, %v648
  %v761 = vsel %vm342, %v759, 0
  %763 = vmatprep.subr.mxu0 0.0
  %764 = vmatpush1.msra.mxu0 %v206
  %765 = vmatprep.subr.mxu0 0.0
  %766 = vmatpush1.msra.mxu0 %v207
  %767 = vmatprep.subr.mxu0 0.0
  %768 = vmatpush1.msra.mxu0 %v208
  %769 = vmatprep.subr.mxu0 0.0
  %770 = vmatpush1.msra.mxu0 %v209
  %771 = vmatprep.subr.mxu0 0.0
  %772 = vmatpush1.msra.mxu0 %v210
  %773 = vmatprep.subr.mxu0 0.0
  %774 = vmatpush1.msra.mxu0 %v211
  %775 = vmatprep.subr.mxu0 0.0
  %776 = vmatpush1.msra.mxu0 %v212
  %777 = vmatprep.subr.mxu0 0.0
  %778 = vmatpush1.msra.mxu0 %v213
  %779 = vmatprep.subr.mxu0 0.0
  %780 = vmatpush1.msra.mxu0 0.0
  %781 = vmatprep.subr.mxu0 0.0
  %782 = vmatpush1.msra.mxu0 0.0
  %783 = vmatprep.subr.mxu0 0.0
  %784 = vmatpush1.msra.mxu0 0.0
  %785 = vmatprep.subr.mxu0 0.0
  %786 = vmatpush1.msra.mxu0 0.0
  %787 = vmatprep.subr.mxu0 0.0
  %788 = vmatpush1.msra.mxu0 0.0
  %789 = vmatprep.subr.mxu0 0.0
  %790 = vmatpush1.msra.mxu0 0.0
  %791 = vmatprep.subr.mxu0 0.0
  %792 = vmatpush1.msra.mxu0 0.0
  %793 = vmatprep.subr.mxu0 0.0
  %794 = vmatpush1.msra.mxu0 0.0
  %795 = vmatprep.subr.mxu0 0.0
  %796 = vmatpush1.msra.mxu0 0.0
  %797 = vmatprep.subr.mxu0 0.0
  %798 = vmatpush1.msra.mxu0 0.0
  %799 = vmatprep.subr.mxu0 0.0
  %800 = vmatpush1.msra.mxu0 0.0
  %801 = vmatprep.subr.mxu0 0.0
  %802 = vmatpush1.msra.mxu0 0.0
  %803 = vmatprep.subr.mxu0 0.0
  %804 = vmatpush1.msra.mxu0 0.0
  %805 = vmatprep.subr.mxu0 0.0
  %806 = vmatpush1.msra.mxu0 0.0
  %807 = vmatprep.subr.mxu0 0.0
  %808 = vmatpush1.msra.mxu0 0.0
  %809 = vmatprep.subr.mxu0 0.0
  %810 = vmatpush1.msra.mxu0 0.0
  %811 = vmatprep.subr.mxu0 0.0
  %812 = vmatpush1.msra.mxu0 0.0
  %813 = vmatprep.subr.mxu0 0.0
  %814 = vmatpush1.msra.mxu0 0.0
  %815 = vmatprep.subr.mxu0 0.0
  %816 = vmatpush1.msra.mxu0 0.0
  %817 = vmatprep.subr.mxu0 0.0
  %818 = vmatpush1.msra.mxu0 0.0
  %819 = vmatprep.subr.mxu0 0.0
  %820 = vmatpush1.msra.mxu0 0.0
  %821 = vmatprep.subr.mxu0 0.0
  %822 = vmatpush1.msra.mxu0 0.0
  %823 = vmatprep.subr.mxu0 0.0
  %824 = vmatpush1.msra.mxu0 0.0
  %825 = vmatprep.subr.mxu0 0.0
  %826 = vmatpush1.msra.mxu0 0.0
  %827 = vmatprep.mubr.f32.mxu0 0.0
  %828 = vmatmul.mubr.f32.gmra.mrb[0].mxu0 %v761
  %v829 = vpop.f32.mrb[0].mxu0
  %v830 = vadd.f32 %v340, %v829
  %v831 = vpop.f32.mrb[0].mxu0
  %832 = vdwg.mxu0
  %v833 = vxor.u32 %v830, 2147483648
  %v834 = vmul.f32 %v833, 1.442695
  %v835 = vpow.pop %v834
  %v836 = vadd.f32 %v835, 1.0
  %v837 = vrcp.pop %v836
  %v838 = vmul.f32 1.0, %v837
  %840 = vrot.lane.b32.xlu0 %v830, 32
  %v841 = vpop.permute.xlu0 %840
  %v843 = vmul.f32 %v838, %v841
  %845 = vrot.lane.b32.xlu0 %v843, 64
  %v846 = vpop.permute.xlu0 %845
  %v848 = vadd.f32 %v830, %v846
  %v849 = vtanh.pop %v848
  %v850 = vsub.f32 1.0, %v838
  %852 = vrot.lane.b32.xlu0 %v849, 96
  %v853 = vpop.permute.xlu0 %852
  %v855 = vmul.f32 %v850, %v853
  %v856 = vmul.f32 %v838, %v648
  %v857 = vadd.f32 %v855, %v856
  %859 = vrot.lane.b32.xlu0 %v857, 96
  %v860 = vpop.permute.xlu0 %859
  %s862 = scalar_lea.vmem [#allocation5], 16
  %863 = vst.msk [vmem:[%s862] sm:$0xff] %vm224, %v860
  %s864 = scalar_lea.vmem [#allocation4], 24
  %v865 = vld [vmem:[%s864] sm:$0xff]
  %v866 = vsel %vm224, %v757, 0
  %868 = vmatprep.subr.mxu0 0.0
  %869 = vmatpush1.msra.mxu0 %v201
  %870 = vmatprep.subr.mxu0 0.0
  %871 = vmatpush1.msra.mxu0 %v202
  %872 = vmatprep.subr.mxu0 0.0
  %873 = vmatpush1.msra.mxu0 %v203
  %874 = vmatprep.subr.mxu0 0.0
  %875 = vmatpush1.msra.mxu0 %v204
  %876 = vmatprep.subr.mxu0 0.0
  %877 = vmatpush1.msra.mxu0 0.0
  %878 = vmatprep.subr.mxu0 0.0
  %879 = vmatpush1.msra.mxu0 0.0
  %880 = vmatprep.subr.mxu0 0.0
  %881 = vmatpush1.msra.mxu0 0.0
  %882 = vmatprep.subr.mxu0 0.0
  %883 = vmatpush1.msra.mxu0 0.0
  %884 = vmatprep.subr.mxu0 0.0
  %885 = vmatpush1.msra.mxu0 0.0
  %886 = vmatprep.subr.mxu0 0.0
  %887 = vmatpush1.msra.mxu0 0.0
  %888 = vmatprep.subr.mxu0 0.0
  %889 = vmatpush1.msra.mxu0 0.0
  %890 = vmatprep.subr.mxu0 0.0
  %891 = vmatpush1.msra.mxu0 0.0
  %892 = vmatprep.subr.mxu0 0.0
  %893 = vmatpush1.msra.mxu0 0.0
  %894 = vmatprep.subr.mxu0 0.0
  %895 = vmatpush1.msra.mxu0 0.0
  %896 = vmatprep.subr.mxu0 0.0
  %897 = vmatpush1.msra.mxu0 0.0
  %898 = vmatprep.subr.mxu0 0.0
  %899 = vmatpush1.msra.mxu0 0.0
  %900 = vmatprep.subr.mxu0 0.0
  %901 = vmatpush1.msra.mxu0 0.0
  %902 = vmatprep.subr.mxu0 0.0
  %903 = vmatpush1.msra.mxu0 0.0
  %904 = vmatprep.subr.mxu0 0.0
  %905 = vmatpush1.msra.mxu0 0.0
  %906 = vmatprep.subr.mxu0 0.0
  %907 = vmatpush1.msra.mxu0 0.0
  %908 = vmatprep.subr.mxu0 0.0
  %909 = vmatpush1.msra.mxu0 0.0
  %910 = vmatprep.subr.mxu0 0.0
  %911 = vmatpush1.msra.mxu0 0.0
  %912 = vmatprep.subr.mxu0 0.0
  %913 = vmatpush1.msra.mxu0 0.0
  %914 = vmatprep.subr.mxu0 0.0
  %915 = vmatpush1.msra.mxu0 0.0
  %916 = vmatprep.subr.mxu0 0.0
  %917 = vmatpush1.msra.mxu0 0.0
  %918 = vmatprep.subr.mxu0 0.0
  %919 = vmatpush1.msra.mxu0 0.0
  %920 = vmatprep.subr.mxu0 0.0
  %921 = vmatpush1.msra.mxu0 0.0
  %922 = vmatprep.subr.mxu0 0.0
  %923 = vmatpush1.msra.mxu0 0.0
  %924 = vmatprep.subr.mxu0 0.0
  %925 = vmatpush1.msra.mxu0 0.0
  %926 = vmatprep.subr.mxu0 0.0
  %927 = vmatpush1.msra.mxu0 0.0
  %928 = vmatprep.subr.mxu0 0.0
  %929 = vmatpush1.msra.mxu0 0.0
  %930 = vmatprep.subr.mxu0 0.0
  %931 = vmatpush1.msra.mxu0 0.0
  %932 = vmatprep.mubr.f32.mxu0 0.0
  %933 = vmatmul.mubr.f32.gmra.mrb[0].mxu0 %v866
  %v934 = vpop.f32.mrb[0].mxu0
  %v935 = vadd.f32 %v222, %v934
  %v936 = vpop.f32.mrb[0].mxu0
  %937 = vdwg.mxu0
  %v938 = vadd.f32 %v865, %v935
  %v939 = vxor.u32 %v938, 2147483648
  %v940 = vmul.f32 %v939, 1.442695
  %v941 = vpow.pop %v940
  %v942 = vadd.f32 %v941, 1.0
  %v943 = vrcp.pop %v942
  %v944 = vmul.f32 1.0, %v943
  %946 = vrot.lane.b32.xlu0 %v935, 64
  %v947 = vpop.permute.xlu0 %946
  %v949 = vmul.f32 %v944, %v947
  %951 = vrot.lane.b32.xlu0 %v949, 64
  %v952 = vpop.permute.xlu0 %951
  %v954 = vadd.f32 %v865, %v952
  %v955 = vtanh.pop %v954
  %v956 = vsub.f32 1.0, %v944
  %958 = vrot.lane.b32.xlu0 %v955, 96
  %v959 = vpop.permute.xlu0 %958
  %v961 = vmul.f32 %v956, %v959
  %v962 = vmul.f32 %v944, %v754
  %v963 = vadd.f32 %v961, %v962
  %965 = vrot.lane.b32.xlu0 %v963, 96
  %v966 = vpop.permute.xlu0 %965
  %v968 = vsel %vm224, %v966, %v857
  %v970 = vsel %vm342, %v968, 0
  %972 = vmatprep.subr.mxu0 0.0
  %973 = vmatpush1.msra.mxu0 %v206
  %974 = vmatprep.subr.mxu0 0.0
  %975 = vmatpush1.msra.mxu0 %v207
  %976 = vmatprep.subr.mxu0 0.0
  %977 = vmatpush1.msra.mxu0 %v208
  %978 = vmatprep.subr.mxu0 0.0
  %979 = vmatpush1.msra.mxu0 %v209
  %980 = vmatprep.subr.mxu0 0.0
  %981 = vmatpush1.msra.mxu0 %v210
  %982 = vmatprep.subr.mxu0 0.0
  %983 = vmatpush1.msra.mxu0 %v211
  %984 = vmatprep.subr.mxu0 0.0
  %985 = vmatpush1.msra.mxu0 %v212
  %986 = vmatprep.subr.mxu0 0.0
  %987 = vmatpush1.msra.mxu0 %v213
  %988 = vmatprep.subr.mxu0 0.0
  %989 = vmatpush1.msra.mxu0 0.0
  %990 = vmatprep.subr.mxu0 0.0
  %991 = vmatpush1.msra.mxu0 0.0
  %992 = vmatprep.subr.mxu0 0.0
  %993 = vmatpush1.msra.mxu0 0.0
  %994 = vmatprep.subr.mxu0 0.0
  %995 = vmatpush1.msra.mxu0 0.0
  %996 = vmatprep.subr.mxu0 0.0
  %997 = vmatpush1.msra.mxu0 0.0
  %998 = vmatprep.subr.mxu0 0.0
  %999 = vmatpush1.msra.mxu0 0.0
  %1000 = vmatprep.subr.mxu0 0.0
  %1001 = vmatpush1.msra.mxu0 0.0
  %1002 = vmatprep.subr.mxu0 0.0
  %1003 = vmatpush1.msra.mxu0 0.0
  %1004 = vmatprep.subr.mxu0 0.0
  %1005 = vmatpush1.msra.mxu0 0.0
  %1006 = vmatprep.subr.mxu0 0.0
  %1007 = vmatpush1.msra.mxu0 0.0
  %1008 = vmatprep.subr.mxu0 0.0
  %1009 = vmatpush1.msra.mxu0 0.0
  %1010 = vmatprep.subr.mxu0 0.0
  %1011 = vmatpush1.msra.mxu0 0.0
  %1012 = vmatprep.subr.mxu0 0.0
  %1013 = vmatpush1.msra.mxu0 0.0
  %1014 = vmatprep.subr.mxu0 0.0
  %1015 = vmatpush1.msra.mxu0 0.0
  %1016 = vmatprep.subr.mxu0 0.0
  %1017 = vmatpush1.msra.mxu0 0.0
  %1018 = vmatprep.subr.mxu0 0.0
  %1019 = vmatpush1.msra.mxu0 0.0
  %1020 = vmatprep.subr.mxu0 0.0
  %1021 = vmatpush1.msra.mxu0 0.0
  %1022 = vmatprep.subr.mxu0 0.0
  %1023 = vmatpush1.msra.mxu0 0.0
  %1024 = vmatprep.subr.mxu0 0.0
  %1025 = vmatpush1.msra.mxu0 0.0
  %1026 = vmatprep.subr.mxu0 0.0
  %1027 = vmatpush1.msra.mxu0 0.0
  %1028 = vmatprep.subr.mxu0 0.0
  %1029 = vmatpush1.msra.mxu0 0.0
  %1030 = vmatprep.subr.mxu0 0.0
  %1031 = vmatpush1.msra.mxu0 0.0
  %1032 = vmatprep.subr.mxu0 0.0
  %1033 = vmatpush1.msra.mxu0 0.0
  %1034 = vmatprep.subr.mxu0 0.0
  %1035 = vmatpush1.msra.mxu0 0.0
  %1036 = vmatprep.mubr.f32.mxu0 0.0
  %1037 = vmatmul.mubr.f32.gmra.mrb[0].mxu0 %v970
  %v1038 = vpop.f32.mrb[0].mxu0
  %v1039 = vadd.f32 %v340, %v1038
  %v1040 = vpop.f32.mrb[0].mxu0
  %1041 = vdwg.mxu0
  %v1042 = vxor.u32 %v1039, 2147483648
  %v1043 = vmul.f32 %v1042, 1.442695
  %v1044 = vpow.pop %v1043
  %v1045 = vadd.f32 %v1044, 1.0
  %v1046 = vrcp.pop %v1045
  %v1047 = vmul.f32 1.0, %v1046
  %1049 = vrot.lane.b32.xlu0 %v1039, 32
  %v1050 = vpop.permute.xlu0 %1049
  %v1052 = vmul.f32 %v1047, %v1050
  %1054 = vrot.lane.b32.xlu0 %v1052, 64
  %v1055 = vpop.permute.xlu0 %1054
  %v1057 = vadd.f32 %v1039, %v1055
  %v1058 = vtanh.pop %v1057
  %v1059 = vsub.f32 1.0, %v1047
  %1061 = vrot.lane.b32.xlu0 %v1058, 96
  %v1062 = vpop.permute.xlu0 %1061
  %v1064 = vmul.f32 %v1059, %v1062
  %v1065 = vmul.f32 %v1047, %v857
  %v1066 = vadd.f32 %v1064, %v1065
  %1068 = vrot.lane.b32.xlu0 %v1066, 96
  %v1069 = vpop.permute.xlu0 %1068
  %s1071 = scalar_lea.vmem [#allocation5], 24
  %1072 = vst.msk [vmem:[%s1071] sm:$0xff] %vm224, %v1069
  %s1073 = scalar_lea.vmem [#allocation4], 32
  %v1074 = vld [vmem:[%s1073] sm:$0xff]
  %v1075 = vsel %vm224, %v966, 0
  %1077 = vmatprep.subr.mxu0 0.0
  %1078 = vmatpush1.msra.mxu0 %v201
  %1079 = vmatprep.subr.mxu0 0.0
  %1080 = vmatpush1.msra.mxu0 %v202
  %1081 = vmatprep.subr.mxu0 0.0
  %1082 = vmatpush1.msra.mxu0 %v203
  %1083 = vmatprep.subr.mxu0 0.0
  %1084 = vmatpush1.msra.mxu0 %v204
  %1085 = vmatprep.subr.mxu0 0.0
  %1086 = vmatpush1.msra.mxu0 0.0
  %1087 = vmatprep.subr.mxu0 0.0
  %1088 = vmatpush1.msra.mxu0 0.0
  %1089 = vmatprep.subr.mxu0 0.0
  %1090 = vmatpush1.msra.mxu0 0.0
  %1091 = vmatprep.subr.mxu0 0.0
  %1092 = vmatpush1.msra.mxu0 0.0
  %1093 = vmatprep.subr.mxu0 0.0
  %1094 = vmatpush1.msra.mxu0 0.0
  %1095 = vmatprep.subr.mxu0 0.0
  %1096 = vmatpush1.msra.mxu0 0.0
  %1097 = vmatprep.subr.mxu0 0.0
  %1098 = vmatpush1.msra.mxu0 0.0
  %1099 = vmatprep.subr.mxu0 0.0
  %1100 = vmatpush1.msra.mxu0 0.0
  %1101 = vmatprep.subr.mxu0 0.0
  %1102 = vmatpush1.msra.mxu0 0.0
  %1103 = vmatprep.subr.mxu0 0.0
  %1104 = vmatpush1.msra.mxu0 0.0
  %1105 = vmatprep.subr.mxu0 0.0
  %1106 = vmatpush1.msra.mxu0 0.0
  %1107 = vmatprep.subr.mxu0 0.0
  %1108 = vmatpush1.msra.mxu0 0.0
  %1109 = vmatprep.subr.mxu0 0.0
  %1110 = vmatpush1.msra.mxu0 0.0
  %1111 = vmatprep.subr.mxu0 0.0
  %1112 = vmatpush1.msra.mxu0 0.0
  %1113 = vmatprep.subr.mxu0 0.0
  %1114 = vmatpush1.msra.mxu0 0.0
  %1115 = vmatprep.subr.mxu0 0.0
  %1116 = vmatpush1.msra.mxu0 0.0
  %1117 = vmatprep.subr.mxu0 0.0
  %1118 = vmatpush1.msra.mxu0 0.0
  %1119 = vmatprep.subr.mxu0 0.0
  %1120 = vmatpush1.msra.mxu0 0.0
  %1121 = vmatprep.subr.mxu0 0.0
  %1122 = vmatpush1.msra.mxu0 0.0
  %1123 = vmatprep.subr.mxu0 0.0
  %1124 = vmatpush1.msra.mxu0 0.0
  %1125 = vmatprep.subr.mxu0 0.0
  %1126 = vmatpush1.msra.mxu0 0.0
  %1127 = vmatprep.subr.mxu0 0.0
  %1128 = vmatpush1.msra.mxu0 0.0
  %1129 = vmatprep.subr.mxu0 0.0
  %1130 = vmatpush1.msra.mxu0 0.0
  %1131 = vmatprep.subr.mxu0 0.0
  %1132 = vmatpush1.msra.mxu0 0.0
  %1133 = vmatprep.subr.mxu0 0.0
  %1134 = vmatpush1.msra.mxu0 0.0
  %1135 = vmatprep.subr.mxu0 0.0
  %1136 = vmatpush1.msra.mxu0 0.0
  %1137 = vmatprep.subr.mxu0 0.0
  %1138 = vmatpush1.msra.mxu0 0.0
  %1139 = vmatprep.subr.mxu0 0.0
  %1140 = vmatpush1.msra.mxu0 0.0
  %1141 = vmatprep.mubr.f32.mxu0 0.0
  %1142 = vmatmul.mubr.f32.gmra.mrb[0].mxu0 %v1075
  %v1143 = vpop.f32.mrb[0].mxu0
  %v1144 = vadd.f32 %v222, %v1143
  %v1145 = vpop.f32.mrb[0].mxu0
  %1146 = vdwg.mxu0
  %v1147 = vadd.f32 %v1074, %v1144
  %v1148 = vxor.u32 %v1147, 2147483648
  %v1149 = vmul.f32 %v1148, 1.442695
  %v1150 = vpow.pop %v1149
  %v1151 = vadd.f32 %v1150, 1.0
  %v1152 = vrcp.pop %v1151
  %v1153 = vmul.f32 1.0, %v1152
  %1155 = vrot.lane.b32.xlu0 %v1144, 64
  %v1156 = vpop.permute.xlu0 %1155
  %v1158 = vmul.f32 %v1153, %v1156
  %1160 = vrot.lane.b32.xlu0 %v1158, 64
  %v1161 = vpop.permute.xlu0 %1160
  %v1163 = vadd.f32 %v1074, %v1161
  %v1164 = vtanh.pop %v1163
  %v1165 = vsub.f32 1.0, %v1153
  %1167 = vrot.lane.b32.xlu0 %v1164, 96
  %v1168 = vpop.permute.xlu0 %1167
  %v1170 = vmul.f32 %v1165, %v1168
  %v1171 = vmul.f32 %v1153, %v963
  %v1172 = vadd.f32 %v1170, %v1171
  %1174 = vrot.lane.b32.xlu0 %v1172, 96
  %v1175 = vpop.permute.xlu0 %1174
  %v1177 = vsel %vm224, %v1175, %v1066
  %v1179 = vsel %vm342, %v1177, 0
  %1181 = vmatprep.subr.mxu0 0.0
  %1182 = vmatpush1.msra.mxu0 %v206
  %1183 = vmatprep.subr.mxu0 0.0
  %1184 = vmatpush1.msra.mxu0 %v207
  %1185 = vmatprep.subr.mxu0 0.0
  %1186 = vmatpush1.msra.mxu0 %v208
  %1187 = vmatprep.subr.mxu0 0.0
  %1188 = vmatpush1.msra.mxu0 %v209
  %1189 = vmatprep.subr.mxu0 0.0
  %1190 = vmatpush1.msra.mxu0 %v210
  %1191 = vmatprep.subr.mxu0 0.0
  %1192 = vmatpush1.msra.mxu0 %v211
  %1193 = vmatprep.subr.mxu0 0.0
  %1194 = vmatpush1.msra.mxu0 %v212
  %1195 = vmatprep.subr.mxu0 0.0
  %1196 = vmatpush1.msra.mxu0 %v213
  %1197 = vmatprep.subr.mxu0 0.0
  %1198 = vmatpush1.msra.mxu0 0.0
  %1199 = vmatprep.subr.mxu0 0.0
  %1200 = vmatpush1.msra.mxu0 0.0
  %1201 = vmatprep.subr.mxu0 0.0
  %1202 = vmatpush1.msra.mxu0 0.0
  %1203 = vmatprep.subr.mxu0 0.0
  %1204 = vmatpush1.msra.mxu0 0.0
  %1205 = vmatprep.subr.mxu0 0.0
  %1206 = vmatpush1.msra.mxu0 0.0
  %1207 = vmatprep.subr.mxu0 0.0
  %1208 = vmatpush1.msra.mxu0 0.0
  %1209 = vmatprep.subr.mxu0 0.0
  %1210 = vmatpush1.msra.mxu0 0.0
  %1211 = vmatprep.subr.mxu0 0.0
  %1212 = vmatpush1.msra.mxu0 0.0
  %1213 = vmatprep.subr.mxu0 0.0
  %1214 = vmatpush1.msra.mxu0 0.0
  %1215 = vmatprep.subr.mxu0 0.0
  %1216 = vmatpush1.msra.mxu0 0.0
  %1217 = vmatprep.subr.mxu0 0.0
  %1218 = vmatpush1.msra.mxu0 0.0
  %1219 = vmatprep.subr.mxu0 0.0
  %1220 = vmatpush1.msra.mxu0 0.0
  %1221 = vmatprep.subr.mxu0 0.0
  %1222 = vmatpush1.msra.mxu0 0.0
  %1223 = vmatprep.subr.mxu0 0.0
  %1224 = vmatpush1.msra.mxu0 0.0
  %1225 = vmatprep.subr.mxu0 0.0
  %1226 = vmatpush1.msra.mxu0 0.0
  %1227 = vmatprep.subr.mxu0 0.0
  %1228 = vmatpush1.msra.mxu0 0.0
  %1229 = vmatprep.subr.mxu0 0.0
  %1230 = vmatpush1.msra.mxu0 0.0
  %1231 = vmatprep.subr.mxu0 0.0
  %1232 = vmatpush1.msra.mxu0 0.0
  %1233 = vmatprep.subr.mxu0 0.0
  %1234 = vmatpush1.msra.mxu0 0.0
  %1235 = vmatprep.subr.mxu0 0.0
  %1236 = vmatpush1.msra.mxu0 0.0
  %1237 = vmatprep.subr.mxu0 0.0
  %1238 = vmatpush1.msra.mxu0 0.0
  %1239 = vmatprep.subr.mxu0 0.0
  %1240 = vmatpush1.msra.mxu0 0.0
  %1241 = vmatprep.subr.mxu0 0.0
  %1242 = vmatpush1.msra.mxu0 0.0
  %1243 = vmatprep.subr.mxu0 0.0
  %1244 = vmatpush1.msra.mxu0 0.0
  %1245 = vmatprep.mubr.f32.mxu0 0.0
  %1246 = vmatmul.mubr.f32.gmra.mrb[0].mxu0 %v1179
  %v1247 = vpop.f32.mrb[0].mxu0
  %v1248 = vadd.f32 %v340, %v1247
  %v1249 = vpop.f32.mrb[0].mxu0
  %1250 = vdwg.mxu0
  %v1251 = vxor.u32 %v1248, 2147483648
  %v1252 = vmul.f32 %v1251, 1.442695
  %v1253 = vpow.pop %v1252
  %v1254 = vadd.f32 %v1253, 1.0
  %v1255 = vrcp.pop %v1254
  %v1256 = vmul.f32 1.0, %v1255
  %1258 = vrot.lane.b32.xlu0 %v1248, 32
  %v1259 = vpop.permute.xlu0 %1258
  %v1261 = vmul.f32 %v1256, %v1259
  %1263 = vrot.lane.b32.xlu0 %v1261, 64
  %v1264 = vpop.permute.xlu0 %1263
  %v1266 = vadd.f32 %v1248, %v1264
  %v1267 = vtanh.pop %v1266
  %v1268 = vsub.f32 1.0, %v1256
  %1270 = vrot.lane.b32.xlu0 %v1267, 96
  %v1271 = vpop.permute.xlu0 %1270
  %v1273 = vmul.f32 %v1268, %v1271
  %v1274 = vmul.f32 %v1256, %v1066
  %v1275 = vadd.f32 %v1273, %v1274
  %1277 = vrot.lane.b32.xlu0 %v1275, 96
  %v1278 = vpop.permute.xlu0 %1277
  %s1280 = scalar_lea.vmem [#allocation5], 32
  %1281 = vst.msk [vmem:[%s1280] sm:$0xff] %vm224, %v1278
  %s1282 = scalar_lea.vmem [#allocation4], 40
  %v1283 = vld [vmem:[%s1282] sm:$0xff]
  %v1284 = vsel %vm224, %v1175, 0
  %1286 = vmatprep.subr.mxu0 0.0
  %1287 = vmatpush1.msra.mxu0 %v201
  %1288 = vmatprep.subr.mxu0 0.0
  %1289 = vmatpush1.msra.mxu0 %v202
  %1290 = vmatprep.subr.mxu0 0.0
  %1291 = vmatpush1.msra.mxu0 %v203
  %1292 = vmatprep.subr.mxu0 0.0
  %1293 = vmatpush1.msra.mxu0 %v204
  %1294 = vmatprep.subr.mxu0 0.0
  %1295 = vmatpush1.msra.mxu0 0.0
  %1296 = vmatprep.subr.mxu0 0.0
  %1297 = vmatpush1.msra.mxu0 0.0
  %1298 = vmatprep.subr.mxu0 0.0
  %1299 = vmatpush1.msra.mxu0 0.0
  %1300 = vmatprep.subr.mxu0 0.0
  %1301 = vmatpush1.msra.mxu0 0.0
  %1302 = vmatprep.subr.mxu0 0.0
  %1303 = vmatpush1.msra.mxu0 0.0
  %1304 = vmatprep.subr.mxu0 0.0
  %1305 = vmatpush1.msra.mxu0 0.0
  %1306 = vmatprep.subr.mxu0 0.0
  %1307 = vmatpush1.msra.mxu0 0.0
  %1308 = vmatprep.subr.mxu0 0.0
  %1309 = vmatpush1.msra.mxu0 0.0
  %1310 = vmatprep.subr.mxu0 0.0
  %1311 = vmatpush1.msra.mxu0 0.0
  %1312 = vmatprep.subr.mxu0 0.0
  %1313 = vmatpush1.msra.mxu0 0.0
  %1314 = vmatprep.subr.mxu0 0.0
  %1315 = vmatpush1.msra.mxu0 0.0
  %1316 = vmatprep.subr.mxu0 0.0
  %1317 = vmatpush1.msra.mxu0 0.0
  %1318 = vmatprep.subr.mxu0 0.0
  %1319 = vmatpush1.msra.mxu0 0.0
  %1320 = vmatprep.subr.mxu0 0.0
  %1321 = vmatpush1.msra.mxu0 0.0
  %1322 = vmatprep.subr.mxu0 0.0
  %1323 = vmatpush1.msra.mxu0 0.0
  %1324 = vmatprep.subr.mxu0 0.0
  %1325 = vmatpush1.msra.mxu0 0.0
  %1326 = vmatprep.subr.mxu0 0.0
  %1327 = vmatpush1.msra.mxu0 0.0
  %1328 = vmatprep.subr.mxu0 0.0
  %1329 = vmatpush1.msra.mxu0 0.0
  %1330 = vmatprep.subr.mxu0 0.0
  %1331 = vmatpush1.msra.mxu0 0.0
  %1332 = vmatprep.subr.mxu0 0.0
  %1333 = vmatpush1.msra.mxu0 0.0
  %1334 = vmatprep.subr.mxu0 0.0
  %1335 = vmatpush1.msra.mxu0 0.0
  %1336 = vmatprep.subr.mxu0 0.0
  %1337 = vmatpush1.msra.mxu0 0.0
  %1338 = vmatprep.subr.mxu0 0.0
  %1339 = vmatpush1.msra.mxu0 0.0
  %1340 = vmatprep.subr.mxu0 0.0
  %1341 = vmatpush1.msra.mxu0 0.0
  %1342 = vmatprep.subr.mxu0 0.0
  %1343 = vmatpush1.msra.mxu0 0.0
  %1344 = vmatprep.subr.mxu0 0.0
  %1345 = vmatpush1.msra.mxu0 0.0
  %1346 = vmatprep.subr.mxu0 0.0
  %1347 = vmatpush1.msra.mxu0 0.0
  %1348 = vmatprep.subr.mxu0 0.0
  %1349 = vmatpush1.msra.mxu0 0.0
  %1350 = vmatprep.mubr.f32.mxu0 0.0
  %1351 = vmatmul.mubr.f32.gmra.mrb[0].mxu0 %v1284
  %v1352 = vpop.f32.mrb[0].mxu0
  %v1353 = vadd.f32 %v222, %v1352
  %v1354 = vpop.f32.mrb[0].mxu0
  %1355 = vdwg.mxu0
  %v1356 = vadd.f32 %v1283, %v1353
  %v1357 = vxor.u32 %v1356, 2147483648
  %v1358 = vmul.f32 %v1357, 1.442695
  %v1359 = vpow.pop %v1358
  %v1360 = vadd.f32 %v1359, 1.0
  %v1361 = vrcp.pop %v1360
  %v1362 = vmul.f32 1.0, %v1361
  %1364 = vrot.lane.b32.xlu0 %v1353, 64
  %v1365 = vpop.permute.xlu0 %1364
  %v1367 = vmul.f32 %v1362, %v1365
  %1369 = vrot.lane.b32.xlu0 %v1367, 64
  %v1370 = vpop.permute.xlu0 %1369
  %v1372 = vadd.f32 %v1283, %v1370
  %v1373 = vtanh.pop %v1372
  %v1374 = vsub.f32 1.0, %v1362
  %1376 = vrot.lane.b32.xlu0 %v1373, 96
  %v1377 = vpop.permute.xlu0 %1376
  %v1379 = vmul.f32 %v1374, %v1377
  %v1380 = vmul.f32 %v1362, %v1172
  %v1381 = vadd.f32 %v1379, %v1380
  %1383 = vrot.lane.b32.xlu0 %v1381, 96
  %v1384 = vpop.permute.xlu0 %1383
  %v1386 = vsel %vm224, %v1384, %v1275
  %v1388 = vsel %vm342, %v1386, 0
  %1390 = vmatprep.subr.mxu0 0.0
  %1391 = vmatpush1.msra.mxu0 %v206
  %1392 = vmatprep.subr.mxu0 0.0
  %1393 = vmatpush1.msra.mxu0 %v207
  %1394 = vmatprep.subr.mxu0 0.0
  %1395 = vmatpush1.msra.mxu0 %v208
  %1396 = vmatprep.subr.mxu0 0.0
  %1397 = vmatpush1.msra.mxu0 %v209
  %1398 = vmatprep.subr.mxu0 0.0
  %1399 = vmatpush1.msra.mxu0 %v210
  %1400 = vmatprep.subr.mxu0 0.0
  %1401 = vmatpush1.msra.mxu0 %v211
  %1402 = vmatprep.subr.mxu0 0.0
  %1403 = vmatpush1.msra.mxu0 %v212
  %1404 = vmatprep.subr.mxu0 0.0
  %1405 = vmatpush1.msra.mxu0 %v213
  %1406 = vmatprep.subr.mxu0 0.0
  %1407 = vmatpush1.msra.mxu0 0.0
  %1408 = vmatprep.subr.mxu0 0.0
  %1409 = vmatpush1.msra.mxu0 0.0
  %1410 = vmatprep.subr.mxu0 0.0
  %1411 = vmatpush1.msra.mxu0 0.0
  %1412 = vmatprep.subr.mxu0 0.0
  %1413 = vmatpush1.msra.mxu0 0.0
  %1414 = vmatprep.subr.mxu0 0.0
  %1415 = vmatpush1.msra.mxu0 0.0
  %1416 = vmatprep.subr.mxu0 0.0
  %1417 = vmatpush1.msra.mxu0 0.0
  %1418 = vmatprep.subr.mxu0 0.0
  %1419 = vmatpush1.msra.mxu0 0.0
  %1420 = vmatprep.subr.mxu0 0.0
  %1421 = vmatpush1.msra.mxu0 0.0
  %1422 = vmatprep.subr.mxu0 0.0
  %1423 = vmatpush1.msra.mxu0 0.0
  %1424 = vmatprep.subr.mxu0 0.0
  %1425 = vmatpush1.msra.mxu0 0.0
  %1426 = vmatprep.subr.mxu0 0.0
  %1427 = vmatpush1.msra.mxu0 0.0
  %1428 = vmatprep.subr.mxu0 0.0
  %1429 = vmatpush1.msra.mxu0 0.0
  %1430 = vmatprep.subr.mxu0 0.0
  %1431 = vmatpush1.msra.mxu0 0.0
  %1432 = vmatprep.subr.mxu0 0.0
  %1433 = vmatpush1.msra.mxu0 0.0
  %1434 = vmatprep.subr.mxu0 0.0
  %1435 = vmatpush1.msra.mxu0 0.0
  %1436 = vmatprep.subr.mxu0 0.0
  %1437 = vmatpush1.msra.mxu0 0.0
  %1438 = vmatprep.subr.mxu0 0.0
  %1439 = vmatpush1.msra.mxu0 0.0
  %1440 = vmatprep.subr.mxu0 0.0
  %1441 = vmatpush1.msra.mxu0 0.0
  %1442 = vmatprep.subr.mxu0 0.0
  %1443 = vmatpush1.msra.mxu0 0.0
  %1444 = vmatprep.subr.mxu0 0.0
  %1445 = vmatpush1.msra.mxu0 0.0
  %1446 = vmatprep.subr.mxu0 0.0
  %1447 = vmatpush1.msra.mxu0 0.0
  %1448 = vmatprep.subr.mxu0 0.0
  %1449 = vmatpush1.msra.mxu0 0.0
  %1450 = vmatprep.subr.mxu0 0.0
  %1451 = vmatpush1.msra.mxu0 0.0
  %1452 = vmatprep.subr.mxu0 0.0
  %1453 = vmatpush1.msra.mxu0 0.0
  %1454 = vmatprep.mubr.f32.mxu0 0.0
  %1455 = vmatmul.mubr.f32.gmra.mrb[0].mxu0 %v1388
  %v1456 = vpop.f32.mrb[0].mxu0
  %v1457 = vadd.f32 %v340, %v1456
  %v1458 = vpop.f32.mrb[0].mxu0
  %1459 = vdwg.mxu0
  %v1460 = vxor.u32 %v1457, 2147483648
  %v1461 = vmul.f32 %v1460, 1.442695
  %v1462 = vpow.pop %v1461
  %v1463 = vadd.f32 %v1462, 1.0
  %v1464 = vrcp.pop %v1463
  %v1465 = vmul.f32 1.0, %v1464
  %1467 = vrot.lane.b32.xlu0 %v1457, 32
  %v1468 = vpop.permute.xlu0 %1467
  %v1470 = vmul.f32 %v1465, %v1468
  %1472 = vrot.lane.b32.xlu0 %v1470, 64
  %v1473 = vpop.permute.xlu0 %1472
  %v1475 = vadd.f32 %v1457, %v1473
  %v1476 = vtanh.pop %v1475
  %v1477 = vsub.f32 1.0, %v1465
  %1479 = vrot.lane.b32.xlu0 %v1476, 96
  %v1480 = vpop.permute.xlu0 %1479
  %v1482 = vmul.f32 %v1477, %v1480
  %v1483 = vmul.f32 %v1465, %v1275
  %v1484 = vadd.f32 %v1482, %v1483
  %1486 = vrot.lane.b32.xlu0 %v1484, 96
  %v1487 = vpop.permute.xlu0 %1486
  %s1489 = scalar_lea.vmem [#allocation5], 40
  %1490 = vst.msk [vmem:[%s1489] sm:$0xff] %vm224, %v1487
  %s1491 = scalar_lea.vmem [#allocation4], 48
  %v1492 = vld [vmem:[%s1491] sm:$0xff]
  %v1493 = vsel %vm224, %v1384, 0
  %1495 = vmatprep.subr.mxu0 0.0
  %1496 = vmatpush1.msra.mxu0 %v201
  %1497 = vmatprep.subr.mxu0 0.0
  %1498 = vmatpush1.msra.mxu0 %v202
  %1499 = vmatprep.subr.mxu0 0.0
  %1500 = vmatpush1.msra.mxu0 %v203
  %1501 = vmatprep.subr.mxu0 0.0
  %1502 = vmatpush1.msra.mxu0 %v204
  %1503 = vmatprep.subr.mxu0 0.0
  %1504 = vmatpush1.msra.mxu0 0.0
  %1505 = vmatprep.subr.mxu0 0.0
  %1506 = vmatpush1.msra.mxu0 0.0
  %1507 = vmatprep.subr.mxu0 0.0
  %1508 = vmatpush1.msra.mxu0 0.0
  %1509 = vmatprep.subr.mxu0 0.0
  %1510 = vmatpush1.msra.mxu0 0.0
  %1511 = vmatprep.subr.mxu0 0.0
  %1512 = vmatpush1.msra.mxu0 0.0
  %1513 = vmatprep.subr.mxu0 0.0
  %1514 = vmatpush1.msra.mxu0 0.0
  %1515 = vmatprep.subr.mxu0 0.0
  %1516 = vmatpush1.msra.mxu0 0.0
  %1517 = vmatprep.subr.mxu0 0.0
  %1518 = vmatpush1.msra.mxu0 0.0
  %1519 = vmatprep.subr.mxu0 0.0
  %1520 = vmatpush1.msra.mxu0 0.0
  %1521 = vmatprep.subr.mxu0 0.0
  %1522 = vmatpush1.msra.mxu0 0.0
  %1523 = vmatprep.subr.mxu0 0.0
  %1524 = vmatpush1.msra.mxu0 0.0
  %1525 = vmatprep.subr.mxu0 0.0
  %1526 = vmatpush1.msra.mxu0 0.0
  %1527 = vmatprep.subr.mxu0 0.0
  %1528 = vmatpush1.msra.mxu0 0.0
  %1529 = vmatprep.subr.mxu0 0.0
  %1530 = vmatpush1.msra.mxu0 0.0
  %1531 = vmatprep.subr.mxu0 0.0
  %1532 = vmatpush1.msra.mxu0 0.0
  %1533 = vmatprep.subr.mxu0 0.0
  %1534 = vmatpush1.msra.mxu0 0.0
  %1535 = vmatprep.subr.mxu0 0.0
  %1536 = vmatpush1.msra.mxu0 0.0
  %1537 = vmatprep.subr.mxu0 0.0
  %1538 = vmatpush1.msra.mxu0 0.0
  %1539 = vmatprep.subr.mxu0 0.0
  %1540 = vmatpush1.msra.mxu0 0.0
  %1541 = vmatprep.subr.mxu0 0.0
  %1542 = vmatpush1.msra.mxu0 0.0
  %1543 = vmatprep.subr.mxu0 0.0
  %1544 = vmatpush1.msra.mxu0 0.0
  %1545 = vmatprep.subr.mxu0 0.0
  %1546 = vmatpush1.msra.mxu0 0.0
  %1547 = vmatprep.subr.mxu0 0.0
  %1548 = vmatpush1.msra.mxu0 0.0
  %1549 = vmatprep.subr.mxu0 0.0
  %1550 = vmatpush1.msra.mxu0 0.0
  %1551 = vmatprep.subr.mxu0 0.0
  %1552 = vmatpush1.msra.mxu0 0.0
  %1553 = vmatprep.subr.mxu0 0.0
  %1554 = vmatpush1.msra.mxu0 0.0
  %1555 = vmatprep.subr.mxu0 0.0
  %1556 = vmatpush1.msra.mxu0 0.0
  %1557 = vmatprep.subr.mxu0 0.0
  %1558 = vmatpush1.msra.mxu0 0.0
  %1559 = vmatprep.mubr.f32.mxu0 0.0
  %1560 = vmatmul.mubr.f32.gmra.mrb[0].mxu0 %v1493
  %v1561 = vpop.f32.mrb[0].mxu0
  %v1562 = vadd.f32 %v222, %v1561
  %v1563 = vpop.f32.mrb[0].mxu0
  %1564 = vdwg.mxu0
  %v1565 = vadd.f32 %v1492, %v1562
  %v1566 = vxor.u32 %v1565, 2147483648
  %v1567 = vmul.f32 %v1566, 1.442695
  %v1568 = vpow.pop %v1567
  %v1569 = vadd.f32 %v1568, 1.0
  %v1570 = vrcp.pop %v1569
  %v1571 = vmul.f32 1.0, %v1570
  %1573 = vrot.lane.b32.xlu0 %v1562, 64
  %v1574 = vpop.permute.xlu0 %1573
  %v1576 = vmul.f32 %v1571, %v1574
  %1578 = vrot.lane.b32.xlu0 %v1576, 64
  %v1579 = vpop.permute.xlu0 %1578
  %v1581 = vadd.f32 %v1492, %v1579
  %v1582 = vtanh.pop %v1581
  %v1583 = vsub.f32 1.0, %v1571
  %1585 = vrot.lane.b32.xlu0 %v1582, 96
  %v1586 = vpop.permute.xlu0 %1585
  %v1588 = vmul.f32 %v1583, %v1586
  %v1589 = vmul.f32 %v1571, %v1381
  %v1590 = vadd.f32 %v1588, %v1589
  %1592 = vrot.lane.b32.xlu0 %v1590, 96
  %v1593 = vpop.permute.xlu0 %1592
  %v1595 = vsel %vm224, %v1593, %v1484
  %v1597 = vsel %vm342, %v1595, 0
  %1599 = vmatprep.subr.mxu0 0.0
  %1600 = vmatpush1.msra.mxu0 %v206
  %1601 = vmatprep.subr.mxu0 0.0
  %1602 = vmatpush1.msra.mxu0 %v207
  %1603 = vmatprep.subr.mxu0 0.0
  %1604 = vmatpush1.msra.mxu0 %v208
  %1605 = vmatprep.subr.mxu0 0.0
  %1606 = vmatpush1.msra.mxu0 %v209
  %1607 = vmatprep.subr.mxu0 0.0
  %1608 = vmatpush1.msra.mxu0 %v210
  %1609 = vmatprep.subr.mxu0 0.0
  %1610 = vmatpush1.msra.mxu0 %v211
  %1611 = vmatprep.subr.mxu0 0.0
  %1612 = vmatpush1.msra.mxu0 %v212
  %1613 = vmatprep.subr.mxu0 0.0
  %1614 = vmatpush1.msra.mxu0 %v213
  %1615 = vmatprep.subr.mxu0 0.0
  %1616 = vmatpush1.msra.mxu0 0.0
  %1617 = vmatprep.subr.mxu0 0.0
  %1618 = vmatpush1.msra.mxu0 0.0
  %1619 = vmatprep.subr.mxu0 0.0
  %1620 = vmatpush1.msra.mxu0 0.0
  %1621 = vmatprep.subr.mxu0 0.0
  %1622 = vmatpush1.msra.mxu0 0.0
  %1623 = vmatprep.subr.mxu0 0.0
  %1624 = vmatpush1.msra.mxu0 0.0
  %1625 = vmatprep.subr.mxu0 0.0
  %1626 = vmatpush1.msra.mxu0 0.0
  %1627 = vmatprep.subr.mxu0 0.0
  %1628 = vmatpush1.msra.mxu0 0.0
  %1629 = vmatprep.subr.mxu0 0.0
  %1630 = vmatpush1.msra.mxu0 0.0
  %1631 = vmatprep.subr.mxu0 0.0
  %1632 = vmatpush1.msra.mxu0 0.0
  %1633 = vmatprep.subr.mxu0 0.0
  %1634 = vmatpush1.msra.mxu0 0.0
  %1635 = vmatprep.subr.mxu0 0.0
  %1636 = vmatpush1.msra.mxu0 0.0
  %1637 = vmatprep.subr.mxu0 0.0
  %1638 = vmatpush1.msra.mxu0 0.0
  %1639 = vmatprep.subr.mxu0 0.0
  %1640 = vmatpush1.msra.mxu0 0.0
  %1641 = vmatprep.subr.mxu0 0.0
  %1642 = vmatpush1.msra.mxu0 0.0
  %1643 = vmatprep.subr.mxu0 0.0
  %1644 = vmatpush1.msra.mxu0 0.0
  %1645 = vmatprep.subr.mxu0 0.0
  %1646 = vmatpush1.msra.mxu0 0.0
  %1647 = vmatprep.subr.mxu0 0.0
  %1648 = vmatpush1.msra.mxu0 0.0
  %1649 = vmatprep.subr.mxu0 0.0
  %1650 = vmatpush1.msra.mxu0 0.0
  %1651 = vmatprep.subr.mxu0 0.0
  %1652 = vmatpush1.msra.mxu0 0.0
  %1653 = vmatprep.subr.mxu0 0.0
  %1654 = vmatpush1.msra.mxu0 0.0
  %1655 = vmatprep.subr.mxu0 0.0
  %1656 = vmatpush1.msra.mxu0 0.0
  %1657 = vmatprep.subr.mxu0 0.0
  %1658 = vmatpush1.msra.mxu0 0.0
  %1659 = vmatprep.subr.mxu0 0.0
  %1660 = vmatpush1.msra.mxu0 0.0
  %1661 = vmatprep.subr.mxu0 0.0
  %1662 = vmatpush1.msra.mxu0 0.0
  %1663 = vmatprep.mubr.f32.mxu0 0.0
  %1664 = vmatmul.mubr.f32.gmra.mrb[0].mxu0 %v1597
  %v1665 = vpop.f32.mrb[0].mxu0
  %v1666 = vadd.f32 %v340, %v1665
  %v1667 = vpop.f32.mrb[0].mxu0
  %1668 = vdwg.mxu0
  %v1669 = vxor.u32 %v1666, 2147483648
  %v1670 = vmul.f32 %v1669, 1.442695
  %v1671 = vpow.pop %v1670
  %v1672 = vadd.f32 %v1671, 1.0
  %v1673 = vrcp.pop %v1672
  %v1674 = vmul.f32 1.0, %v1673
  %1676 = vrot.lane.b32.xlu0 %v1666, 32
  %v1677 = vpop.permute.xlu0 %1676
  %v1679 = vmul.f32 %v1674, %v1677
  %1681 = vrot.lane.b32.xlu0 %v1679, 64
  %v1682 = vpop.permute.xlu0 %1681
  %v1684 = vadd.f32 %v1666, %v1682
  %v1685 = vtanh.pop %v1684
  %v1686 = vsub.f32 1.0, %v1674
  %1688 = vrot.lane.b32.xlu0 %v1685, 96
  %v1689 = vpop.permute.xlu0 %1688
  %v1691 = vmul.f32 %v1686, %v1689
  %v1692 = vmul.f32 %v1674, %v1484
  %v1693 = vadd.f32 %v1691, %v1692
  %1695 = vrot.lane.b32.xlu0 %v1693, 96
  %v1696 = vpop.permute.xlu0 %1695
  %s1698 = scalar_lea.vmem [#allocation5], 48
  %1699 = vst.msk [vmem:[%s1698] sm:$0xff] %vm224, %v1696
  %s1700 = scalar_lea.vmem [#allocation4], 56
  %v1701 = vld [vmem:[%s1700] sm:$0xff]
  %v1702 = vsel %vm224, %v1593, 0
  %1704 = vmatprep.subr.mxu0 0.0
  %1705 = vmatpush1.msra.mxu0 %v201
  %1706 = vmatprep.subr.mxu0 0.0
  %1707 = vmatpush1.msra.mxu0 %v202
  %1708 = vmatprep.subr.mxu0 0.0
  %1709 = vmatpush1.msra.mxu0 %v203
  %1710 = vmatprep.subr.mxu0 0.0
  %1711 = vmatpush1.msra.mxu0 %v204
  %1712 = vmatprep.subr.mxu0 0.0
  %1713 = vmatpush1.msra.mxu0 0.0
  %1714 = vmatprep.subr.mxu0 0.0
  %1715 = vmatpush1.msra.mxu0 0.0
  %1716 = vmatprep.subr.mxu0 0.0
  %1717 = vmatpush1.msra.mxu0 0.0
  %1718 = vmatprep.subr.mxu0 0.0
  %1719 = vmatpush1.msra.mxu0 0.0
  %1720 = vmatprep.subr.mxu0 0.0
  %1721 = vmatpush1.msra.mxu0 0.0
  %1722 = vmatprep.subr.mxu0 0.0
  %1723 = vmatpush1.msra.mxu0 0.0
  %1724 = vmatprep.subr.mxu0 0.0
  %1725 = vmatpush1.msra.mxu0 0.0
  %1726 = vmatprep.subr.mxu0 0.0
  %1727 = vmatpush1.msra.mxu0 0.0
  %1728 = vmatprep.subr.mxu0 0.0
  %1729 = vmatpush1.msra.mxu0 0.0
  %1730 = vmatprep.subr.mxu0 0.0
  %1731 = vmatpush1.msra.mxu0 0.0
  %1732 = vmatprep.subr.mxu0 0.0
  %1733 = vmatpush1.msra.mxu0 0.0
  %1734 = vmatprep.subr.mxu0 0.0
  %1735 = vmatpush1.msra.mxu0 0.0
  %1736 = vmatprep.subr.mxu0 0.0
  %1737 = vmatpush1.msra.mxu0 0.0
  %1738 = vmatprep.subr.mxu0 0.0
  %1739 = vmatpush1.msra.mxu0 0.0
  %1740 = vmatprep.subr.mxu0 0.0
  %1741 = vmatpush1.msra.mxu0 0.0
  %1742 = vmatprep.subr.mxu0 0.0
  %1743 = vmatpush1.msra.mxu0 0.0
  %1744 = vmatprep.subr.mxu0 0.0
  %1745 = vmatpush1.msra.mxu0 0.0
  %1746 = vmatprep.subr.mxu0 0.0
  %1747 = vmatpush1.msra.mxu0 0.0
  %1748 = vmatprep.subr.mxu0 0.0
  %1749 = vmatpush1.msra.mxu0 0.0
  %1750 = vmatprep.subr.mxu0 0.0
  %1751 = vmatpush1.msra.mxu0 0.0
  %1752 = vmatprep.subr.mxu0 0.0
  %1753 = vmatpush1.msra.mxu0 0.0
  %1754 = vmatprep.subr.mxu0 0.0
  %1755 = vmatpush1.msra.mxu0 0.0
  %1756 = vmatprep.subr.mxu0 0.0
  %1757 = vmatpush1.msra.mxu0 0.0
  %1758 = vmatprep.subr.mxu0 0.0
  %1759 = vmatpush1.msra.mxu0 0.0
  %1760 = vmatprep.subr.mxu0 0.0
  %1761 = vmatpush1.msra.mxu0 0.0
  %1762 = vmatprep.subr.mxu0 0.0
  %1763 = vmatpush1.msra.mxu0 0.0
  %1764 = vmatprep.subr.mxu0 0.0
  %1765 = vmatpush1.msra.mxu0 0.0
  %1766 = vmatprep.subr.mxu0 0.0
  %1767 = vmatpush1.msra.mxu0 0.0
  %1768 = vmatprep.mubr.f32.mxu0 0.0
  %1769 = vmatmul.mubr.f32.gmra.mrb[0].mxu0 %v1702
  %v1770 = vpop.f32.mrb[0].mxu0
  %v1771 = vadd.f32 %v222, %v1770
  %v1772 = vpop.f32.mrb[0].mxu0
  %1773 = vdwg.mxu0
  %v1774 = vadd.f32 %v1701, %v1771
  %v1775 = vxor.u32 %v1774, 2147483648
  %v1776 = vmul.f32 %v1775, 1.442695
  %v1777 = vpow.pop %v1776
  %v1778 = vadd.f32 %v1777, 1.0
  %v1779 = vrcp.pop %v1778
  %v1780 = vmul.f32 1.0, %v1779
  %1782 = vrot.lane.b32.xlu0 %v1771, 64
  %v1783 = vpop.permute.xlu0 %1782
  %v1785 = vmul.f32 %v1780, %v1783
  %1787 = vrot.lane.b32.xlu0 %v1785, 64
  %v1788 = vpop.permute.xlu0 %1787
  %v1790 = vadd.f32 %v1701, %v1788
  %v1791 = vtanh.pop %v1790
  %v1792 = vsub.f32 1.0, %v1780
  %1794 = vrot.lane.b32.xlu0 %v1791, 96
  %v1795 = vpop.permute.xlu0 %1794
  %v1797 = vmul.f32 %v1792, %v1795
  %v1798 = vmul.f32 %v1780, %v1590
  %v1799 = vadd.f32 %v1797, %v1798
  %1801 = vrot.lane.b32.xlu0 %v1799, 96
  %v1802 = vpop.permute.xlu0 %1801
  %v1804 = vsel %vm224, %v1802, %v1693
  %v1806 = vsel %vm342, %v1804, 0
  %1808 = vmatprep.subr.mxu0 0.0
  %1809 = vmatpush1.msra.mxu0 %v206
  %1810 = vmatprep.subr.mxu0 0.0
  %1811 = vmatpush1.msra.mxu0 %v207
  %1812 = vmatprep.subr.mxu0 0.0
  %1813 = vmatpush1.msra.mxu0 %v208
  %1814 = vmatprep.subr.mxu0 0.0
  %1815 = vmatpush1.msra.mxu0 %v209
  %1816 = vmatprep.subr.mxu0 0.0
  %1817 = vmatpush1.msra.mxu0 %v210
  %1818 = vmatprep.subr.mxu0 0.0
  %1819 = vmatpush1.msra.mxu0 %v211
  %1820 = vmatprep.subr.mxu0 0.0
  %1821 = vmatpush1.msra.mxu0 %v212
  %1822 = vmatprep.subr.mxu0 0.0
  %1823 = vmatpush1.msra.mxu0 %v213
  %1824 = vmatprep.subr.mxu0 0.0
  %1825 = vmatpush1.msra.mxu0 0.0
  %1826 = vmatprep.subr.mxu0 0.0
  %1827 = vmatpush1.msra.mxu0 0.0
  %1828 = vmatprep.subr.mxu0 0.0
  %1829 = vmatpush1.msra.mxu0 0.0
  %1830 = vmatprep.subr.mxu0 0.0
  %1831 = vmatpush1.msra.mxu0 0.0
  %1832 = vmatprep.subr.mxu0 0.0
  %1833 = vmatpush1.msra.mxu0 0.0
  %1834 = vmatprep.subr.mxu0 0.0
  %1835 = vmatpush1.msra.mxu0 0.0
  %1836 = vmatprep.subr.mxu0 0.0
  %1837 = vmatpush1.msra.mxu0 0.0
  %1838 = vmatprep.subr.mxu0 0.0
  %1839 = vmatpush1.msra.mxu0 0.0
  %1840 = vmatprep.subr.mxu0 0.0
  %1841 = vmatpush1.msra.mxu0 0.0
  %1842 = vmatprep.subr.mxu0 0.0
  %1843 = vmatpush1.msra.mxu0 0.0
  %1844 = vmatprep.subr.mxu0 0.0
  %1845 = vmatpush1.msra.mxu0 0.0
  %1846 = vmatprep.subr.mxu0 0.0
  %1847 = vmatpush1.msra.mxu0 0.0
  %1848 = vmatprep.subr.mxu0 0.0
  %1849 = vmatpush1.msra.mxu0 0.0
  %1850 = vmatprep.subr.mxu0 0.0
  %1851 = vmatpush1.msra.mxu0 0.0
  %1852 = vmatprep.subr.mxu0 0.0
  %1853 = vmatpush1.msra.mxu0 0.0
  %1854 = vmatprep.subr.mxu0 0.0
  %1855 = vmatpush1.msra.mxu0 0.0
  %1856 = vmatprep.subr.mxu0 0.0
  %1857 = vmatpush1.msra.mxu0 0.0
  %1858 = vmatprep.subr.mxu0 0.0
  %1859 = vmatpush1.msra.mxu0 0.0
  %1860 = vmatprep.subr.mxu0 0.0
  %1861 = vmatpush1.msra.mxu0 0.0
  %1862 = vmatprep.subr.mxu0 0.0
  %1863 = vmatpush1.msra.mxu0 0.0
  %1864 = vmatprep.subr.mxu0 0.0
  %1865 = vmatpush1.msra.mxu0 0.0
  %1866 = vmatprep.subr.mxu0 0.0
  %1867 = vmatpush1.msra.mxu0 0.0
  %1868 = vmatprep.subr.mxu0 0.0
  %1869 = vmatpush1.msra.mxu0 0.0
  %1870 = vmatprep.subr.mxu0 0.0
  %1871 = vmatpush1.msra.mxu0 0.0
  %1872 = vmatprep.mubr.f32.mxu0 0.0
  %1873 = vmatmul.mubr.f32.gmra.mrb[0].mxu0 %v1806
  %v1874 = vpop.f32.mrb[0].mxu0
  %v1875 = vadd.f32 %v340, %v1874
  %v1876 = vpop.f32.mrb[0].mxu0
  %1877 = vdwg.mxu0
  %v1878 = vxor.u32 %v1875, 2147483648
  %v1879 = vmul.f32 %v1878, 1.442695
  %v1880 = vpow.pop %v1879
  %v1881 = vadd.f32 %v1880, 1.0
  %v1882 = vrcp.pop %v1881
  %v1883 = vmul.f32 1.0, %v1882
  %1885 = vrot.lane.b32.xlu0 %v1875, 32
  %v1886 = vpop.permute.xlu0 %1885
  %v1888 = vmul.f32 %v1883, %v1886
  %1890 = vrot.lane.b32.xlu0 %v1888, 64
  %v1891 = vpop.permute.xlu0 %1890
  %v1893 = vadd.f32 %v1875, %v1891
  %v1894 = vtanh.pop %v1893
  %v1895 = vsub.f32 1.0, %v1883
  %1897 = vrot.lane.b32.xlu0 %v1894, 96
  %v1898 = vpop.permute.xlu0 %1897
  %v1900 = vmul.f32 %v1895, %v1898
  %v1901 = vmul.f32 %v1883, %v1693
  %v1902 = vadd.f32 %v1900, %v1901
  %1904 = vrot.lane.b32.xlu0 %v1902, 96
  %v1905 = vpop.permute.xlu0 %1904
  %s1907 = scalar_lea.vmem [#allocation5], 56
  %1908 = vst.msk [vmem:[%s1907] sm:$0xff] %vm224, %v1905
  %1909 = vst.msk [vmem:[#allocation2] sm:$0xff] %vm224, %v1802
  %1910 = vst.msk [vmem:[#allocation3] sm:$0xff] %vm224, %v1905
  %v1911 = vld [vmem:[#allocation5] sm:$0xff]
  %v1912 = vld [vmem:[#allocation5 + $0x8] sm:$0xff]
  %v1913 = vld [vmem:[#allocation5 + $0x10] sm:$0xff]
  %v1914 = vld [vmem:[#allocation5 + $0x18] sm:$0xff]
  %v1915 = vld [vmem:[#allocation5 + $0x20] sm:$0xff]
  %v1916 = vld [vmem:[#allocation5 + $0x28] sm:$0xff]
  %v1917 = vld [vmem:[#allocation5 + $0x30] sm:$0xff]
  %v1918 = vld [vmem:[#allocation5 + $0x38] sm:$0xff]
  %v1919 = vld [vmem:[%s1] sm:$0xff]
  %v1920 = vld [vmem:[%s1 + $0x8] sm:$0xff]
  %v1921 = vld [vmem:[%s1 + $0x10] sm:$0xff]
  %v1922 = vld [vmem:[%s1 + $0x18] sm:$0xff]
  %v1923 = vld [vmem:[%s1 + $0x20] sm:$0xff]
  %v1924 = vld [vmem:[%s1 + $0x28] sm:$0xff]
  %v1925 = vld [vmem:[%s1 + $0x30] sm:$0xff]
  %v1926 = vld [vmem:[%s1 + $0x38] sm:$0xff]
  %1928 = vset.pattern.permute.xlu0 0
  %1929 = vperm.xlu0 %1928, %v1919
  %v1930 = vpop.permute.xlu0 %1929
  %1933 = vset.pattern.permute.xlu0 0
  %1934 = vperm.xlu0 %1933, %v1920
  %v1935 = vpop.permute.xlu0 %1934
  %1938 = vset.pattern.permute.xlu0 0
  %1939 = vperm.xlu0 %1938, %v1921
  %v1940 = vpop.permute.xlu0 %1939
  %1943 = vset.pattern.permute.xlu0 0
  %1944 = vperm.xlu0 %1943, %v1922
  %v1945 = vpop.permute.xlu0 %1944
  %1948 = vset.pattern.permute.xlu0 0
  %1949 = vperm.xlu0 %1948, %v1923
  %v1950 = vpop.permute.xlu0 %1949
  %1953 = vset.pattern.permute.xlu0 0
  %1954 = vperm.xlu0 %1953, %v1924
  %v1955 = vpop.permute.xlu0 %1954
  %1958 = vset.pattern.permute.xlu0 0
  %1959 = vperm.xlu0 %1958, %v1925
  %v1960 = vpop.permute.xlu0 %1959
  %1963 = vset.pattern.permute.xlu0 0
  %1964 = vperm.xlu0 %1963, %v1926
  %v1965 = vpop.permute.xlu0 %1964
  %v1967 = vmul.f32 %v1911, %v1930
  %v1968 = vmul.f32 %v1912, %v1935
  %v1969 = vmul.f32 %v1913, %v1940
  %v1970 = vmul.f32 %v1914, %v1945
  %v1971 = vmul.f32 %v1915, %v1950
  %v1972 = vmul.f32 %v1916, %v1955
  %v1973 = vmul.f32 %v1917, %v1960
  %v1974 = vmul.f32 %v1918, %v1965
  %v1975 = vld [vmem:[%s8] sm:$0xff]
  %v1976 = vld [vmem:[%s8 + $0x8] sm:$0xff]
  %v1977 = vld [vmem:[%s8 + $0x10] sm:$0xff]
  %v1978 = vld [vmem:[%s8 + $0x18] sm:$0xff]
  %v1979 = vld [vmem:[%s9] sm:$0x1]
  %v1981 = vlaneseq
  %v1982 = vshrl.u32 %v1981, 7
  %v1983 = vsub.s32 0, %v1982
  %v1984 = vrot.slane %v1979, %v1983
  %v1987 = vsel %vm224, %v1967, 0
  %v1990 = vsel %vm224, %v1968, 0
  %v1993 = vsel %vm224, %v1969, 0
  %v1996 = vsel %vm224, %v1970, 0
  %v1999 = vsel %vm224, %v1971, 0
  %v2002 = vsel %vm224, %v1972, 0
  %v2005 = vsel %vm224, %v1973, 0
  %v2008 = vsel %vm224, %v1974, 0
  %2010 = vmatprep.subr.mxu0 0.0
  %2011 = vmatpush1.msra.mxu0 %v1975
  %2012 = vmatprep.subr.mxu0 0.0
  %2013 = vmatpush1.msra.mxu0 %v1976
  %2014 = vmatprep.subr.mxu0 0.0
  %2015 = vmatpush1.msra.mxu0 %v1977
  %2016 = vmatprep.subr.mxu0 0.0
  %2017 = vmatpush1.msra.mxu0 %v1978
  %2018 = vmatprep.subr.mxu0 0.0
  %2019 = vmatpush1.msra.mxu0 0.0
  %2020 = vmatprep.subr.mxu0 0.0
  %2021 = vmatpush1.msra.mxu0 0.0
  %2022 = vmatprep.subr.mxu0 0.0
  %2023 = vmatpush1.msra.mxu0 0.0
  %2024 = vmatprep.subr.mxu0 0.0
  %2025 = vmatpush1.msra.mxu0 0.0
  %2026 = vmatprep.subr.mxu0 0.0
  %2027 = vmatpush1.msra.mxu0 0.0
  %2028 = vmatprep.subr.mxu0 0.0
  %2029 = vmatpush1.msra.mxu0 0.0
  %2030 = vmatprep.subr.mxu0 0.0
  %2031 = vmatpush1.msra.mxu0 0.0
  %2032 = vmatprep.subr.mxu0 0.0
  %2033 = vmatpush1.msra.mxu0 0.0
  %2034 = vmatprep.subr.mxu0 0.0
  %2035 = vmatpush1.msra.mxu0 0.0
  %2036 = vmatprep.subr.mxu0 0.0
  %2037 = vmatpush1.msra.mxu0 0.0
  %2038 = vmatprep.subr.mxu0 0.0
  %2039 = vmatpush1.msra.mxu0 0.0
  %2040 = vmatprep.subr.mxu0 0.0
  %2041 = vmatpush1.msra.mxu0 0.0
  %2042 = vmatprep.subr.mxu0 0.0
  %2043 = vmatpush1.msra.mxu0 0.0
  %2044 = vmatprep.subr.mxu0 0.0
  %2045 = vmatpush1.msra.mxu0 0.0
  %2046 = vmatprep.subr.mxu0 0.0
  %2047 = vmatpush1.msra.mxu0 0.0
  %2048 = vmatprep.subr.mxu0 0.0
  %2049 = vmatpush1.msra.mxu0 0.0
  %2050 = vmatprep.subr.mxu0 0.0
  %2051 = vmatpush1.msra.mxu0 0.0
  %2052 = vmatprep.subr.mxu0 0.0
  %2053 = vmatpush1.msra.mxu0 0.0
  %2054 = vmatprep.subr.mxu0 0.0
  %2055 = vmatpush1.msra.mxu0 0.0
  %2056 = vmatprep.subr.mxu0 0.0
  %2057 = vmatpush1.msra.mxu0 0.0
  %2058 = vmatprep.subr.mxu0 0.0
  %2059 = vmatpush1.msra.mxu0 0.0
  %2060 = vmatprep.subr.mxu0 0.0
  %2061 = vmatpush1.msra.mxu0 0.0
  %2062 = vmatprep.subr.mxu0 0.0
  %2063 = vmatpush1.msra.mxu0 0.0
  %2064 = vmatprep.subr.mxu0 0.0
  %2065 = vmatpush1.msra.mxu0 0.0
  %2066 = vmatprep.subr.mxu0 0.0
  %2067 = vmatpush1.msra.mxu0 0.0
  %2068 = vmatprep.subr.mxu0 0.0
  %2069 = vmatpush1.msra.mxu0 0.0
  %2070 = vmatprep.subr.mxu0 0.0
  %2071 = vmatpush1.msra.mxu0 0.0
  %2072 = vmatprep.subr.mxu0 0.0
  %2073 = vmatpush1.msra.mxu0 0.0
  %2074 = vmatprep.mubr.f32.mxu0 0.0
  %2075 = vmatmul.mubr.f32.gmra.mrb[0].mxu0 %v1987
  %v2076 = vpop.f32.mrb[0].mxu0
  %v2077 = vadd.f32 %v1984, %v2076
  %v2078 = vpop.f32.mrb[0].mxu0
  %2079 = vmatprep.mubr.f32.mxu0 0.0
  %2080 = vmatmul.mubr.f32.gmra.mrb[0].mxu0 %v1990
  %v2081 = vpop.f32.mrb[0].mxu0
  %v2082 = vadd.f32 %v1984, %v2081
  %v2083 = vpop.f32.mrb[0].mxu0
  %2084 = vmatprep.mubr.f32.mxu0 0.0
  %2085 = vmatmul.mubr.f32.gmra.mrb[0].mxu0 %v1993
  %v2086 = vpop.f32.mrb[0].mxu0
  %v2087 = vadd.f32 %v1984, %v2086
  %v2088 = vpop.f32.mrb[0].mxu0
  %2089 = vmatprep.mubr.f32.mxu0 0.0
  %2090 = vmatmul.mubr.f32.gmra.mrb[0].mxu0 %v1996
  %v2091 = vpop.f32.mrb[0].mxu0
  %v2092 = vadd.f32 %v1984, %v2091
  %v2093 = vpop.f32.mrb[0].mxu0
  %2094 = vmatprep.mubr.f32.mxu0 0.0
  %2095 = vmatmul.mubr.f32.gmra.mrb[0].mxu0 %v1999
  %v2096 = vpop.f32.mrb[0].mxu0
  %v2097 = vadd.f32 %v1984, %v2096
  %v2098 = vpop.f32.mrb[0].mxu0
  %2099 = vmatprep.mubr.f32.mxu0 0.0
  %2100 = vmatmul.mubr.f32.gmra.mrb[0].mxu0 %v2002
  %v2101 = vpop.f32.mrb[0].mxu0
  %v2102 = vadd.f32 %v1984, %v2101
  %v2103 = vpop.f32.mrb[0].mxu0
  %2104 = vmatprep.mubr.f32.mxu0 0.0
  %2105 = vmatmul.mubr.f32.gmra.mrb[0].mxu0 %v2005
  %v2106 = vpop.f32.mrb[0].mxu0
  %v2107 = vadd.f32 %v1984, %v2106
  %v2108 = vpop.f32.mrb[0].mxu0
  %2109 = vmatprep.mubr.f32.mxu0 0.0
  %2110 = vmatmul.mubr.f32.gmra.mrb[0].mxu0 %v2008
  %v2111 = vpop.f32.mrb[0].mxu0
  %v2112 = vadd.f32 %v1984, %v2111
  %v2113 = vpop.f32.mrb[0].mxu0
  %2114 = vdwg.mxu0
  %vm2115 = vcmp.gt.f32.partialorder %v2077, 20.0
  %vm2116 = vcmp.gt.f32.partialorder %v2082, 20.0
  %vm2117 = vcmp.gt.f32.partialorder %v2087, 20.0
  %vm2118 = vcmp.gt.f32.partialorder %v2092, 20.0
  %vm2119 = vcmp.gt.f32.partialorder %v2097, 20.0
  %vm2120 = vcmp.gt.f32.partialorder %v2102, 20.0
  %vm2121 = vcmp.gt.f32.partialorder %v2107, 20.0
  %vm2122 = vcmp.gt.f32.partialorder %v2112, 20.0
  %v2123 = vmin.f32 %v2077, 20.0
  %v2124 = vmin.f32 %v2082, 20.0
  %v2125 = vmin.f32 %v2087, 20.0
  %v2126 = vmin.f32 %v2092, 20.0
  %v2127 = vmin.f32 %v2097, 20.0
  %v2128 = vmin.f32 %v2102, 20.0
  %v2129 = vmin.f32 %v2107, 20.0
  %v2130 = vmin.f32 %v2112, 20.0
  %v2131 = vmul.f32 %v2123, 1.442695
  %v2132 = vpow.pop %v2131
  %v2133 = vmul.f32 %v2124, 1.442695
  %v2134 = vpow.pop %v2133
  %v2135 = vmul.f32 %v2125, 1.442695
  %v2136 = vpow.pop %v2135
  %v2137 = vmul.f32 %v2126, 1.442695
  %v2138 = vpow.pop %v2137
  %v2139 = vmul.f32 %v2127, 1.442695
  %v2140 = vpow.pop %v2139
  %v2141 = vmul.f32 %v2128, 1.442695
  %v2142 = vpow.pop %v2141
  %v2143 = vmul.f32 %v2129, 1.442695
  %v2144 = vpow.pop %v2143
  %v2145 = vmul.f32 %v2130, 1.442695
  %v2146 = vpow.pop %v2145
  %v2147 = vadd.f32 %v2132, 1.0
  %v2148 = vlog2.pop %v2147
  %v2149 = vmul.f32 %v2148, 0.6931472
  %v2150 = vmul.f32 -0.5, %v2132
  %v2151 = vadd.f32 %v2150, 1.0
  %v2152 = vmul.f32 %v2151, %v2132
  %v2153 = vand.u32 2147483647, %v2132
  %vm2154 = vcmp.lt.f32.partialorder %v2153, 0.0004427343
  %v2155 = vsel %vm2154, %v2152, %v2149
  %v2156 = vadd.f32 %v2134, 1.0
  %v2157 = vlog2.pop %v2156
  %v2158 = vmul.f32 %v2157, 0.6931472
  %v2159 = vmul.f32 -0.5, %v2134
  %v2160 = vadd.f32 %v2159, 1.0
  %v2161 = vmul.f32 %v2160, %v2134
  %v2162 = vand.u32 2147483647, %v2134
  %vm2163 = vcmp.lt.f32.partialorder %v2162, 0.0004427343
  %v2164 = vsel %vm2163, %v2161, %v2158
  %v2165 = vadd.f32 %v2136, 1.0
  %v2166 = vlog2.pop %v2165
  %v2167 = vmul.f32 %v2166, 0.6931472
  %v2168 = vmul.f32 -0.5, %v2136
  %v2169 = vadd.f32 %v2168, 1.0
  %v2170 = vmul.f32 %v2169, %v2136
  %v2171 = vand.u32 2147483647, %v2136
  %vm2172 = vcmp.lt.f32.partialorder %v2171, 0.0004427343
  %v2173 = vsel %vm2172, %v2170, %v2167
  %v2174 = vadd.f32 %v2138, 1.0
  %v2175 = vlog2.pop %v2174
  %v2176 = vmul.f32 %v2175, 0.6931472
  %v2177 = vmul.f32 -0.5, %v2138
  %v2178 = vadd.f32 %v2177, 1.0
  %v2179 = vmul.f32 %v2178, %v2138
  %v2180 = vand.u32 2147483647, %v2138
  %vm2181 = vcmp.lt.f32.partialorder %v2180, 0.0004427343
  %v2182 = vsel %vm2181, %v2179, %v2176
  %v2183 = vadd.f32 %v2140, 1.0
  %v2184 = vlog2.pop %v2183
  %v2185 = vmul.f32 %v2184, 0.6931472
  %v2186 = vmul.f32 -0.5, %v2140
  %v2187 = vadd.f32 %v2186, 1.0
  %v2188 = vmul.f32 %v2187, %v2140
  %v2189 = vand.u32 2147483647, %v2140
  %vm2190 = vcmp.lt.f32.partialorder %v2189, 0.0004427343
  %v2191 = vsel %vm2190, %v2188, %v2185
  %v2192 = vadd.f32 %v2142, 1.0
  %v2193 = vlog2.pop %v2192
  %v2194 = vmul.f32 %v2193, 0.6931472
  %v2195 = vmul.f32 -0.5, %v2142
  %v2196 = vadd.f32 %v2195, 1.0
  %v2197 = vmul.f32 %v2196, %v2142
  %v2198 = vand.u32 2147483647, %v2142
  %vm2199 = vcmp.lt.f32.partialorder %v2198, 0.0004427343
  %v2200 = vsel %vm2199, %v2197, %v2194
  %v2201 = vadd.f32 %v2144, 1.0
  %v2202 = vlog2.pop %v2201
  %v2203 = vmul.f32 %v2202, 0.6931472
  %v2204 = vmul.f32 -0.5, %v2144
  %v2205 = vadd.f32 %v2204, 1.0
  %v2206 = vmul.f32 %v2205, %v2144
  %v2207 = vand.u32 2147483647, %v2144
  %vm2208 = vcmp.lt.f32.partialorder %v2207, 0.0004427343
  %v2209 = vsel %vm2208, %v2206, %v2203
  %v2210 = vadd.f32 %v2146, 1.0
  %v2211 = vlog2.pop %v2210
  %v2212 = vmul.f32 %v2211, 0.6931472
  %v2213 = vmul.f32 -0.5, %v2146
  %v2214 = vadd.f32 %v2213, 1.0
  %v2215 = vmul.f32 %v2214, %v2146
  %v2216 = vand.u32 2147483647, %v2146
  %vm2217 = vcmp.lt.f32.partialorder %v2216, 0.0004427343
  %v2218 = vsel %vm2217, %v2215, %v2212
  %v2219 = vsel %vm2115, %v2077, %v2155
  %v2220 = vsel %vm2116, %v2082, %v2164
  %v2221 = vsel %vm2117, %v2087, %v2173
  %v2222 = vsel %vm2118, %v2092, %v2182
  %v2223 = vsel %vm2119, %v2097, %v2191
  %v2224 = vsel %vm2120, %v2102, %v2200
  %v2225 = vsel %vm2121, %v2107, %v2209
  %v2226 = vsel %vm2122, %v2112, %v2218
  %v2227 = vlaneseq
  %v2228 = vand.u32 %v2227, 127
  %vm2229 = vcmp.lt.s32.totalorder %v2228, 2
  %v2230 = vsel %vm2229, %v2077, %v2219
  %v2231 = vsel %vm2229, %v2082, %v2220
  %v2232 = vsel %vm2229, %v2087, %v2221
  %v2233 = vsel %vm2229, %v2092, %v2222
  %v2234 = vsel %vm2229, %v2097, %v2223
  %v2235 = vsel %vm2229, %v2102, %v2224
  %v2236 = vsel %vm2229, %v2107, %v2225
  %v2237 = vsel %vm2229, %v2112, %v2226
  %2238 = vst.msk [vmem:[%s10] sm:$0xff] %vm58, %v2230
  %2239 = vst.msk [vmem:[%s10 + $0x8] sm:$0xff] %vm58, %v2231
  %2240 = vst.msk [vmem:[%s10 + $0x10] sm:$0xff] %vm58, %v2232
  %2241 = vst.msk [vmem:[%s10 + $0x18] sm:$0xff] %vm58, %v2233
  %2242 = vst.msk [vmem:[%s10 + $0x20] sm:$0xff] %vm58, %v2234
  %2243 = vst.msk [vmem:[%s10 + $0x28] sm:$0xff] %vm58, %v2235
  %2244 = vst.msk [vmem:[%s10 + $0x30] sm:$0xff] %vm58, %v2236
  %2245 = vst.msk [vmem:[%s10 + $0x38] sm:$0xff] %vm58, %v2237
  // Predicated region
  $region46: #{tracknet_v2_rnn_forward.1} parent=0 // pred_check
    _
  $region47: #{tracknet_v2_rnn_forward.1} parent=0 // pred_check_branch
    %2247 = sbr.rel (0) target = $region49
  $region48: #{tracknet_v2_rnn_forward.1} parent=0 // pred_region
    _
  $region49: #{tracknet_v2_rnn_forward.1} parent=0 // pred_fallthru
    _
  // Predicated region
  $region50: #{tracknet_v2_rnn_forward.1} parent=0 // pred_check
    _
  $region51: #{tracknet_v2_rnn_forward.1} parent=0 // pred_check_branch
    %2249 = sbr.rel (0) target = $region53
  $region52: #{tracknet_v2_rnn_forward.1} parent=0 // pred_region
    _
  $region53: #{tracknet_v2_rnn_forward.1} parent=0 // pred_fallthru
    _

</llo_original>
